<compile_context>
chip_gen: v7x
topology: tpu7x:2x2x1
jax: 0.10.0
libtpu: 0.0.40
codegen_flags: <defaults>
</compile_context>

<pallas_src>
import functools

import jax
import jax.numpy as jnp
from jax import lax
from jax.experimental import pallas as pl
from jax.experimental.pallas import tpu as pltpu

KW = 4                      # kernel_size
PAD = 2                     # int(ceil((4 - 1) / 2))
SLOPE = 0.2                 # LeakyReLU negative slope
EPS = 1e-5                  # BatchNorm2d eps


def _round_up(x, d):
    return (x + d - 1) // d * d


@functools.lru_cache(maxsize=None)
def _vmem_limit_bytes():
    """Generation-aware scoped-VMEM limit; safe fallback when unqueryable."""
    default = 40 * 1024 * 1024
    try:
        info_fn = getattr(pltpu, "get_tpu_info", None)
        if info_fn is None:
            return default
        cap = int(info_fn().vmem_capacity_bytes)
        # Half of physical VMEM, clamped: v5e/v6e (128 MiB) -> 64 MiB, v7x (64 MiB) -> 32 MiB.
        return int(min(max(cap // 2, 32 * 1024 * 1024), 64 * 1024 * 1024))
    except Exception:
        return default


# ----------------------------------------------------------------------------
# Tiling selection
# ----------------------------------------------------------------------------
def _choose_tm(m, max_rows):
    cap = min(max_rows, 8192)
    if cap >= m:
        if m >= 2048:
            # Keep at least 2 M tiles so the "parallel" axis can shard across
            # v7x's two TensorCores.
            return _round_up((m + 1) // 2, 256)
        return _round_up(m, 8)
    return max(256, cap // 256 * 256)


def _choose_conv_tiling(m, k, cout_p, vmem_limit):
    """Pick (tm, tk).  Prefer full-K resident weights (single K grid step)."""
    budget = vmem_limit - 4 * 1024 * 1024          # pipeline / semaphore headroom
    out_b = 2                                      # bf16 activations
    # Resident weights: weight block fetched once (constant index_map).
    w_buf = 2 * k * cout_p * 2                     # double-buffered bf16 weights
    row_b = 2 * k * 2 + 2 * cout_p * out_b         # patches + output, double-buffered
    if w_buf <= budget // 2:
        rows = (budget - w_buf) // row_b
        if rows >= min(m, 256):
            return _choose_tm(m, rows), k
    # Fallback: K-tiled reduction with a persistent f32 accumulator.
    tk = min(k, 2048)
    while k % tk:
        tk -= 128
    w_buf = 2 * tk * cout_p * 2
    row_b = 2 * tk * 2 + 2 * cout_p * out_b + cout_p * 4   # + f32 accumulator
    rows = max(256, (budget - w_buf) // row_b)
    return _choose_tm(m, rows), tk


# ----------------------------------------------------------------------------
# Pallas kernels
# ----------------------------------------------------------------------------
def _make_conv_kernel(*, k_tiles, m_true, emit_stats, apply_lrelu):
    """im2col GEMM: bf16 operands, f32 accumulation, fused bias (+stats)(+LReLU)."""

    def kernel(x_ref, w_ref, b_ref, *rest):
        if emit_stats:
            y_ref, stats_ref = rest[0], rest[1]
            scratch = rest[2:]
        else:
            y_ref, stats_ref = rest[0], None
            scratch = rest[1:]
        acc_ref = scratch[0] if k_tiles > 1 else None

        # program_id bound ONLY at the top level (never inside pl.when bodies).
        mi = pl.program_id(0)

        def epilogue(acc):
            y = acc + b_ref[...]
            if emit_stats:
                rows = y.shape[0]
                row_idx = mi * rows + lax.broadcasted_iota(jnp.int32, (rows, 1), 0)
                ys = jnp.where(row_idx < m_true, y, 0.0)   # mask padded patch rows
                stats_ref[0, 0:1, :] = jnp.sum(ys, axis=0, keepdims=True)
                stats_ref[0, 1:2, :] = jnp.sum(ys * ys, axis=0, keepdims=True)
            if apply_lrelu:
                y = jnp.where(y >= 0, y, SLOPE * y)
            y_ref[...] = y.astype(y_ref.dtype)

        if k_tiles == 1:
            # Resident weights: one dot straight to the output, no scratch.
            epilogue(jnp.dot(x_ref[...], w_ref[...],
                             preferred_element_type=jnp.float32))
        else:
            kk = pl.program_id(1)

            @pl.when(kk == 0)
            def _():
                acc_ref[...] = jnp.zeros_like(acc_ref)

            acc_ref[...] += jnp.dot(x_ref[...], w_ref[...],
                                    preferred_element_type=jnp.float32)

            @pl.when(kk == k_tiles - 1)
            def _():
                epilogue(acc_ref[...])

    return kernel


def _bn_apply_kernel(y_ref, scale_ref, shift_ref, o_ref):
    """Per-channel affine (precomputed BN scale/shift) + LeakyReLU(0.2)."""
    y = y_ref[...].astype(jnp.float32) * scale_ref[...] + shift_ref[...]
    o_ref[...] = jnp.where(y >= 0, y, SLOPE * y).astype(o_ref.dtype)


# ----------------------------------------------------------------------------
# JAX glue (layout / patch extraction / per-layer wrappers)
# ----------------------------------------------------------------------------
def _extract_patches(x_nhwc, stride):
    """im2col: (N,H,W,C) -> (N*Ho*Wo, KW*KW*C), (ki, kj, c) minor ordering."""
    n, h, w, c = x_nhwc.shape
    xp = jnp.pad(x_nhwc, ((0, 0), (PAD, PAD), (PAD, PAD), (0, 0)))
    hp, wp = h + 2 * PAD, w + 2 * PAD
    ho = (hp - KW) // stride + 1
    wo = (wp - KW) // stride + 1
    cols = []
    for ki in range(KW):
        for kj in range(KW):
            cols.append(xp[:, ki:ki + stride * (ho - 1) + 1:stride,
                           kj:kj + stride * (wo - 1) + 1:stride, :])
    patches = jnp.stack(cols, axis=3)                 # (N, Ho, Wo, 16, C)
    return patches.reshape(n * ho * wo, KW * KW * c), ho, wo


def conv_layer_pallas(x_nhwc, weight, bias, stride, apply_lrelu, emit_stats):
    """Conv2d(kw=4, pad=2, stride) as a Pallas GEMM (bf16 operands, f32 acc).

    x_nhwc: bf16, channels already padded to a multiple of 8 (padding is zero).
    Returns bf16 (M_pad, Cout_p) output, BN statistics (or None), metadata.
    """
    cout, cin, _, _ = weight.shape
    n, _, _, cin_eff = x_nhwc.shape                  # cin_eff >= cin, mult of 8
    cout_p = _round_up(cout, 128)                    # lane-dense output stores

    patches, ho, wo = _extract_patches(x_nhwc, stride)   # bf16 (m, k)
    m, k = patches.shape

    # PyTorch weight (Cout, Cin, kh, kw) -> (kh, kw, Cin_eff, Cout_p) -> (K, Cout_p)
    w_t = jnp.transpose(weight, (2, 3, 1, 0))
    w_t = jnp.pad(w_t, ((0, 0), (0, 0), (0, cin_eff - cin), (0, cout_p - cout)))
    w_mat = w_t.reshape(k, cout_p).astype(jnp.bfloat16)
    b_mat = jnp.pad(bias, (0, cout_p - cout)).reshape(1, cout_p).astype(jnp.float32)

    vmem_limit = _vmem_limit_bytes()
    tm, tk = _choose_conv_tiling(m, k, cout_p, vmem_limit)
    m_pad = _round_up(m, tm)
    if m_pad != m:
        patches = jnp.pad(patches, ((0, m_pad - m), (0, 0)))
    m_tiles = m_pad // tm
    k_tiles = k // tk

    kernel = _make_conv_kernel(k_tiles=k_tiles, m_true=m,
                               emit_stats=emit_stats, apply_lrelu=apply_lrelu)

    if k_tiles == 1:
        grid = (m_tiles,)
        in_specs = [
            pl.BlockSpec((tm, k), lambda i: (i, 0)),          # patches
            pl.BlockSpec((k, cout_p), lambda i: (0, 0)),      # resident weights
            pl.BlockSpec((1, cout_p), lambda i: (0, 0)),      # bias
        ]
        y_spec = pl.BlockSpec((tm, cout_p), lambda i: (i, 0))
        stats_spec = pl.BlockSpec((1, 2, cout_p), lambda i: (i, 0, 0))
        scratch_shapes = []
        dim_sem = ("parallel",)
        w_traffic = k * cout_p * 2
    else:
        grid = (m_tiles, k_tiles)
        in_specs = [
            pl.BlockSpec((tm, tk), lambda i, kk: (i, kk)),
            pl.BlockSpec((tk, cout_p), lambda i, kk: (kk, 0)),
            pl.BlockSpec((1, cout_p), lambda i, kk: (0, 0)),
        ]
        y_spec = pl.BlockSpec((tm, cout_p), lambda i, kk: (i, 0))
        stats_spec = pl.BlockSpec((1, 2, cout_p), lambda i, kk: (i, 0, 0))
        scratch_shapes = [pltpu.VMEM((tm, cout_p), jnp.float32)]
        dim_sem = ("parallel", "arbitrary")
        w_traffic = k * cout_p * 2 * m_tiles

    if emit_stats:
        out_shape = (jax.ShapeDtypeStruct((m_pad, cout_p), jnp.bfloat16),
                     jax.ShapeDtypeStruct((m_tiles, 2, cout_p), jnp.float32))
        out_specs = (y_spec, stats_spec)
    else:
        out_shape = jax.ShapeDtypeStruct((m_pad, cout_p), jnp.bfloat16)
        out_specs = y_spec

    cost = pl.CostEstimate(
        flops=2 * m_pad * k * cout_p,
        transcendentals=0,
        bytes_accessed=m_pad * k * 2 + w_traffic + m_pad * cout_p * 2)

    result = pl.pallas_call(
        kernel,
        out_shape=out_shape,
        grid=grid,
        in_specs=in_specs,
        out_specs=out_specs,
        scratch_shapes=scratch_shapes,
        compiler_params=pltpu.CompilerParams(
            dimension_semantics=dim_sem, vmem_limit_bytes=vmem_limit),
        cost_estimate=cost,
    )(patches, w_mat, b_mat)

    if emit_stats:
        y, stats = result
    else:
        y, stats = result, None
    return y, stats, (n, ho, wo, cout, m, tm)


def bn_scale_shift(stats, m_true, gamma, beta):
    """Per-channel BN scale/shift from fused (sum, sumsq) statistics (f32)."""
    cout_p = stats.shape[-1]
    cout = gamma.shape[0]
    s = jnp.sum(stats, axis=0)                        # (2, cout_p)
    mean = s[0] / m_true
    var = jnp.maximum(s[1] / m_true - mean * mean, 0.0)     # biased variance
    gamma_p = jnp.pad(gamma, (0, cout_p - cout), constant_values=1.0)
    beta_p = jnp.pad(beta, (0, cout_p - cout))
    scale = gamma_p * lax.rsqrt(var + EPS)
    shift = beta_p - mean * scale
    return (scale.reshape(1, cout_p).astype(jnp.float32),
            shift.reshape(1, cout_p).astype(jnp.float32))


def bn_apply_pallas(y, scale, shift, tm):
    """Tiled BN-apply + LeakyReLU over the flat bf16 (M_pad, Cout_p) tensor."""
    m_pad, cout_p = y.shape
    vmem_limit = _vmem_limit_bytes()
    return pl.pallas_call(
        _bn_apply_kernel,
        out_shape=jax.ShapeDtypeStruct((m_pad, cout_p), jnp.bfloat16),
        grid=(m_pad // tm,),
        in_specs=[
            pl.BlockSpec((tm, cout_p), lambda i: (i, 0)),
            pl.BlockSpec((1, cout_p), lambda i: (0, 0)),
            pl.BlockSpec((1, cout_p), lambda i: (0, 0)),
        ],
        out_specs=pl.BlockSpec((tm, cout_p), lambda i: (i, 0)),
        compiler_params=pltpu.CompilerParams(
            dimension_semantics=("parallel",), vmem_limit_bytes=vmem_limit),
        cost_estimate=pl.CostEstimate(
            flops=3 * m_pad * cout_p, transcendentals=0,
            bytes_accessed=2 * m_pad * cout_p * 2),
    )(y, scale, shift)


# ----------------------------------------------------------------------------
# Parameter construction (deterministic, mirrors NLayerDiscriminator.__init__)
# ----------------------------------------------------------------------------
def init_params(key, input_nc, ndf=64, n_layers=3):
    cfgs = [(input_nc, ndf, 2, False, True)]          # conv + LeakyReLU
    nf = ndf
    for _ in range(1, n_layers):                      # conv + BN + LeakyReLU
        nf_prev, nf = nf, min(nf * 2, 512)
        cfgs.append((nf_prev, nf, 2, True, True))
    nf_prev, nf = nf, min(nf * 2, 512)                # conv(stride=1)+BN+LReLU
    cfgs.append((nf_prev, nf, 1, True, True))
    cfgs.append((nf, 1, 1, False, False))             # final conv (stride=1)
    # use_sigmoid=False (default) -> no sigmoid layer.

    params = []
    for (cin, cout, stride, has_bn, has_act) in cfgs:
        key, k1, k2, k3, k4 = jax.random.split(key, 5)
        p = {
            "w": 0.05 * jax.random.normal(k1, (cout, cin, KW, KW), jnp.float32),
            "b": 0.05 * jax.random.normal(k2, (cout,), jnp.float32),
            "gamma": (1.0 + 0.1 * jax.random.normal(k3, (cout,), jnp.float32))
                     if has_bn else None,
            "beta": 0.1 * jax.random.normal(k4, (cout,), jnp.float32)
                    if has_bn else None,
            "stride": stride, "has_bn": has_bn, "has_act": has_act,
        }
        params.append(p)
    return params


def nlayer_discriminator_forward(x_nchw, params):
    """getIntermFeat=False path: one sequential stream, bf16 activations."""
    x = jnp.transpose(x_nchw, (0, 2, 3, 1)).astype(jnp.bfloat16)   # NCHW -> NHWC
    c0 = x.shape[-1]
    c0_p = _round_up(c0, 8)
    if c0_p != c0:
        x = jnp.pad(x, ((0, 0), (0, 0), (0, 0), (0, c0_p - c0)))

    for p in params:
        fuse_lrelu = p["has_act"] and not p["has_bn"]
        y, stats, (n, ho, wo, cout, m, tm) = conv_layer_pallas(
            x, p["w"], p["b"], p["stride"],
            apply_lrelu=fuse_lrelu, emit_stats=p["has_bn"])
        if p["has_bn"]:
            scale, shift = bn_scale_shift(stats, m, p["gamma"], p["beta"])
            y = bn_apply_pallas(y, scale, shift, tm)
        # Carry channel padding to a multiple of 8 (padded channels stay zero),
        # slicing rows / channels only when actually needed.
        c_keep = _round_up(cout, 8)
        if y.shape[0] != m:
            y = y[:m]
        if y.shape[1] != c_keep:
            y = y[:, :c_keep]
        x = y.reshape(n, ho, wo, c_keep)

    cout_last = params[-1]["w"].shape[0]
    out = x[..., :cout_last].astype(jnp.float32)
    return jnp.transpose(out, (0, 3, 1, 2))            # NHWC -> NCHW


# ----------------------------------------------------------------------------
# Pure-JAX reference (for correctness checking only)
# ----------------------------------------------------------------------------
def reference_forward(x_nchw, params):
    x = x_nchw
    for p in params:
        y = lax.conv_general_dilated(
            x, p["w"], (p["stride"], p["stride"]),
            [(PAD, PAD), (PAD, PAD)],
            dimension_numbers=("NCHW", "OIHW", "NCHW"))
        y = y + p["b"].reshape(1, -1, 1, 1)
        if p["has_bn"]:
            mean = jnp.mean(y, axis=(0, 2, 3), keepdims=True)
            var = jnp.mean((y - mean) ** 2, axis=(0, 2, 3), keepdims=True)
            y = ((y - mean) * lax.rsqrt(var + EPS)
                 * p["gamma"].reshape(1, -1, 1, 1)
                 + p["beta"].reshape(1, -1, 1, 1))
        if p["has_act"]:
            y = jnp.where(y >= 0, y, SLOPE * y)
        x = y
    return x


if __name__ == "__main__":
    # Small shapes consistent with the module: NCHW input, scaled-down ndf.
    key = jax.random.PRNGKey(0)
    k_in, k_par = jax.random.split(key)
    input_nc, ndf, n_layers = 4, 8, 3
    x = jax.random.normal(k_in, (2, input_nc, 16, 16), jnp.float32)

    params = init_params(k_par, input_nc=input_nc, ndf=ndf, n_layers=n_layers)

    fwd = jax.jit(lambda inp: nlayer_discriminator_forward(inp, params))
    out = jax.block_until_ready(fwd(x))
    ref = jax.block_until_ready(reference_forward(x, params))
    assert out.shape == ref.shape, (out.shape, ref.shape)
    assert jnp.allclose(out, ref, atol=5e-2, rtol=5e-2), float(
        jnp.max(jnp.abs(out - ref)))

    print("KERNEL_OK")
</pallas_src>

<mosaic_0001>
module attributes {stable_mosaic.version = 11 : i64} {
  func.func @kernel(%arg0: i32, %arg1: memref<168x128xbf16, #tpu.memory_space<vmem>>, %arg2: memref<128x128xbf16, #tpu.memory_space<vmem>>, %arg3: memref<1x128xf32, #tpu.memory_space<vmem>>, %arg4: memref<168x128xbf16, #tpu.memory_space<vmem>>) attributes {dimension_semantics = [#tpu.dimension_semantics<parallel>], iteration_bounds = array<i64: 1>, scalar_prefetch = 0 : i64, scratch_operands = 0 : i64, tpu.core_type = #tpu.core_type<tc>, window_params = [{transform_indices = @transform_0, window_bounds = array<i64: 168, 128>}, {pipeline_mode = #tpu.pipeline_mode<synchronous>, transform_indices = @transform_1, window_bounds = array<i64: 128, 128>}, {pipeline_mode = #tpu.pipeline_mode<synchronous>, transform_indices = @transform_2, window_bounds = array<i64: 1, 128>}, {transform_indices = @transform_3, window_bounds = array<i64: 168, 128>}]} {
    %c0 = arith.constant 0 : index
    %c0_0 = arith.constant 0 : index
    %0 = vector.load %arg1[%c0, %c0_0] : memref<168x128xbf16, #tpu.memory_space<vmem>>, vector<168x128xbf16>
    %c0_1 = arith.constant 0 : index
    %c0_2 = arith.constant 0 : index
    %1 = vector.load %arg2[%c0_1, %c0_2] : memref<128x128xbf16, #tpu.memory_space<vmem>>, vector<128x128xbf16>
    %cst = arith.constant dense<0.000000e+00> : vector<168x128xf32>
    %2 = tpu.matmul %0, %1, %cst {dimension_numbers = #tpu.dot_dimension_numbers<[1], [0], [0], [1], [0, 0, 1, 1], [], []>} : vector<168x128xbf16>, vector<128x128xbf16>, vector<168x128xf32> -> vector<168x128xf32>
    %c0_3 = arith.constant 0 : index
    %c0_4 = arith.constant 0 : index
    %3 = vector.load %arg3[%c0_3, %c0_4] : memref<1x128xf32, #tpu.memory_space<vmem>>, vector<1x128xf32>
    %4 = vector.broadcast %3 : vector<1x128xf32> to vector<168x128xf32>
    %5 = arith.addf %2, %4 : vector<168x128xf32>
    %cst_5 = arith.constant 0.000000e+00 : f32
    %6 = vector.broadcast %cst_5 : f32 to vector<168x128xf32>
    %7 = arith.cmpf oge, %5, %6 : vector<168x128xf32>
    %cst_6 = arith.constant 2.000000e-01 : f32
    %8 = vector.broadcast %cst_6 : f32 to vector<168x128xf32>
    %9 = arith.mulf %8, %5 : vector<168x128xf32>
    %10 = arith.select %7, %5, %9 : vector<168x128xi1>, vector<168x128xf32>
    %11 = arith.truncf %10 : vector<168x128xf32> to vector<168x128xbf16>
    %c0_7 = arith.constant 0 : index
    %c0_8 = arith.constant 0 : index
    %12 = vector.load %arg4[%c0_7, %c0_8] : memref<168x128xbf16, #tpu.memory_space<vmem>>, vector<168x128xbf16>
    tpu.vector_store %arg4[%c0_7, %c0_8], %11 {strides = array<i32>} : memref<168x128xbf16, #tpu.memory_space<vmem>>, vector<168x128xbf16>,
    return
  }
  func.func @transform_0(%arg0: i32) -> (i32, i32) {
    %c0_i32 = arith.constant 0 : i32
    %c0_i32_0 = arith.constant 0 : i32
    return %arg0, %c0_i32 : i32, i32
  }
  func.func @transform_1(%arg0: i32) -> (i32, i32) {
    %c0_i32 = arith.constant 0 : i32
    %c0_i32_0 = arith.constant 0 : i32
    %c0_i32_1 = arith.constant 0 : i32
    return %c0_i32, %c0_i32_0 : i32, i32
  }
  func.func @transform_2(%arg0: i32) -> (i32, i32) {
    %c0_i32 = arith.constant 0 : i32
    %c0_i32_0 = arith.constant 0 : i32
    %c0_i32_1 = arith.constant 0 : i32
    return %c0_i32, %c0_i32_0 : i32, i32
  }
  func.func @transform_3(%arg0: i32) -> (i32, i32) {
    %c0_i32 = arith.constant 0 : i32
    %c0_i32_0 = arith.constant 0 : i32
    return %arg0, %c0_i32 : i32, i32
  }
}

module attributes {stable_mosaic.version = 11 : i64} {
  func.func @kernel(%arg0: i32, %arg1: memref<56x128xbf16, #tpu.memory_space<vmem>>, %arg2: memref<128x128xbf16, #tpu.memory_space<vmem>>, %arg3: memref<1x128xf32, #tpu.memory_space<vmem>>, %arg4: memref<56x128xbf16, #tpu.memory_space<vmem>>, %arg5: memref<1x2x128xf32, #tpu.memory_space<vmem>>) attributes {dimension_semantics = [#tpu.dimension_semantics<parallel>], iteration_bounds = array<i64: 1>, scalar_prefetch = 0 : i64, scratch_operands = 0 : i64, tpu.core_type = #tpu.core_type<tc>, window_params = [{transform_indices = @transform_0, window_bounds = array<i64: 56, 128>}, {pipeline_mode = #tpu.pipeline_mode<synchronous>, transform_indices = @transform_1, window_bounds = array<i64: 128, 128>}, {pipeline_mode = #tpu.pipeline_mode<synchronous>, transform_indices = @transform_2, window_bounds = array<i64: 1, 128>}, {transform_indices = @transform_3, window_bounds = array<i64: 56, 128>}, {transform_indices = @transform_4, window_bounds = array<i64: 1, 2, 128>}]} {
    %c0 = arith.constant 0 : index
    %c0_0 = arith.constant 0 : index
    %0 = vector.load %arg1[%c0, %c0_0] : memref<56x128xbf16, #tpu.memory_space<vmem>>, vector<56x128xbf16>
    %c0_1 = arith.constant 0 : index
    %c0_2 = arith.constant 0 : index
    %1 = vector.load %arg2[%c0_1, %c0_2] : memref<128x128xbf16, #tpu.memory_space<vmem>>, vector<128x128xbf16>
    %cst = arith.constant dense<0.000000e+00> : vector<56x128xf32>
    %2 = tpu.matmul %0, %1, %cst {dimension_numbers = #tpu.dot_dimension_numbers<[1], [0], [0], [1], [0, 0, 1, 1], [], []>} : vector<56x128xbf16>, vector<128x128xbf16>, vector<56x128xf32> -> vector<56x128xf32>
    %c0_3 = arith.constant 0 : index
    %c0_4 = arith.constant 0 : index
    %3 = vector.load %arg3[%c0_3, %c0_4] : memref<1x128xf32, #tpu.memory_space<vmem>>, vector<1x128xf32>
    %4 = vector.broadcast %3 : vector<1x128xf32> to vector<56x128xf32>
    %5 = arith.addf %2, %4 : vector<56x128xf32>
    %c56_i32 = arith.constant 56 : i32
    %6 = arith.muli %arg0, %c56_i32 : i32
    %7 = tpu.iota {dimensions = array<i32: 0>} : vector<56x1xi32>
    %8 = vector.broadcast %6 : i32 to vector<56x1xi32>
    %9 = arith.addi %8, %7 : vector<56x1xi32>
    %c50_i32 = arith.constant 50 : i32
    %10 = vector.broadcast %c50_i32 : i32 to vector<56x1xi32>
    %11 = arith.cmpi slt, %9, %10 : vector<56x1xi32>
    %cst_5 = arith.constant 0.000000e+00 : f32
    %12 = vector.shape_cast %11 : vector<56x1xi1> to vector<56x1xi1>
    %13 = vector.broadcast %12 : vector<56x1xi1> to vector<56x128xi1>
    %14 = vector.broadcast %cst_5 : f32 to vector<56x128xf32>
    %15 = arith.select %13, %5, %14 : vector<56x128xi1>, vector<56x128xf32>
    %cst_6 = arith.constant dense<0.000000e+00> : vector<128xf32>
    %16 = vector.multi_reduction <add>, %15, %cst_6 [0] : vector<56x128xf32> to vector<128xf32>
    %17 = vector.shape_cast %16 : vector<128xf32> to vector<1x128xf32>
    %c0_7 = arith.constant 0 : index
    %c0_8 = arith.constant 0 : index
    %c0_9 = arith.constant 0 : index
    %18 = vector.load %arg5[%c0_7, %c0_8, %c0_9] : memref<1x2x128xf32, #tpu.memory_space<vmem>>, vector<1x1x128xf32>
    %19 = vector.shape_cast %18 : vector<1x1x128xf32> to vector<1x128xf32>
    %20 = vector.shape_cast %17 : vector<1x128xf32> to vector<1x1x128xf32>
    tpu.vector_store %arg5[%c0_7, %c0_8, %c0_9], %20 {strides = array<i32>} : memref<1x2x128xf32, #tpu.memory_space<vmem>>, vector<1x1x128xf32>,
    %21 = arith.mulf %15, %15 : vector<56x128xf32>
    %cst_10 = arith.constant dense<0.000000e+00> : vector<128xf32>
    %22 = vector.multi_reduction <add>, %21, %cst_10 [0] : vector<56x128xf32> to vector<128xf32>
    %23 = vector.shape_cast %22 : vector<128xf32> to vector<1x128xf32>
    %c0_11 = arith.constant 0 : index
    %c1 = arith.constant 1 : index
    %c0_12 = arith.constant 0 : index
    %24 = vector.load %arg5[%c0_11, %c1, %c0_12] : memref<1x2x128xf32, #tpu.memory_space<vmem>>, vector<1x1x128xf32>
    %25 = vector.shape_cast %24 : vector<1x1x128xf32> to vector<1x128xf32>
    %26 = vector.shape_cast %23 : vector<1x128xf32> to vector<1x1x128xf32>
    tpu.vector_store %arg5[%c0_11, %c1, %c0_12], %26 {strides = array<i32>} : memref<1x2x128xf32, #tpu.memory_space<vmem>>, vector<1x1x128xf32>,
    %27 = arith.truncf %5 : vector<56x128xf32> to vector<56x128xbf16>
    %c0_13 = arith.constant 0 : index
    %c0_14 = arith.constant 0 : index
    %28 = vector.load %arg4[%c0_13, %c0_14] : memref<56x128xbf16, #tpu.memory_space<vmem>>, vector<56x128xbf16>
    tpu.vector_store %arg4[%c0_13, %c0_14], %27 {strides = array<i32>} : memref<56x128xbf16, #tpu.memory_space<vmem>>, vector<56x128xbf16>,
    return
  }
  func.func @transform_0(%arg0: i32) -> (i32, i32) {
    %c0_i32 = arith.constant 0 : i32
    %c0_i32_0 = arith.constant 0 : i32
    return %arg0, %c0_i32 : i32, i32
  }
  func.func @transform_1(%arg0: i32) -> (i32, i32) {
    %c0_i32 = arith.constant 0 : i32
    %c0_i32_0 = arith.constant 0 : i32
    %c0_i32_1 = arith.constant 0 : i32
    return %c0_i32, %c0_i32_0 : i32, i32
  }
  func.func @transform_2(%arg0: i32) -> (i32, i32) {
    %c0_i32 = arith.constant 0 : i32
    %c0_i32_0 = arith.constant 0 : i32
    %c0_i32_1 = arith.constant 0 : i32
    return %c0_i32, %c0_i32_0 : i32, i32
  }
  func.func @transform_3(%arg0: i32) -> (i32, i32) {
    %c0_i32 = arith.constant 0 : i32
    %c0_i32_0 = arith.constant 0 : i32
    return %arg0, %c0_i32 : i32, i32
  }
  func.func @transform_4(%arg0: i32) -> (i32, i32, i32) {
    %c0_i32 = arith.constant 0 : i32
    %c0_i32_0 = arith.constant 0 : i32
    %c0_i32_1 = arith.constant 0 : i32
    return %arg0, %c0_i32, %c0_i32_0 : i32, i32, i32
  }
}

module attributes {stable_mosaic.version = 11 : i64} {
  func.func @_bn_apply_kernel(%arg0: i32, %arg1: memref<56x128xbf16, #tpu.memory_space<vmem>>, %arg2: memref<1x128xf32, #tpu.memory_space<vmem>>, %arg3: memref<1x128xf32, #tpu.memory_space<vmem>>, %arg4: memref<56x128xbf16, #tpu.memory_space<vmem>>) attributes {dimension_semantics = [#tpu.dimension_semantics<parallel>], iteration_bounds = array<i64: 1>, scalar_prefetch = 0 : i64, scratch_operands = 0 : i64, tpu.core_type = #tpu.core_type<tc>, window_params = [{transform_indices = @transform_0, window_bounds = array<i64: 56, 128>}, {pipeline_mode = #tpu.pipeline_mode<synchronous>, transform_indices = @transform_1, window_bounds = array<i64: 1, 128>}, {pipeline_mode = #tpu.pipeline_mode<synchronous>, transform_indices = @transform_2, window_bounds = array<i64: 1, 128>}, {transform_indices = @transform_3, window_bounds = array<i64: 56, 128>}]} {
    %c0 = arith.constant 0 : index
    %c0_0 = arith.constant 0 : index
    %0 = vector.load %arg1[%c0, %c0_0] : memref<56x128xbf16, #tpu.memory_space<vmem>>, vector<56x128xbf16>
    %1 = arith.extf %0 : vector<56x128xbf16> to vector<56x128xf32>
    %c0_1 = arith.constant 0 : index
    %c0_2 = arith.constant 0 : index
    %2 = vector.load %arg2[%c0_1, %c0_2] : memref<1x128xf32, #tpu.memory_space<vmem>>, vector<1x128xf32>
    %3 = vector.broadcast %2 : vector<1x128xf32> to vector<56x128xf32>
    %4 = arith.mulf %1, %3 : vector<56x128xf32>
    %c0_3 = arith.constant 0 : index
    %c0_4 = arith.constant 0 : index
    %5 = vector.load %arg3[%c0_3, %c0_4] : memref<1x128xf32, #tpu.memory_space<vmem>>, vector<1x128xf32>
    %6 = vector.broadcast %5 : vector<1x128xf32> to vector<56x128xf32>
    %7 = arith.addf %4, %6 : vector<56x128xf32>
    %cst = arith.constant 0.000000e+00 : f32
    %8 = vector.broadcast %cst : f32 to vector<56x128xf32>
    %9 = arith.cmpf oge, %7, %8 : vector<56x128xf32>
    %cst_5 = arith.constant 2.000000e-01 : f32
    %10 = vector.broadcast %cst_5 : f32 to vector<56x128xf32>
    %11 = arith.mulf %10, %7 : vector<56x128xf32>
    %12 = arith.select %9, %7, %11 : vector<56x128xi1>, vector<56x128xf32>
    %13 = arith.truncf %12 : vector<56x128xf32> to vector<56x128xbf16>
    %c0_6 = arith.constant 0 : index
    %c0_7 = arith.constant 0 : index
    %14 = vector.load %arg4[%c0_6, %c0_7] : memref<56x128xbf16, #tpu.memory_space<vmem>>, vector<56x128xbf16>
    tpu.vector_store %arg4[%c0_6, %c0_7], %13 {strides = array<i32>} : memref<56x128xbf16, #tpu.memory_space<vmem>>, vector<56x128xbf16>,
    return
  }
  func.func @transform_0(%arg0: i32) -> (i32, i32) {
    %c0_i32 = arith.constant 0 : i32
    %c0_i32_0 = arith.constant 0 : i32
    return %arg0, %c0_i32 : i32, i32
  }
  func.func @transform_1(%arg0: i32) -> (i32, i32) {
    %c0_i32 = arith.constant 0 : i32
    %c0_i32_0 = arith.constant 0 : i32
    %c0_i32_1 = arith.constant 0 : i32
    return %c0_i32, %c0_i32_0 : i32, i32
  }
  func.func @transform_2(%arg0: i32) -> (i32, i32) {
    %c0_i32 = arith.constant 0 : i32
    %c0_i32_0 = arith.constant 0 : i32
    %c0_i32_1 = arith.constant 0 : i32
    return %c0_i32, %c0_i32_0 : i32, i32
  }
  func.func @transform_3(%arg0: i32) -> (i32, i32) {
    %c0_i32 = arith.constant 0 : i32
    %c0_i32_0 = arith.constant 0 : i32
    return %arg0, %c0_i32 : i32, i32
  }
}

module attributes {stable_mosaic.version = 11 : i64} {
  func.func @kernel(%arg0: i32, %arg1: memref<24x256xbf16, #tpu.memory_space<vmem>>, %arg2: memref<256x128xbf16, #tpu.memory_space<vmem>>, %arg3: memref<1x128xf32, #tpu.memory_space<vmem>>, %arg4: memref<24x128xbf16, #tpu.memory_space<vmem>>, %arg5: memref<1x2x128xf32, #tpu.memory_space<vmem>>) attributes {dimension_semantics = [#tpu.dimension_semantics<parallel>], iteration_bounds = array<i64: 1>, scalar_prefetch = 0 : i64, scratch_operands = 0 : i64, tpu.core_type = #tpu.core_type<tc>, window_params = [{transform_indices = @transform_0, window_bounds = array<i64: 24, 256>}, {pipeline_mode = #tpu.pipeline_mode<synchronous>, transform_indices = @transform_1, window_bounds = array<i64: 256, 128>}, {pipeline_mode = #tpu.pipeline_mode<synchronous>, transform_indices = @transform_2, window_bounds = array<i64: 1, 128>}, {transform_indices = @transform_3, window_bounds = array<i64: 24, 128>}, {transform_indices = @transform_4, window_bounds = array<i64: 1, 2, 128>}]} {
    %c0 = arith.constant 0 : index
    %c0_0 = arith.constant 0 : index
    %0 = vector.load %arg1[%c0, %c0_0] : memref<24x256xbf16, #tpu.memory_space<vmem>>, vector<24x256xbf16>
    %c0_1 = arith.constant 0 : index
    %c0_2 = arith.constant 0 : index
    %1 = vector.load %arg2[%c0_1, %c0_2] : memref<256x128xbf16, #tpu.memory_space<vmem>>, vector<256x128xbf16>
    %cst = arith.constant dense<0.000000e+00> : vector<24x128xf32>
    %2 = tpu.matmul %0, %1, %cst {dimension_numbers = #tpu.dot_dimension_numbers<[1], [0], [0], [1], [0, 0, 1, 1], [], []>} : vector<24x256xbf16>, vector<256x128xbf16>, vector<24x128xf32> -> vector<24x128xf32>
    %c0_3 = arith.constant 0 : index
    %c0_4 = arith.constant 0 : index
    %3 = vector.load %arg3[%c0_3, %c0_4] : memref<1x128xf32, #tpu.memory_space<vmem>>, vector<1x128xf32>
    %4 = vector.broadcast %3 : vector<1x128xf32> to vector<24x128xf32>
    %5 = arith.addf %2, %4 : vector<24x128xf32>
    %c24_i32 = arith.constant 24 : i32
    %6 = arith.muli %arg0, %c24_i32 : i32
    %7 = tpu.iota {dimensions = array<i32: 0>} : vector<24x1xi32>
    %8 = vector.broadcast %6 : i32 to vector<24x1xi32>
    %9 = arith.addi %8, %7 : vector<24x1xi32>
    %c18_i32 = arith.constant 18 : i32
    %10 = vector.broadcast %c18_i32 : i32 to vector<24x1xi32>
    %11 = arith.cmpi slt, %9, %10 : vector<24x1xi32>
    %cst_5 = arith.constant 0.000000e+00 : f32
    %12 = vector.shape_cast %11 : vector<24x1xi1> to vector<24x1xi1>
    %13 = vector.broadcast %12 : vector<24x1xi1> to vector<24x128xi1>
    %14 = vector.broadcast %cst_5 : f32 to vector<24x128xf32>
    %15 = arith.select %13, %5, %14 : vector<24x128xi1>, vector<24x128xf32>
    %cst_6 = arith.constant dense<0.000000e+00> : vector<128xf32>
    %16 = vector.multi_reduction <add>, %15, %cst_6 [0] : vector<24x128xf32> to vector<128xf32>
    %17 = vector.shape_cast %16 : vector<128xf32> to vector<1x128xf32>
    %c0_7 = arith.constant 0 : index
    %c0_8 = arith.constant 0 : index
    %c0_9 = arith.constant 0 : index
    %18 = vector.load %arg5[%c0_7, %c0_8, %c0_9] : memref<1x2x128xf32, #tpu.memory_space<vmem>>, vector<1x1x128xf32>
    %19 = vector.shape_cast %18 : vector<1x1x128xf32> to vector<1x128xf32>
    %20 = vector.shape_cast %17 : vector<1x128xf32> to vector<1x1x128xf32>
    tpu.vector_store %arg5[%c0_7, %c0_8, %c0_9], %20 {strides = array<i32>} : memref<1x2x128xf32, #tpu.memory_space<vmem>>, vector<1x1x128xf32>,
    %21 = arith.mulf %15, %15 : vector<24x128xf32>
    %cst_10 = arith.constant dense<0.000000e+00> : vector<128xf32>
    %22 = vector.multi_reduction <add>, %21, %cst_10 [0] : vector<24x128xf32> to vector<128xf32>
    %23 = vector.shape_cast %22 : vector<128xf32> to vector<1x128xf32>
    %c0_11 = arith.constant 0 : index
    %c1 = arith.constant 1 : index
    %c0_12 = arith.constant 0 : index
    %24 = vector.load %arg5[%c0_11, %c1, %c0_12] : memref<1x2x128xf32, #tpu.memory_space<vmem>>, vector<1x1x128xf32>
    %25 = vector.shape_cast %24 : vector<1x1x128xf32> to vector<1x128xf32>
    %26 = vector.shape_cast %23 : vector<1x128xf32> to vector<1x1x128xf32>
    tpu.vector_store %arg5[%c0_11, %c1, %c0_12], %26 {strides = array<i32>} : memref<1x2x128xf32, #tpu.memory_space<vmem>>, vector<1x1x128xf32>,
    %27 = arith.truncf %5 : vector<24x128xf32> to vector<24x128xbf16>
    %c0_13 = arith.constant 0 : index
    %c0_14 = arith.constant 0 : index
    %28 = vector.load %arg4[%c0_13, %c0_14] : memref<24x128xbf16, #tpu.memory_space<vmem>>, vector<24x128xbf16>
    tpu.vector_store %arg4[%c0_13, %c0_14], %27 {strides = array<i32>} : memref<24x128xbf16, #tpu.memory_space<vmem>>, vector<24x128xbf16>,
    return
  }
  func.func @transform_0(%arg0: i32) -> (i32, i32) {
    %c0_i32 = arith.constant 0 : i32
    %c0_i32_0 = arith.constant 0 : i32
    return %arg0, %c0_i32 : i32, i32
  }
  func.func @transform_1(%arg0: i32) -> (i32, i32) {
    %c0_i32 = arith.constant 0 : i32
    %c0_i32_0 = arith.constant 0 : i32
    %c0_i32_1 = arith.constant 0 : i32
    return %c0_i32, %c0_i32_0 : i32, i32
  }
  func.func @transform_2(%arg0: i32) -> (i32, i32) {
    %c0_i32 = arith.constant 0 : i32
    %c0_i32_0 = arith.constant 0 : i32
    %c0_i32_1 = arith.constant 0 : i32
    return %c0_i32, %c0_i32_0 : i32, i32
  }
  func.func @transform_3(%arg0: i32) -> (i32, i32) {
    %c0_i32 = arith.constant 0 : i32
    %c0_i32_0 = arith.constant 0 : i32
    return %arg0, %c0_i32 : i32, i32
  }
  func.func @transform_4(%arg0: i32) -> (i32, i32, i32) {
    %c0_i32 = arith.constant 0 : i32
    %c0_i32_0 = arith.constant 0 : i32
    %c0_i32_1 = arith.constant 0 : i32
    return %arg0, %c0_i32, %c0_i32_0 : i32, i32, i32
  }
}

module attributes {stable_mosaic.version = 11 : i64} {
  func.func @_bn_apply_kernel(%arg0: i32, %arg1: memref<24x128xbf16, #tpu.memory_space<vmem>>, %arg2: memref<1x128xf32, #tpu.memory_space<vmem>>, %arg3: memref<1x128xf32, #tpu.memory_space<vmem>>, %arg4: memref<24x128xbf16, #tpu.memory_space<vmem>>) attributes {dimension_semantics = [#tpu.dimension_semantics<parallel>], iteration_bounds = array<i64: 1>, scalar_prefetch = 0 : i64, scratch_operands = 0 : i64, tpu.core_type = #tpu.core_type<tc>, window_params = [{transform_indices = @transform_0, window_bounds = array<i64: 24, 128>}, {pipeline_mode = #tpu.pipeline_mode<synchronous>, transform_indices = @transform_1, window_bounds = array<i64: 1, 128>}, {pipeline_mode = #tpu.pipeline_mode<synchronous>, transform_indices = @transform_2, window_bounds = array<i64: 1, 128>}, {transform_indices = @transform_3, window_bounds = array<i64: 24, 128>}]} {
    %c0 = arith.constant 0 : index
    %c0_0 = arith.constant 0 : index
    %0 = vector.load %arg1[%c0, %c0_0] : memref<24x128xbf16, #tpu.memory_space<vmem>>, vector<24x128xbf16>
    %1 = arith.extf %0 : vector<24x128xbf16> to vector<24x128xf32>
    %c0_1 = arith.constant 0 : index
    %c0_2 = arith.constant 0 : index
    %2 = vector.load %arg2[%c0_1, %c0_2] : memref<1x128xf32, #tpu.memory_space<vmem>>, vector<1x128xf32>
    %3 = vector.broadcast %2 : vector<1x128xf32> to vector<24x128xf32>
    %4 = arith.mulf %1, %3 : vector<24x128xf32>
    %c0_3 = arith.constant 0 : index
    %c0_4 = arith.constant 0 : index
    %5 = vector.load %arg3[%c0_3, %c0_4] : memref<1x128xf32, #tpu.memory_space<vmem>>, vector<1x128xf32>
    %6 = vector.broadcast %5 : vector<1x128xf32> to vector<24x128xf32>
    %7 = arith.addf %4, %6 : vector<24x128xf32>
    %cst = arith.constant 0.000000e+00 : f32
    %8 = vector.broadcast %cst : f32 to vector<24x128xf32>
    %9 = arith.cmpf oge, %7, %8 : vector<24x128xf32>
    %cst_5 = arith.constant 2.000000e-01 : f32
    %10 = vector.broadcast %cst_5 : f32 to vector<24x128xf32>
    %11 = arith.mulf %10, %7 : vector<24x128xf32>
    %12 = arith.select %9, %7, %11 : vector<24x128xi1>, vector<24x128xf32>
    %13 = arith.truncf %12 : vector<24x128xf32> to vector<24x128xbf16>
    %c0_6 = arith.constant 0 : index
    %c0_7 = arith.constant 0 : index
    %14 = vector.load %arg4[%c0_6, %c0_7] : memref<24x128xbf16, #tpu.memory_space<vmem>>, vector<24x128xbf16>
    tpu.vector_store %arg4[%c0_6, %c0_7], %13 {strides = array<i32>} : memref<24x128xbf16, #tpu.memory_space<vmem>>, vector<24x128xbf16>,
    return
  }
  func.func @transform_0(%arg0: i32) -> (i32, i32) {
    %c0_i32 = arith.constant 0 : i32
    %c0_i32_0 = arith.constant 0 : i32
    return %arg0, %c0_i32 : i32, i32
  }
  func.func @transform_1(%arg0: i32) -> (i32, i32) {
    %c0_i32 = arith.constant 0 : i32
    %c0_i32_0 = arith.constant 0 : i32
    %c0_i32_1 = arith.constant 0 : i32
    return %c0_i32, %c0_i32_0 : i32, i32
  }
  func.func @transform_2(%arg0: i32) -> (i32, i32) {
    %c0_i32 = arith.constant 0 : i32
    %c0_i32_0 = arith.constant 0 : i32
    %c0_i32_1 = arith.constant 0 : i32
    return %c0_i32, %c0_i32_0 : i32, i32
  }
  func.func @transform_3(%arg0: i32) -> (i32, i32) {
    %c0_i32 = arith.constant 0 : i32
    %c0_i32_0 = arith.constant 0 : i32
    return %arg0, %c0_i32 : i32, i32
  }
}

module attributes {stable_mosaic.version = 11 : i64} {
  func.func @kernel(%arg0: i32, %arg1: memref<32x512xbf16, #tpu.memory_space<vmem>>, %arg2: memref<512x128xbf16, #tpu.memory_space<vmem>>, %arg3: memref<1x128xf32, #tpu.memory_space<vmem>>, %arg4: memref<32x128xbf16, #tpu.memory_space<vmem>>, %arg5: memref<1x2x128xf32, #tpu.memory_space<vmem>>) attributes {dimension_semantics = [#tpu.dimension_semantics<parallel>], iteration_bounds = array<i64: 1>, scalar_prefetch = 0 : i64, scratch_operands = 0 : i64, tpu.core_type = #tpu.core_type<tc>, window_params = [{transform_indices = @transform_0, window_bounds = array<i64: 32, 512>}, {pipeline_mode = #tpu.pipeline_mode<synchronous>, transform_indices = @transform_1, window_bounds = array<i64: 512, 128>}, {pipeline_mode = #tpu.pipeline_mode<synchronous>, transform_indices = @transform_2, window_bounds = array<i64: 1, 128>}, {transform_indices = @transform_3, window_bounds = array<i64: 32, 128>}, {transform_indices = @transform_4, window_bounds = array<i64: 1, 2, 128>}]} {
    %c0 = arith.constant 0 : index
    %c0_0 = arith.constant 0 : index
    %0 = vector.load %arg1[%c0, %c0_0] : memref<32x512xbf16, #tpu.memory_space<vmem>>, vector<32x512xbf16>
    %c0_1 = arith.constant 0 : index
    %c0_2 = arith.constant 0 : index
    %1 = vector.load %arg2[%c0_1, %c0_2] : memref<512x128xbf16, #tpu.memory_space<vmem>>, vector<512x128xbf16>
    %cst = arith.constant dense<0.000000e+00> : vector<32x128xf32>
    %2 = tpu.matmul %0, %1, %cst {dimension_numbers = #tpu.dot_dimension_numbers<[1], [0], [0], [1], [0, 0, 1, 1], [], []>} : vector<32x512xbf16>, vector<512x128xbf16>, vector<32x128xf32> -> vector<32x128xf32>
    %c0_3 = arith.constant 0 : index
    %c0_4 = arith.constant 0 : index
    %3 = vector.load %arg3[%c0_3, %c0_4] : memref<1x128xf32, #tpu.memory_space<vmem>>, vector<1x128xf32>
    %4 = vector.broadcast %3 : vector<1x128xf32> to vector<32x128xf32>
    %5 = arith.addf %2, %4 : vector<32x128xf32>
    %c32_i32 = arith.constant 32 : i32
    %6 = arith.muli %arg0, %c32_i32 : i32
    %7 = tpu.iota {dimensions = array<i32: 0>} : vector<32x1xi32>
    %8 = vector.broadcast %6 : i32 to vector<32x1xi32>
    %9 = arith.addi %8, %7 : vector<32x1xi32>
    %c32_i32_5 = arith.constant 32 : i32
    %10 = vector.broadcast %c32_i32_5 : i32 to vector<32x1xi32>
    %11 = arith.cmpi slt, %9, %10 : vector<32x1xi32>
    %cst_6 = arith.constant 0.000000e+00 : f32
    %12 = vector.shape_cast %11 : vector<32x1xi1> to vector<32x1xi1>
    %13 = vector.broadcast %12 : vector<32x1xi1> to vector<32x128xi1>
    %14 = vector.broadcast %cst_6 : f32 to vector<32x128xf32>
    %15 = arith.select %13, %5, %14 : vector<32x128xi1>, vector<32x128xf32>
    %cst_7 = arith.constant dense<0.000000e+00> : vector<128xf32>
    %16 = vector.multi_reduction <add>, %15, %cst_7 [0] : vector<32x128xf32> to vector<128xf32>
    %17 = vector.shape_cast %16 : vector<128xf32> to vector<1x128xf32>
    %c0_8 = arith.constant 0 : index
    %c0_9 = arith.constant 0 : index
    %c0_10 = arith.constant 0 : index
    %18 = vector.load %arg5[%c0_8, %c0_9, %c0_10] : memref<1x2x128xf32, #tpu.memory_space<vmem>>, vector<1x1x128xf32>
    %19 = vector.shape_cast %18 : vector<1x1x128xf32> to vector<1x128xf32>
    %20 = vector.shape_cast %17 : vector<1x128xf32> to vector<1x1x128xf32>
    tpu.vector_store %arg5[%c0_8, %c0_9, %c0_10], %20 {strides = array<i32>} : memref<1x2x128xf32, #tpu.memory_space<vmem>>, vector<1x1x128xf32>,
    %21 = arith.mulf %15, %15 : vector<32x128xf32>
    %cst_11 = arith.constant dense<0.000000e+00> : vector<128xf32>
    %22 = vector.multi_reduction <add>, %21, %cst_11 [0] : vector<32x128xf32> to vector<128xf32>
    %23 = vector.shape_cast %22 : vector<128xf32> to vector<1x128xf32>
    %c0_12 = arith.constant 0 : index
    %c1 = arith.constant 1 : index
    %c0_13 = arith.constant 0 : index
    %24 = vector.load %arg5[%c0_12, %c1, %c0_13] : memref<1x2x128xf32, #tpu.memory_space<vmem>>, vector<1x1x128xf32>
    %25 = vector.shape_cast %24 : vector<1x1x128xf32> to vector<1x128xf32>
    %26 = vector.shape_cast %23 : vector<1x128xf32> to vector<1x1x128xf32>
    tpu.vector_store %arg5[%c0_12, %c1, %c0_13], %26 {strides = array<i32>} : memref<1x2x128xf32, #tpu.memory_space<vmem>>, vector<1x1x128xf32>,
    %27 = arith.truncf %5 : vector<32x128xf32> to vector<32x128xbf16>
    %c0_14 = arith.constant 0 : index
    %c0_15 = arith.constant 0 : index
    %28 = vector.load %arg4[%c0_14, %c0_15] : memref<32x128xbf16, #tpu.memory_space<vmem>>, vector<32x128xbf16>
    tpu.vector_store %arg4[%c0_14, %c0_15], %27 {strides = array<i32>} : memref<32x128xbf16, #tpu.memory_space<vmem>>, vector<32x128xbf16>,
    return
  }
  func.func @transform_0(%arg0: i32) -> (i32, i32) {
    %c0_i32 = arith.constant 0 : i32
    %c0_i32_0 = arith.constant 0 : i32
    return %arg0, %c0_i32 : i32, i32
  }
  func.func @transform_1(%arg0: i32) -> (i32, i32) {
    %c0_i32 = arith.constant 0 : i32
    %c0_i32_0 = arith.constant 0 : i32
    %c0_i32_1 = arith.constant 0 : i32
    return %c0_i32, %c0_i32_0 : i32, i32
  }
  func.func @transform_2(%arg0: i32) -> (i32, i32) {
    %c0_i32 = arith.constant 0 : i32
    %c0_i32_0 = arith.constant 0 : i32
    %c0_i32_1 = arith.constant 0 : i32
    return %c0_i32, %c0_i32_0 : i32, i32
  }
  func.func @transform_3(%arg0: i32) -> (i32, i32) {
    %c0_i32 = arith.constant 0 : i32
    %c0_i32_0 = arith.constant 0 : i32
    return %arg0, %c0_i32 : i32, i32
  }
  func.func @transform_4(%arg0: i32) -> (i32, i32, i32) {
    %c0_i32 = arith.constant 0 : i32
    %c0_i32_0 = arith.constant 0 : i32
    %c0_i32_1 = arith.constant 0 : i32
    return %arg0, %c0_i32, %c0_i32_0 : i32, i32, i32
  }
}

module attributes {stable_mosaic.version = 11 : i64} {
  func.func @_bn_apply_kernel(%arg0: i32, %arg1: memref<32x128xbf16, #tpu.memory_space<vmem>>, %arg2: memref<1x128xf32, #tpu.memory_space<vmem>>, %arg3: memref<1x128xf32, #tpu.memory_space<vmem>>, %arg4: memref<32x128xbf16, #tpu.memory_space<vmem>>) attributes {dimension_semantics = [#tpu.dimension_semantics<parallel>], iteration_bounds = array<i64: 1>, scalar_prefetch = 0 : i64, scratch_operands = 0 : i64, tpu.core_type = #tpu.core_type<tc>, window_params = [{transform_indices = @transform_0, window_bounds = array<i64: 32, 128>}, {pipeline_mode = #tpu.pipeline_mode<synchronous>, transform_indices = @transform_1, window_bounds = array<i64: 1, 128>}, {pipeline_mode = #tpu.pipeline_mode<synchronous>, transform_indices = @transform_2, window_bounds = array<i64: 1, 128>}, {transform_indices = @transform_3, window_bounds = array<i64: 32, 128>}]} {
    %c0 = arith.constant 0 : index
    %c0_0 = arith.constant 0 : index
    %0 = vector.load %arg1[%c0, %c0_0] : memref<32x128xbf16, #tpu.memory_space<vmem>>, vector<32x128xbf16>
    %1 = arith.extf %0 : vector<32x128xbf16> to vector<32x128xf32>
    %c0_1 = arith.constant 0 : index
    %c0_2 = arith.constant 0 : index
    %2 = vector.load %arg2[%c0_1, %c0_2] : memref<1x128xf32, #tpu.memory_space<vmem>>, vector<1x128xf32>
    %3 = vector.broadcast %2 : vector<1x128xf32> to vector<32x128xf32>
    %4 = arith.mulf %1, %3 : vector<32x128xf32>
    %c0_3 = arith.constant 0 : index
    %c0_4 = arith.constant 0 : index
    %5 = vector.load %arg3[%c0_3, %c0_4] : memref<1x128xf32, #tpu.memory_space<vmem>>, vector<1x128xf32>
    %6 = vector.broadcast %5 : vector<1x128xf32> to vector<32x128xf32>
    %7 = arith.addf %4, %6 : vector<32x128xf32>
    %cst = arith.constant 0.000000e+00 : f32
    %8 = vector.broadcast %cst : f32 to vector<32x128xf32>
    %9 = arith.cmpf oge, %7, %8 : vector<32x128xf32>
    %cst_5 = arith.constant 2.000000e-01 : f32
    %10 = vector.broadcast %cst_5 : f32 to vector<32x128xf32>
    %11 = arith.mulf %10, %7 : vector<32x128xf32>
    %12 = arith.select %9, %7, %11 : vector<32x128xi1>, vector<32x128xf32>
    %13 = arith.truncf %12 : vector<32x128xf32> to vector<32x128xbf16>
    %c0_6 = arith.constant 0 : index
    %c0_7 = arith.constant 0 : index
    %14 = vector.load %arg4[%c0_6, %c0_7] : memref<32x128xbf16, #tpu.memory_space<vmem>>, vector<32x128xbf16>
    tpu.vector_store %arg4[%c0_6, %c0_7], %13 {strides = array<i32>} : memref<32x128xbf16, #tpu.memory_space<vmem>>, vector<32x128xbf16>,
    return
  }
  func.func @transform_0(%arg0: i32) -> (i32, i32) {
    %c0_i32 = arith.constant 0 : i32
    %c0_i32_0 = arith.constant 0 : i32
    return %arg0, %c0_i32 : i32, i32
  }
  func.func @transform_1(%arg0: i32) -> (i32, i32) {
    %c0_i32 = arith.constant 0 : i32
    %c0_i32_0 = arith.constant 0 : i32
    %c0_i32_1 = arith.constant 0 : i32
    return %c0_i32, %c0_i32_0 : i32, i32
  }
  func.func @transform_2(%arg0: i32) -> (i32, i32) {
    %c0_i32 = arith.constant 0 : i32
    %c0_i32_0 = arith.constant 0 : i32
    %c0_i32_1 = arith.constant 0 : i32
    return %c0_i32, %c0_i32_0 : i32, i32
  }
  func.func @transform_3(%arg0: i32) -> (i32, i32) {
    %c0_i32 = arith.constant 0 : i32
    %c0_i32_0 = arith.constant 0 : i32
    return %arg0, %c0_i32 : i32, i32
  }
}

module attributes {stable_mosaic.version = 11 : i64} {
  func.func @kernel(%arg0: i32, %arg1: memref<56x1024xbf16, #tpu.memory_space<vmem>>, %arg2: memref<1024x128xbf16, #tpu.memory_space<vmem>>, %arg3: memref<1x128xf32, #tpu.memory_space<vmem>>, %arg4: memref<56x128xbf16, #tpu.memory_space<vmem>>) attributes {dimension_semantics = [#tpu.dimension_semantics<parallel>], iteration_bounds = array<i64: 1>, scalar_prefetch = 0 : i64, scratch_operands = 0 : i64, tpu.core_type = #tpu.core_type<tc>, window_params = [{transform_indices = @transform_0, window_bounds = array<i64: 56, 1024>}, {pipeline_mode = #tpu.pipeline_mode<synchronous>, transform_indices = @transform_1, window_bounds = array<i64: 1024, 128>}, {pipeline_mode = #tpu.pipeline_mode<synchronous>, transform_indices = @transform_2, window_bounds = array<i64: 1, 128>}, {transform_indices = @transform_3, window_bounds = array<i64: 56, 128>}]} {
    %c0 = arith.constant 0 : index
    %c0_0 = arith.constant 0 : index
    %0 = vector.load %arg1[%c0, %c0_0] : memref<56x1024xbf16, #tpu.memory_space<vmem>>, vector<56x1024xbf16>
    %c0_1 = arith.constant 0 : index
    %c0_2 = arith.constant 0 : index
    %1 = vector.load %arg2[%c0_1, %c0_2] : memref<1024x128xbf16, #tpu.memory_space<vmem>>, vector<1024x128xbf16>
    %cst = arith.constant dense<0.000000e+00> : vector<56x128xf32>
    %2 = tpu.matmul %0, %1, %cst {dimension_numbers = #tpu.dot_dimension_numbers<[1], [0], [0], [1], [0, 0, 1, 1], [], []>} : vector<56x1024xbf16>, vector<1024x128xbf16>, vector<56x128xf32> -> vector<56x128xf32>
    %c0_3 = arith.constant 0 : index
    %c0_4 = arith.constant 0 : index
    %3 = vector.load %arg3[%c0_3, %c0_4] : memref<1x128xf32, #tpu.memory_space<vmem>>, vector<1x128xf32>
    %4 = vector.broadcast %3 : vector<1x128xf32> to vector<56x128xf32>
    %5 = arith.addf %2, %4 : vector<56x128xf32>
    %6 = arith.truncf %5 : vector<56x128xf32> to vector<56x128xbf16>
    %c0_5 = arith.constant 0 : index
    %c0_6 = arith.constant 0 : index
    %7 = vector.load %arg4[%c0_5, %c0_6] : memref<56x128xbf16, #tpu.memory_space<vmem>>, vector<56x128xbf16>
    tpu.vector_store %arg4[%c0_5, %c0_6], %6 {strides = array<i32>} : memref<56x128xbf16, #tpu.memory_space<vmem>>, vector<56x128xbf16>,
    return
  }
  func.func @transform_0(%arg0: i32) -> (i32, i32) {
    %c0_i32 = arith.constant 0 : i32
    %c0_i32_0 = arith.constant 0 : i32
    return %arg0, %c0_i32 : i32, i32
  }
  func.func @transform_1(%arg0: i32) -> (i32, i32) {
    %c0_i32 = arith.constant 0 : i32
    %c0_i32_0 = arith.constant 0 : i32
    %c0_i32_1 = arith.constant 0 : i32
    return %c0_i32, %c0_i32_0 : i32, i32
  }
  func.func @transform_2(%arg0: i32) -> (i32, i32) {
    %c0_i32 = arith.constant 0 : i32
    %c0_i32_0 = arith.constant 0 : i32
    %c0_i32_1 = arith.constant 0 : i32
    return %c0_i32, %c0_i32_0 : i32, i32
  }
  func.func @transform_3(%arg0: i32) -> (i32, i32) {
    %c0_i32 = arith.constant 0 : i32
    %c0_i32_0 = arith.constant 0 : i32
    return %arg0, %c0_i32 : i32, i32
  }
}

</mosaic_0001>

<llo_original>
// kernel: _lambda_.8
$region0: #{_lambda_.8}
  #allocation0 [shape = 'u32[]', space=smem, size = 0x4, offset = 0x4, fixed_abs, tag = 'smem constant byte address 0x4 - core index']
  #allocation1 [shape = 'u32[144,128]{1,0:T(1,128)}', space=vmem, size = 0x12000, scoped, tag = 'internal scratch']
  %s0 = inlined_call_operand.vmem [shape: bf16[168,128], index: 0, kind: input, shape index: {}]
  %s1 = inlined_call_operand.vmem [shape: bf16[128,128], index: 1, kind: input, shape index: {}]
  %s2 = inlined_call_operand.vmem [shape: f32[1,128], index: 2, kind: input, shape index: {}]
  %s3 = inlined_call_operand.vmem [shape: bf16[168,128], index: 3, kind: output, shape index: {}]
  %s4 = sld [smem:[#allocation0]]
  $region22: #{_lambda_.8} parent=0
    _
  %s6 = ssub.s32 1, %s4
  %s7 = scalar_select 0, %s6, %s4
  // Predicated region
  $region2: #{_lambda_.8} parent=0 // pred_check
    _
  $region3: #{_lambda_.8} parent=0 // pred_check_branch
    %9 = sbr.rel (0) target = $region5
  $region4: #{_lambda_.8} parent=0 // pred_region
    _
  $region5: #{_lambda_.8} parent=0 // pred_fallthru
    _
  // Predicated region
  $region6: #{_lambda_.8} parent=0 // pred_check
    _
  $region7: #{_lambda_.8} parent=0 // pred_check_branch
    %11 = sbr.rel (0) target = $region9
  $region8: #{_lambda_.8} parent=0 // pred_region
    _
  $region9: #{_lambda_.8} parent=0 // pred_fallthru
    _
  // Predicated region
  $region10: #{_lambda_.8} parent=0 // pred_check
    _
  $region11: #{_lambda_.8} parent=0 // pred_check_branch
    %13 = sbr.rel (0) target = $region13
  $region12: #{_lambda_.8} parent=0 // pred_region
    _
  $region13: #{_lambda_.8} parent=0 // pred_fallthru
    _
  %v15 = vld [vmem:[%s0] sm:$0xf]
  %v16 = vld [vmem:[%s0 + $0x4] sm:$0xf]
  %v17 = vld [vmem:[%s0 + $0x8] sm:$0xf]
  %v18 = vld [vmem:[%s0 + $0xc] sm:$0xf]
  %v19 = vld [vmem:[%s0 + $0x10] sm:$0xf]
  %v20 = vld [vmem:[%s0 + $0x14] sm:$0xf]
  %v21 = vld [vmem:[%s0 + $0x18] sm:$0xf]
  %v22 = vld [vmem:[%s0 + $0x1c] sm:$0xf]
  %v23 = vld [vmem:[%s0 + $0x20] sm:$0xf]
  %v24 = vld [vmem:[%s0 + $0x24] sm:$0xf]
  %v25 = vld [vmem:[%s0 + $0x28] sm:$0xf]
  %v26 = vld [vmem:[%s0 + $0x2c] sm:$0xf]
  %v27 = vld [vmem:[%s0 + $0x30] sm:$0xf]
  %v28 = vld [vmem:[%s0 + $0x34] sm:$0xf]
  %v29 = vld [vmem:[%s0 + $0x38] sm:$0xf]
  %v30 = vld [vmem:[%s0 + $0x3c] sm:$0xf]
  %v31 = vld [vmem:[%s0 + $0x40] sm:$0xf]
  %v32 = vld [vmem:[%s0 + $0x44] sm:$0xf]
  %v33 = vld [vmem:[%s0 + $0x48] sm:$0xf]
  %v34 = vld [vmem:[%s0 + $0x4c] sm:$0xf]
  %v35 = vld [vmem:[%s0 + $0x50] sm:$0xf]
  %v36 = vld [vmem:[%s1] sm:$0xf]
  %v37 = vld [vmem:[%s1 + $0x4] sm:$0xf]
  %v38 = vld [vmem:[%s1 + $0x8] sm:$0xf]
  %v39 = vld [vmem:[%s1 + $0xc] sm:$0xf]
  %v40 = vld [vmem:[%s1 + $0x10] sm:$0xf]
  %v41 = vld [vmem:[%s1 + $0x14] sm:$0xf]
  %v42 = vld [vmem:[%s1 + $0x18] sm:$0xf]
  %v43 = vld [vmem:[%s1 + $0x1c] sm:$0xf]
  %v44 = vld [vmem:[%s1 + $0x20] sm:$0xf]
  %v45 = vld [vmem:[%s1 + $0x24] sm:$0xf]
  %v46 = vld [vmem:[%s1 + $0x28] sm:$0xf]
  %v47 = vld [vmem:[%s1 + $0x2c] sm:$0xf]
  %v48 = vld [vmem:[%s1 + $0x30] sm:$0xf]
  %v49 = vld [vmem:[%s1 + $0x34] sm:$0xf]
  %v50 = vld [vmem:[%s1 + $0x38] sm:$0xf]
  %v51 = vld [vmem:[%s1 + $0x3c] sm:$0xf]
  %v52 = vld [vmem:[%s2] sm:$0x1]
  %v54 = vlaneseq
  %v55 = vshrl.u32 %v54, 7
  %v56 = vsub.s32 0, %v55
  %v57 = vrot.slane %v52, %v56
  %v80 = vunpack.c.l.b16 %v15
  %v81 = vunpack.c.l.b16 %v16
  %v82 = vunpack.c.l.b16 %v17
  %v83 = vunpack.c.l.b16 %v18
  %v84 = vunpack.c.l.b16 %v19
  %v85 = vunpack.c.l.b16 %v20
  %v86 = vunpack.c.l.b16 %v21
  %v87 = vunpack.c.l.b16 %v22
  %v88 = vunpack.c.l.b16 %v23
  %v89 = vunpack.c.l.b16 %v24
  %v90 = vunpack.c.l.b16 %v25
  %v91 = vunpack.c.l.b16 %v26
  %v92 = vunpack.c.l.b16 %v27
  %v93 = vunpack.c.l.b16 %v28
  %v94 = vunpack.c.l.b16 %v29
  %v95 = vunpack.c.l.b16 %v30
  %v96 = vunpack.c.l.b16 %v31
  %v97 = vunpack.c.l.b16 %v32
  %v98 = vunpack.c.l.b16 %v33
  %v99 = vunpack.c.l.b16 %v34
  %v100 = vunpack.c.l.b16 %v35
  %v101 = vpack.c.b16 %v81, %v80
  %v102 = vpack.c.b16 %v83, %v82
  %v103 = vpack.c.b16 %v85, %v84
  %v104 = vpack.c.b16 %v87, %v86
  %v105 = vpack.c.b16 %v89, %v88
  %v106 = vpack.c.b16 %v91, %v90
  %v107 = vpack.c.b16 %v93, %v92
  %v108 = vpack.c.b16 %v95, %v94
  %v109 = vpack.c.b16 %v97, %v96
  %v110 = vpack.c.b16 %v99, %v98
  %v111 = vpack.c.b16 %v100, %v100
  %v139 = vunpack.c.l.b16 %v36
  %v140 = vunpack.c.l.b16 %v37
  %v141 = vunpack.c.l.b16 %v38
  %v142 = vunpack.c.l.b16 %v39
  %v143 = vunpack.c.l.b16 %v40
  %v144 = vunpack.c.l.b16 %v41
  %v145 = vunpack.c.l.b16 %v42
  %v146 = vunpack.c.l.b16 %v43
  %v147 = vunpack.c.l.b16 %v44
  %v148 = vunpack.c.l.b16 %v45
  %v149 = vunpack.c.l.b16 %v46
  %v150 = vunpack.c.l.b16 %v47
  %v151 = vunpack.c.l.b16 %v48
  %v152 = vunpack.c.l.b16 %v49
  %v153 = vunpack.c.l.b16 %v50
  %v154 = vunpack.c.l.b16 %v51
  %v155 = vpack.c.b16 %v140, %v139
  %v156 = vpack.c.b16 %v142, %v141
  %v157 = vpack.c.b16 %v144, %v143
  %v158 = vpack.c.b16 %v146, %v145
  %v159 = vpack.c.b16 %v148, %v147
  %v160 = vpack.c.b16 %v150, %v149
  %v161 = vpack.c.b16 %v152, %v151
  %v162 = vpack.c.b16 %v154, %v153
  %171 = vmatprep.subr.bf16.mxu0 0
  %172 = vmatpush1.bf16.msra.mxu0 %v155
  %173 = vmatprep.subr.bf16.mxu0 0
  %174 = vmatpush1.bf16.msra.mxu0 %v156
  %175 = vmatprep.subr.bf16.mxu0 0
  %176 = vmatpush1.bf16.msra.mxu0 %v157
  %177 = vmatprep.subr.bf16.mxu0 0
  %178 = vmatpush1.bf16.msra.mxu0 %v158
  %179 = vmatprep.subr.bf16.mxu0 0
  %180 = vmatpush1.bf16.msra.mxu0 %v159
  %181 = vmatprep.subr.bf16.mxu0 0
  %182 = vmatpush1.bf16.msra.mxu0 %v160
  %183 = vmatprep.subr.bf16.mxu0 0
  %184 = vmatpush1.bf16.msra.mxu0 %v161
  %185 = vmatprep.subr.bf16.mxu0 0
  %186 = vmatpush1.bf16.msra.mxu0 %v162
  %187 = vmatprep.subr.bf16.mxu0 0
  %188 = vmatpush1.bf16.msra.mxu0 0
  %189 = vmatprep.subr.bf16.mxu0 0
  %190 = vmatpush1.bf16.msra.mxu0 0
  %191 = vmatprep.subr.bf16.mxu0 0
  %192 = vmatpush1.bf16.msra.mxu0 0
  %193 = vmatprep.subr.bf16.mxu0 0
  %194 = vmatpush1.bf16.msra.mxu0 0
  %195 = vmatprep.subr.bf16.mxu0 0
  %196 = vmatpush1.bf16.msra.mxu0 0
  %197 = vmatprep.subr.bf16.mxu0 0
  %198 = vmatpush1.bf16.msra.mxu0 0
  %199 = vmatprep.subr.bf16.mxu0 0
  %200 = vmatpush1.bf16.msra.mxu0 0
  %201 = vmatprep.subr.bf16.mxu0 0
  %202 = vmatpush1.bf16.msra.mxu0 0
  %203 = vmatprep.mubr.bf16.mxu0 0
  %204 = vmatmul.mubr.bf16.gmra.mrb[0].mxu0 %v101
  %v205 = vpop.f32.mrb[0].mxu0
  %v206 = vadd.f32 %v57, %v205
  %v207 = vpop.f32.mrb[0].mxu0
  %v208 = vpop.f32.mrb[0].mxu0
  %v209 = vadd.f32 %v57, %v208
  %v210 = vpop.f32.mrb[0].mxu0
  %211 = vmatprep.mubr.bf16.mxu0 0
  %212 = vmatmul.mubr.bf16.gmra.mrb[0].mxu0 %v102
  %v213 = vpop.f32.mrb[0].mxu0
  %v214 = vadd.f32 %v57, %v213
  %v215 = vpop.f32.mrb[0].mxu0
  %v216 = vpop.f32.mrb[0].mxu0
  %v217 = vadd.f32 %v57, %v216
  %v218 = vpop.f32.mrb[0].mxu0
  %219 = vmatprep.mubr.bf16.mxu0 0
  %220 = vmatmul.mubr.bf16.gmra.mrb[0].mxu0 %v103
  %v221 = vpop.f32.mrb[0].mxu0
  %v222 = vadd.f32 %v57, %v221
  %v223 = vpop.f32.mrb[0].mxu0
  %v224 = vpop.f32.mrb[0].mxu0
  %v225 = vadd.f32 %v57, %v224
  %v226 = vpop.f32.mrb[0].mxu0
  %227 = vmatprep.mubr.bf16.mxu0 0
  %228 = vmatmul.mubr.bf16.gmra.mrb[0].mxu0 %v104
  %v229 = vpop.f32.mrb[0].mxu0
  %v230 = vadd.f32 %v57, %v229
  %v231 = vpop.f32.mrb[0].mxu0
  %v232 = vpop.f32.mrb[0].mxu0
  %v233 = vadd.f32 %v57, %v232
  %v234 = vpop.f32.mrb[0].mxu0
  %235 = vmatprep.mubr.bf16.mxu0 0
  %236 = vmatmul.mubr.bf16.gmra.mrb[0].mxu0 %v105
  %v237 = vpop.f32.mrb[0].mxu0
  %v238 = vadd.f32 %v57, %v237
  %v239 = vpop.f32.mrb[0].mxu0
  %v240 = vpop.f32.mrb[0].mxu0
  %v241 = vadd.f32 %v57, %v240
  %v242 = vpop.f32.mrb[0].mxu0
  %243 = vmatprep.mubr.bf16.mxu0 0
  %244 = vmatmul.mubr.bf16.gmra.mrb[0].mxu0 %v106
  %v245 = vpop.f32.mrb[0].mxu0
  %v246 = vadd.f32 %v57, %v245
  %v247 = vpop.f32.mrb[0].mxu0
  %v248 = vpop.f32.mrb[0].mxu0
  %v249 = vadd.f32 %v57, %v248
  %v250 = vpop.f32.mrb[0].mxu0
  %251 = vmatprep.mubr.bf16.mxu0 0
  %252 = vmatmul.mubr.bf16.gmra.mrb[0].mxu0 %v107
  %v253 = vpop.f32.mrb[0].mxu0
  %v254 = vadd.f32 %v57, %v253
  %v255 = vpop.f32.mrb[0].mxu0
  %v256 = vpop.f32.mrb[0].mxu0
  %v257 = vadd.f32 %v57, %v256
  %v258 = vpop.f32.mrb[0].mxu0
  %259 = vmatprep.mubr.bf16.mxu0 0
  %260 = vmatmul.mubr.bf16.gmra.mrb[0].mxu0 %v108
  %v261 = vpop.f32.mrb[0].mxu0
  %v262 = vadd.f32 %v57, %v261
  %v263 = vpop.f32.mrb[0].mxu0
  %v264 = vpop.f32.mrb[0].mxu0
  %v265 = vadd.f32 %v57, %v264
  %v266 = vpop.f32.mrb[0].mxu0
  %267 = vmatprep.mubr.bf16.mxu0 0
  %268 = vmatmul.mubr.bf16.gmra.mrb[0].mxu0 %v109
  %v269 = vpop.f32.mrb[0].mxu0
  %v270 = vadd.f32 %v57, %v269
  %v271 = vpop.f32.mrb[0].mxu0
  %v272 = vpop.f32.mrb[0].mxu0
  %v273 = vadd.f32 %v57, %v272
  %v274 = vpop.f32.mrb[0].mxu0
  %275 = vmatprep.mubr.bf16.mxu0 0
  %276 = vmatmul.mubr.bf16.gmra.mrb[0].mxu0 %v110
  %v277 = vpop.f32.mrb[0].mxu0
  %v278 = vadd.f32 %v57, %v277
  %v279 = vpop.f32.mrb[0].mxu0
  %v280 = vpop.f32.mrb[0].mxu0
  %v281 = vadd.f32 %v57, %v280
  %v282 = vpop.f32.mrb[0].mxu0
  %283 = vmatprep.mubr.bf16.mxu0 0
  %284 = vmatmul.mubr.bf16.gmra.mrb[0].mxu0 %v111
  %v285 = vpop.f32.mrb[0].mxu0
  %v286 = vadd.f32 %v57, %v285
  %v287 = vpop.f32.mrb[0].mxu0
  %v288 = vpop.f32.mrb[0].mxu0
  %v289 = vpop.f32.mrb[0].mxu0
  %290 = vdwg.mxu0
  %vm291 = vcmp.ge.f32.partialorder %v206, 0.0
  %vm292 = vcmp.ge.f32.partialorder %v209, 0.0
  %vm293 = vcmp.ge.f32.partialorder %v214, 0.0
  %vm294 = vcmp.ge.f32.partialorder %v217, 0.0
  %vm295 = vcmp.ge.f32.partialorder %v222, 0.0
  %vm296 = vcmp.ge.f32.partialorder %v225, 0.0
  %vm297 = vcmp.ge.f32.partialorder %v230, 0.0
  %vm298 = vcmp.ge.f32.partialorder %v233, 0.0
  %vm299 = vcmp.ge.f32.partialorder %v238, 0.0
  %vm300 = vcmp.ge.f32.partialorder %v241, 0.0
  %vm301 = vcmp.ge.f32.partialorder %v246, 0.0
  %vm302 = vcmp.ge.f32.partialorder %v249, 0.0
  %vm303 = vcmp.ge.f32.partialorder %v254, 0.0
  %vm304 = vcmp.ge.f32.partialorder %v257, 0.0
  %vm305 = vcmp.ge.f32.partialorder %v262, 0.0
  %vm306 = vcmp.ge.f32.partialorder %v265, 0.0
  %vm307 = vcmp.ge.f32.partialorder %v270, 0.0
  %vm308 = vcmp.ge.f32.partialorder %v273, 0.0
  %vm309 = vcmp.ge.f32.partialorder %v278, 0.0
  %vm310 = vcmp.ge.f32.partialorder %v281, 0.0
  %vm311 = vcmp.ge.f32.partialorder %v286, 0.0
  %v312 = vmul.f32 %v206, 0.2
  %v313 = vmul.f32 %v209, 0.2
  %v314 = vmul.f32 %v214, 0.2
  %v315 = vmul.f32 %v217, 0.2
  %v316 = vmul.f32 %v222, 0.2
  %v317 = vmul.f32 %v225, 0.2
  %v318 = vmul.f32 %v230, 0.2
  %v319 = vmul.f32 %v233, 0.2
  %v320 = vmul.f32 %v238, 0.2
  %v321 = vmul.f32 %v241, 0.2
  %v322 = vmul.f32 %v246, 0.2
  %v323 = vmul.f32 %v249, 0.2
  %v324 = vmul.f32 %v254, 0.2
  %v325 = vmul.f32 %v257, 0.2
  %v326 = vmul.f32 %v262, 0.2
  %v327 = vmul.f32 %v265, 0.2
  %v328 = vmul.f32 %v270, 0.2
  %v329 = vmul.f32 %v273, 0.2
  %v330 = vmul.f32 %v278, 0.2
  %v331 = vmul.f32 %v281, 0.2
  %v332 = vmul.f32 %v286, 0.2
  %v333 = vsel %vm291, %v206, %v312
  %v334 = vsel %vm292, %v209, %v313
  %v335 = vsel %vm293, %v214, %v314
  %v336 = vsel %vm294, %v217, %v315
  %v337 = vsel %vm295, %v222, %v316
  %v338 = vsel %vm296, %v225, %v317
  %v339 = vsel %vm297, %v230, %v318
  %v340 = vsel %vm298, %v233, %v319
  %v341 = vsel %vm299, %v238, %v320
  %v342 = vsel %vm300, %v241, %v321
  %v343 = vsel %vm301, %v246, %v322
  %v344 = vsel %vm302, %v249, %v323
  %v345 = vsel %vm303, %v254, %v324
  %v346 = vsel %vm304, %v257, %v325
  %v347 = vsel %vm305, %v262, %v326
  %v348 = vsel %vm306, %v265, %v327
  %v349 = vsel %vm307, %v270, %v328
  %v350 = vsel %vm308, %v273, %v329
  %v351 = vsel %vm309, %v278, %v330
  %v352 = vsel %vm310, %v281, %v331
  %v353 = vsel %vm311, %v286, %v332
  %v354 = vpack.c.bf16 %v334, %v333
  %v355 = vpack.c.bf16 %v336, %v335
  %v356 = vpack.c.bf16 %v338, %v337
  %v357 = vpack.c.bf16 %v340, %v339
  %v358 = vpack.c.bf16 %v342, %v341
  %v359 = vpack.c.bf16 %v344, %v343
  %v360 = vpack.c.bf16 %v346, %v345
  %v361 = vpack.c.bf16 %v348, %v347
  %v362 = vpack.c.bf16 %v350, %v349
  %v363 = vpack.c.bf16 %v352, %v351
  %v364 = vpack.c.bf16 %v353, %v353
  %v376 = vunpack.c.l.b16 %v354
  %v377 = vunpack.c.h.b16 %v354
  %v378 = vunpack.c.l.b16 %v355
  %v379 = vunpack.c.h.b16 %v355
  %v380 = vunpack.c.l.b16 %v356
  %v381 = vunpack.c.h.b16 %v356
  %v382 = vunpack.c.l.b16 %v357
  %v383 = vunpack.c.h.b16 %v357
  %v384 = vunpack.c.l.b16 %v358
  %v385 = vunpack.c.h.b16 %v358
  %v386 = vunpack.c.l.b16 %v359
  %v387 = vunpack.c.h.b16 %v359
  %v388 = vunpack.c.l.b16 %v360
  %v389 = vunpack.c.h.b16 %v360
  %v390 = vunpack.c.l.b16 %v361
  %v391 = vunpack.c.h.b16 %v361
  %v392 = vunpack.c.l.b16 %v362
  %v393 = vunpack.c.h.b16 %v362
  %v394 = vunpack.c.l.b16 %v363
  %v395 = vunpack.c.h.b16 %v363
  %v396 = vunpack.c.l.b16 %v364
  %v397 = vpack.c.b16 %v376, %v376
  %v398 = vpack.c.b16 %v377, %v377
  %v399 = vpack.c.b16 %v378, %v378
  %v400 = vpack.c.b16 %v379, %v379
  %v401 = vpack.c.b16 %v380, %v380
  %v402 = vpack.c.b16 %v381, %v381
  %v403 = vpack.c.b16 %v382, %v382
  %v404 = vpack.c.b16 %v383, %v383
  %v405 = vpack.c.b16 %v384, %v384
  %v406 = vpack.c.b16 %v385, %v385
  %v407 = vpack.c.b16 %v386, %v386
  %v408 = vpack.c.b16 %v387, %v387
  %v409 = vpack.c.b16 %v388, %v388
  %v410 = vpack.c.b16 %v389, %v389
  %v411 = vpack.c.b16 %v390, %v390
  %v412 = vpack.c.b16 %v391, %v391
  %v413 = vpack.c.b16 %v392, %v392
  %v414 = vpack.c.b16 %v393, %v393
  %v415 = vpack.c.b16 %v394, %v394
  %v416 = vpack.c.b16 %v395, %v395
  %v417 = vpack.c.b16 %v396, %v396
  %439 = vst [vmem:[%s3] sm:$0xf] %v397
  %440 = vst [vmem:[%s3 + $0x4] sm:$0xf] %v398
  %441 = vst [vmem:[%s3 + $0x8] sm:$0xf] %v399
  %442 = vst [vmem:[%s3 + $0xc] sm:$0xf] %v400
  %443 = vst [vmem:[%s3 + $0x10] sm:$0xf] %v401
  %444 = vst [vmem:[%s3 + $0x14] sm:$0xf] %v402
  %445 = vst [vmem:[%s3 + $0x18] sm:$0xf] %v403
  %446 = vst [vmem:[%s3 + $0x1c] sm:$0xf] %v404
  %447 = vst [vmem:[%s3 + $0x20] sm:$0xf] %v405
  %448 = vst [vmem:[%s3 + $0x24] sm:$0xf] %v406
  %449 = vst [vmem:[%s3 + $0x28] sm:$0xf] %v407
  %450 = vst [vmem:[%s3 + $0x2c] sm:$0xf] %v408
  %451 = vst [vmem:[%s3 + $0x30] sm:$0xf] %v409
  %452 = vst [vmem:[%s3 + $0x34] sm:$0xf] %v410
  %453 = vst [vmem:[%s3 + $0x38] sm:$0xf] %v411
  %454 = vst [vmem:[%s3 + $0x3c] sm:$0xf] %v412
  %455 = vst [vmem:[%s3 + $0x40] sm:$0xf] %v413
  %456 = vst [vmem:[%s3 + $0x44] sm:$0xf] %v414
  %457 = vst [vmem:[%s3 + $0x48] sm:$0xf] %v415
  %458 = vst [vmem:[%s3 + $0x4c] sm:$0xf] %v416
  %459 = vst [vmem:[%s3 + $0x50] sm:$0xf] %v417
  // Predicated region
  $region14: #{_lambda_.8} parent=0 // pred_check
    _
  $region15: #{_lambda_.8} parent=0 // pred_check_branch
    %461 = sbr.rel (0) target = $region17
  $region16: #{_lambda_.8} parent=0 // pred_region
    _
  $region17: #{_lambda_.8} parent=0 // pred_fallthru
    _
  // Predicated region
  $region18: #{_lambda_.8} parent=0 // pred_check
    _
  $region19: #{_lambda_.8} parent=0 // pred_check_branch
    %463 = sbr.rel (0) target = $region21
  $region20: #{_lambda_.8} parent=0 // pred_region
    _
  $region21: #{_lambda_.8} parent=0 // pred_fallthru
    _

// kernel: _lambda_.9
$region0: #{_lambda_.9}
  #allocation0 [shape = 'u32[]', space=smem, size = 0x4, offset = 0x4, fixed_abs, tag = 'smem constant byte address 0x4 - core index']
  #allocation1 [shape = 'u32[144,128]{1,0:T(1,128)}', space=vmem, size = 0x12000, scoped, tag = 'internal scratch']
  %s0 = inlined_call_operand.vmem [shape: bf16[56,128], index: 0, kind: input, shape index: {}]
  %s1 = inlined_call_operand.vmem [shape: bf16[128,128], index: 1, kind: input, shape index: {}]
  %s2 = inlined_call_operand.vmem [shape: f32[1,128], index: 2, kind: input, shape index: {}]
  %s3 = inlined_call_operand.vmem [shape: bf16[56,128], index: 3, kind: output, shape index: {0}]
  %s4 = inlined_call_operand.vmem [shape: f32[1,2,128], index: 4, kind: output, shape index: {1}]
  %5 = xla_tuple %s3, %s4
  %s6 = sld [smem:[#allocation0]]
  $region30: #{_lambda_.9} parent=0
    _
  %s8 = ssub.s32 1, %s6
  %s9 = scalar_select 0, %s8, %s6
  // Predicated region
  $region2: #{_lambda_.9} parent=0 // pred_check
    _
  $region3: #{_lambda_.9} parent=0 // pred_check_branch
    %11 = sbr.rel (0) target = $region5
  $region4: #{_lambda_.9} parent=0 // pred_region
    _
  $region5: #{_lambda_.9} parent=0 // pred_fallthru
    _
  // Predicated region
  $region6: #{_lambda_.9} parent=0 // pred_check
    _
  $region7: #{_lambda_.9} parent=0 // pred_check_branch
    %13 = sbr.rel (0) target = $region9
  $region8: #{_lambda_.9} parent=0 // pred_region
    _
  $region9: #{_lambda_.9} parent=0 // pred_fallthru
    _
  // Predicated region
  $region10: #{_lambda_.9} parent=0 // pred_check
    _
  $region11: #{_lambda_.9} parent=0 // pred_check_branch
    %15 = sbr.rel (0) target = $region13
  $region12: #{_lambda_.9} parent=0 // pred_region
    _
  $region13: #{_lambda_.9} parent=0 // pred_fallthru
    _
  %v17 = vld [vmem:[%s0] sm:$0xf]
  %v18 = vld [vmem:[%s0 + $0x4] sm:$0xf]
  %v19 = vld [vmem:[%s0 + $0x8] sm:$0xf]
  %v20 = vld [vmem:[%s0 + $0xc] sm:$0xf]
  %v21 = vld [vmem:[%s0 + $0x10] sm:$0xf]
  %v22 = vld [vmem:[%s0 + $0x14] sm:$0xf]
  %v23 = vld [vmem:[%s0 + $0x18] sm:$0xf]
  %v24 = vld [vmem:[%s1] sm:$0xf]
  %v25 = vld [vmem:[%s1 + $0x4] sm:$0xf]
  %v26 = vld [vmem:[%s1 + $0x8] sm:$0xf]
  %v27 = vld [vmem:[%s1 + $0xc] sm:$0xf]
  %v28 = vld [vmem:[%s1 + $0x10] sm:$0xf]
  %v29 = vld [vmem:[%s1 + $0x14] sm:$0xf]
  %v30 = vld [vmem:[%s1 + $0x18] sm:$0xf]
  %v31 = vld [vmem:[%s1 + $0x1c] sm:$0xf]
  %v32 = vld [vmem:[%s1 + $0x20] sm:$0xf]
  %v33 = vld [vmem:[%s1 + $0x24] sm:$0xf]
  %v34 = vld [vmem:[%s1 + $0x28] sm:$0xf]
  %v35 = vld [vmem:[%s1 + $0x2c] sm:$0xf]
  %v36 = vld [vmem:[%s1 + $0x30] sm:$0xf]
  %v37 = vld [vmem:[%s1 + $0x34] sm:$0xf]
  %v38 = vld [vmem:[%s1 + $0x38] sm:$0xf]
  %v39 = vld [vmem:[%s1 + $0x3c] sm:$0xf]
  %v40 = vld [vmem:[%s2] sm:$0x1]
  %v42 = vlaneseq
  %v43 = vshrl.u32 %v42, 7
  %v44 = vsub.s32 0, %v43
  %v45 = vrot.slane %v40, %v44
  %v54 = vunpack.c.l.b16 %v17
  %v55 = vunpack.c.l.b16 %v18
  %v56 = vunpack.c.l.b16 %v19
  %v57 = vunpack.c.l.b16 %v20
  %v58 = vunpack.c.l.b16 %v21
  %v59 = vunpack.c.l.b16 %v22
  %v60 = vunpack.c.l.b16 %v23
  %v61 = vpack.c.b16 %v55, %v54
  %v62 = vpack.c.b16 %v57, %v56
  %v63 = vpack.c.b16 %v59, %v58
  %v64 = vpack.c.b16 %v60, %v60
  %v85 = vunpack.c.l.b16 %v24
  %v86 = vunpack.c.l.b16 %v25
  %v87 = vunpack.c.l.b16 %v26
  %v88 = vunpack.c.l.b16 %v27
  %v89 = vunpack.c.l.b16 %v28
  %v90 = vunpack.c.l.b16 %v29
  %v91 = vunpack.c.l.b16 %v30
  %v92 = vunpack.c.l.b16 %v31
  %v93 = vunpack.c.l.b16 %v32
  %v94 = vunpack.c.l.b16 %v33
  %v95 = vunpack.c.l.b16 %v34
  %v96 = vunpack.c.l.b16 %v35
  %v97 = vunpack.c.l.b16 %v36
  %v98 = vunpack.c.l.b16 %v37
  %v99 = vunpack.c.l.b16 %v38
  %v100 = vunpack.c.l.b16 %v39
  %v101 = vpack.c.b16 %v86, %v85
  %v102 = vpack.c.b16 %v88, %v87
  %v103 = vpack.c.b16 %v90, %v89
  %v104 = vpack.c.b16 %v92, %v91
  %v105 = vpack.c.b16 %v94, %v93
  %v106 = vpack.c.b16 %v96, %v95
  %v107 = vpack.c.b16 %v98, %v97
  %v108 = vpack.c.b16 %v100, %v99
  %117 = vmatprep.subr.bf16.mxu0 0
  %118 = vmatpush1.bf16.msra.mxu0 %v101
  %119 = vmatprep.subr.bf16.mxu0 0
  %120 = vmatpush1.bf16.msra.mxu0 %v102
  %121 = vmatprep.subr.bf16.mxu0 0
  %122 = vmatpush1.bf16.msra.mxu0 %v103
  %123 = vmatprep.subr.bf16.mxu0 0
  %124 = vmatpush1.bf16.msra.mxu0 %v104
  %125 = vmatprep.subr.bf16.mxu0 0
  %126 = vmatpush1.bf16.msra.mxu0 %v105
  %127 = vmatprep.subr.bf16.mxu0 0
  %128 = vmatpush1.bf16.msra.mxu0 %v106
  %129 = vmatprep.subr.bf16.mxu0 0
  %130 = vmatpush1.bf16.msra.mxu0 %v107
  %131 = vmatprep.subr.bf16.mxu0 0
  %132 = vmatpush1.bf16.msra.mxu0 %v108
  %133 = vmatprep.subr.bf16.mxu0 0
  %134 = vmatpush1.bf16.msra.mxu0 0
  %135 = vmatprep.subr.bf16.mxu0 0
  %136 = vmatpush1.bf16.msra.mxu0 0
  %137 = vmatprep.subr.bf16.mxu0 0
  %138 = vmatpush1.bf16.msra.mxu0 0
  %139 = vmatprep.subr.bf16.mxu0 0
  %140 = vmatpush1.bf16.msra.mxu0 0
  %141 = vmatprep.subr.bf16.mxu0 0
  %142 = vmatpush1.bf16.msra.mxu0 0
  %143 = vmatprep.subr.bf16.mxu0 0
  %144 = vmatpush1.bf16.msra.mxu0 0
  %145 = vmatprep.subr.bf16.mxu0 0
  %146 = vmatpush1.bf16.msra.mxu0 0
  %147 = vmatprep.subr.bf16.mxu0 0
  %148 = vmatpush1.bf16.msra.mxu0 0
  %149 = vmatprep.mubr.bf16.mxu0 0
  %150 = vmatmul.mubr.bf16.gmra.mrb[0].mxu0 %v61
  %v151 = vpop.f32.mrb[0].mxu0
  %v152 = vadd.f32 %v45, %v151
  %v153 = vpop.f32.mrb[0].mxu0
  %v154 = vpop.f32.mrb[0].mxu0
  %v155 = vadd.f32 %v45, %v154
  %v156 = vpop.f32.mrb[0].mxu0
  %157 = vmatprep.mubr.bf16.mxu0 0
  %158 = vmatmul.mubr.bf16.gmra.mrb[0].mxu0 %v62
  %v159 = vpop.f32.mrb[0].mxu0
  %v160 = vadd.f32 %v45, %v159
  %v161 = vpop.f32.mrb[0].mxu0
  %v162 = vpop.f32.mrb[0].mxu0
  %v163 = vadd.f32 %v45, %v162
  %v164 = vpop.f32.mrb[0].mxu0
  %165 = vmatprep.mubr.bf16.mxu0 0
  %166 = vmatmul.mubr.bf16.gmra.mrb[0].mxu0 %v63
  %v167 = vpop.f32.mrb[0].mxu0
  %v168 = vadd.f32 %v45, %v167
  %v169 = vpop.f32.mrb[0].mxu0
  %v170 = vpop.f32.mrb[0].mxu0
  %v171 = vadd.f32 %v45, %v170
  %v172 = vpop.f32.mrb[0].mxu0
  %173 = vmatprep.mubr.bf16.mxu0 0
  %174 = vmatmul.mubr.bf16.gmra.mrb[0].mxu0 %v64
  %v175 = vpop.f32.mrb[0].mxu0
  %v176 = vadd.f32 %v45, %v175
  %v177 = vpop.f32.mrb[0].mxu0
  %v178 = vpop.f32.mrb[0].mxu0
  %v179 = vpop.f32.mrb[0].mxu0
  %180 = vdwg.mxu0
  %s181 = smul.u32 0, 56
  %v182 = vlaneseq
  %v183 = vshrl.u32 %v182, 7
  %v184 = vadd.s32 %v183, 8
  %v185 = vadd.s32 %v183, 16
  %v186 = vadd.s32 %v183, 24
  %v187 = vadd.s32 %v183, 32
  %v188 = vadd.s32 %v183, 40
  %v189 = vadd.s32 %v183, 48
  %v190 = vstv %s181
  %v191 = vadd.s32 %v190, %v183
  %v192 = vadd.s32 %v190, %v184
  %v193 = vadd.s32 %v190, %v185
  %v194 = vadd.s32 %v190, %v186
  %v195 = vadd.s32 %v190, %v187
  %v196 = vadd.s32 %v190, %v188
  %v197 = vadd.s32 %v190, %v189
  %vm198 = vcmp.lt.s32.totalorder %v191, 50
  %vm199 = vcmp.lt.s32.totalorder %v192, 50
  %vm200 = vcmp.lt.s32.totalorder %v193, 50
  %vm201 = vcmp.lt.s32.totalorder %v194, 50
  %vm202 = vcmp.lt.s32.totalorder %v195, 50
  %vm203 = vcmp.lt.s32.totalorder %v196, 50
  %vm204 = vcmp.lt.s32.totalorder %v197, 50
  %v205 = vsel %vm198, 1, 0
  %v206 = vsel %vm199, 1, 0
  %v207 = vsel %vm200, 1, 0
  %v208 = vsel %vm201, 1, 0
  %v209 = vsel %vm202, 1, 0
  %v210 = vsel %vm203, 1, 0
  %v211 = vsel %vm204, 1, 0
  %vm212 = vcmp.eq.s32.totalorder %v205, 1
  %vm213 = vcmp.eq.s32.totalorder %v206, 1
  %vm214 = vcmp.eq.s32.totalorder %v207, 1
  %vm215 = vcmp.eq.s32.totalorder %v208, 1
  %vm216 = vcmp.eq.s32.totalorder %v209, 1
  %vm217 = vcmp.eq.s32.totalorder %v210, 1
  %vm218 = vcmp.eq.s32.totalorder %v211, 1
  %v219 = vsel %vm212, %v152, 0.0
  %v220 = vsel %vm213, %v155, 0.0
  %v221 = vsel %vm214, %v160, 0.0
  %v222 = vsel %vm215, %v163, 0.0
  %v223 = vsel %vm216, %v168, 0.0
  %v224 = vsel %vm217, %v171, 0.0
  %v225 = vsel %vm218, %v176, 0.0
  %v226 = vadd.f32 %v219, %v220
  %v227 = vadd.f32 %v226, %v221
  %v228 = vadd.f32 %v227, %v222
  %v229 = vadd.f32 %v228, %v223
  %v230 = vadd.f32 %v229, %v224
  %v231 = vadd.f32 %v230, %v225
  %v232 = vrot.slane %v231, 4
  %v233 = vadd.f32 %v231, %v232
  %v234 = vrot.slane %v233, 2
  %v235 = vadd.f32 %v233, %v234
  %v236 = vrot.slane %v235, 1
  %v237 = vadd.f32 %v235, %v236
  %238 = vst [vmem:[%s4] sm:$0x1] %v237
  %v239 = vmul.f32 %v219, %v219
  %v240 = vmul.f32 %v220, %v220
  %v241 = vmul.f32 %v221, %v221
  %v242 = vmul.f32 %v222, %v222
  %v243 = vmul.f32 %v223, %v223
  %v244 = vmul.f32 %v224, %v224
  %v245 = vmul.f32 %v225, %v225
  %v246 = vadd.f32 %v239, %v240
  %v247 = vadd.f32 %v246, %v241
  %v248 = vadd.f32 %v247, %v242
  %v249 = vadd.f32 %v248, %v243
  %v250 = vadd.f32 %v249, %v244
  %v251 = vadd.f32 %v250, %v245
  %v252 = vrot.slane %v251, 4
  %v253 = vadd.f32 %v251, %v252
  %v254 = vrot.slane %v253, 2
  %v255 = vadd.f32 %v253, %v254
  %v256 = vrot.slane %v255, 1
  %v257 = vadd.f32 %v255, %v256
  %258 = vst [vmem:[%s4 + $0x1] sm:$0x1] %v257
  %v259 = vpack.c.bf16 %v155, %v152
  %v260 = vpack.c.bf16 %v163, %v160
  %v261 = vpack.c.bf16 %v171, %v168
  %v262 = vpack.c.bf16 %v176, %v176
  %v267 = vunpack.c.l.b16 %v259
  %v268 = vunpack.c.h.b16 %v259
  %v269 = vunpack.c.l.b16 %v260
  %v270 = vunpack.c.h.b16 %v260
  %v271 = vunpack.c.l.b16 %v261
  %v272 = vunpack.c.h.b16 %v261
  %v273 = vunpack.c.l.b16 %v262
  %v274 = vpack.c.b16 %v267, %v267
  %v275 = vpack.c.b16 %v268, %v268
  %v276 = vpack.c.b16 %v269, %v269
  %v277 = vpack.c.b16 %v270, %v270
  %v278 = vpack.c.b16 %v271, %v271
  %v279 = vpack.c.b16 %v272, %v272
  %v280 = vpack.c.b16 %v273, %v273
  %288 = vst [vmem:[%s3] sm:$0xf] %v274
  %289 = vst [vmem:[%s3 + $0x4] sm:$0xf] %v275
  %290 = vst [vmem:[%s3 + $0x8] sm:$0xf] %v276
  %291 = vst [vmem:[%s3 + $0xc] sm:$0xf] %v277
  %292 = vst [vmem:[%s3 + $0x10] sm:$0xf] %v278
  %293 = vst [vmem:[%s3 + $0x14] sm:$0xf] %v279
  %294 = vst [vmem:[%s3 + $0x18] sm:$0xf] %v280
  // Predicated region
  $region14: #{_lambda_.9} parent=0 // pred_check
    _
  $region15: #{_lambda_.9} parent=0 // pred_check_branch
    %296 = sbr.rel (0) target = $region17
  $region16: #{_lambda_.9} parent=0 // pred_region
    _
  $region17: #{_lambda_.9} parent=0 // pred_fallthru
    _
  // Predicated region
  $region18: #{_lambda_.9} parent=0 // pred_check
    _
  $region19: #{_lambda_.9} parent=0 // pred_check_branch
    %298 = sbr.rel (0) target = $region21
  $region20: #{_lambda_.9} parent=0 // pred_region
    _
  $region21: #{_lambda_.9} parent=0 // pred_fallthru
    _
  // Predicated region
  $region22: #{_lambda_.9} parent=0 // pred_check
    _
  $region23: #{_lambda_.9} parent=0 // pred_check_branch
    %300 = sbr.rel (0) target = $region25
  $region24: #{_lambda_.9} parent=0 // pred_region
    _
  $region25: #{_lambda_.9} parent=0 // pred_fallthru
    _
  // Predicated region
  $region26: #{_lambda_.9} parent=0 // pred_check
    _
  $region27: #{_lambda_.9} parent=0 // pred_check_branch
    %302 = sbr.rel (0) target = $region29
  $region28: #{_lambda_.9} parent=0 // pred_region
    _
  $region29: #{_lambda_.9} parent=0 // pred_fallthru
    _

// kernel: _lambda_.10
$region0: #{_lambda_.10}
  #allocation0 [shape = 'u32[]', space=smem, size = 0x4, offset = 0x4, fixed_abs, tag = 'smem constant byte address 0x4 - core index']
  #allocation1 [shape = 'u32[144,128]{1,0:T(1,128)}', space=vmem, size = 0x12000, scoped, tag = 'internal scratch']
  %s0 = inlined_call_operand.vmem [shape: bf16[56,128], index: 0, kind: input, shape index: {}]
  %s1 = inlined_call_operand.vmem [shape: f32[1,128], index: 1, kind: input, shape index: {}]
  %s2 = inlined_call_operand.vmem [shape: f32[1,128], index: 2, kind: input, shape index: {}]
  %s3 = inlined_call_operand.vmem [shape: bf16[56,128], index: 3, kind: output, shape index: {}]
  %s4 = sld [smem:[#allocation0]]
  $region22: #{_lambda_.10} parent=0
    _
  %s6 = ssub.s32 1, %s4
  %s7 = scalar_select 0, %s6, %s4
  // Predicated region
  $region2: #{_lambda_.10} parent=0 // pred_check
    _
  $region3: #{_lambda_.10} parent=0 // pred_check_branch
    %9 = sbr.rel (0) target = $region5
  $region4: #{_lambda_.10} parent=0 // pred_region
    _
  $region5: #{_lambda_.10} parent=0 // pred_fallthru
    _
  // Predicated region
  $region6: #{_lambda_.10} parent=0 // pred_check
    _
  $region7: #{_lambda_.10} parent=0 // pred_check_branch
    %11 = sbr.rel (0) target = $region9
  $region8: #{_lambda_.10} parent=0 // pred_region
    _
  $region9: #{_lambda_.10} parent=0 // pred_fallthru
    _
  // Predicated region
  $region10: #{_lambda_.10} parent=0 // pred_check
    _
  $region11: #{_lambda_.10} parent=0 // pred_check_branch
    %13 = sbr.rel (0) target = $region13
  $region12: #{_lambda_.10} parent=0 // pred_region
    _
  $region13: #{_lambda_.10} parent=0 // pred_fallthru
    _
  %v14 = vld [vmem:[%s0] sm:$0xf]
  %v15 = vld [vmem:[%s0 + $0x4] sm:$0xf]
  %v16 = vld [vmem:[%s0 + $0x8] sm:$0xf]
  %v17 = vld [vmem:[%s0 + $0xc] sm:$0xf]
  %v18 = vld [vmem:[%s0 + $0x10] sm:$0xf]
  %v19 = vld [vmem:[%s0 + $0x14] sm:$0xf]
  %v20 = vld [vmem:[%s0 + $0x18] sm:$0xf]
  %v21 = vunpack.c.l.bf16 %v14
  %v22 = vunpack.c.l.bf16 %v15
  %v23 = vunpack.c.l.bf16 %v16
  %v24 = vunpack.c.l.bf16 %v17
  %v25 = vunpack.c.l.bf16 %v18
  %v26 = vunpack.c.l.bf16 %v19
  %v27 = vunpack.c.l.bf16 %v20
  %v28 = vld [vmem:[%s1] sm:$0x1]
  %v30 = vlaneseq
  %v31 = vshrl.u32 %v30, 7
  %v32 = vsub.s32 0, %v31
  %v33 = vrot.slane %v28, %v32
  %v35 = vmul.f32 %v21, %v33
  %v36 = vmul.f32 %v22, %v33
  %v37 = vmul.f32 %v23, %v33
  %v38 = vmul.f32 %v24, %v33
  %v39 = vmul.f32 %v25, %v33
  %v40 = vmul.f32 %v26, %v33
  %v41 = vmul.f32 %v27, %v33
  %v42 = vld [vmem:[%s2] sm:$0x1]
  %v44 = vlaneseq
  %v45 = vshrl.u32 %v44, 7
  %v46 = vsub.s32 0, %v45
  %v47 = vrot.slane %v42, %v46
  %v49 = vadd.f32 %v35, %v47
  %v50 = vadd.f32 %v36, %v47
  %v51 = vadd.f32 %v37, %v47
  %v52 = vadd.f32 %v38, %v47
  %v53 = vadd.f32 %v39, %v47
  %v54 = vadd.f32 %v40, %v47
  %v55 = vadd.f32 %v41, %v47
  %vm56 = vcmp.ge.f32.partialorder %v49, 0.0
  %vm57 = vcmp.ge.f32.partialorder %v50, 0.0
  %vm58 = vcmp.ge.f32.partialorder %v51, 0.0
  %vm59 = vcmp.ge.f32.partialorder %v52, 0.0
  %vm60 = vcmp.ge.f32.partialorder %v53, 0.0
  %vm61 = vcmp.ge.f32.partialorder %v54, 0.0
  %vm62 = vcmp.ge.f32.partialorder %v55, 0.0
  %v63 = vmul.f32 %v49, 0.2
  %v64 = vmul.f32 %v50, 0.2
  %v65 = vmul.f32 %v51, 0.2
  %v66 = vmul.f32 %v52, 0.2
  %v67 = vmul.f32 %v53, 0.2
  %v68 = vmul.f32 %v54, 0.2
  %v69 = vmul.f32 %v55, 0.2
  %v70 = vsel %vm56, %v49, %v63
  %v71 = vsel %vm57, %v50, %v64
  %v72 = vsel %vm58, %v51, %v65
  %v73 = vsel %vm59, %v52, %v66
  %v74 = vsel %vm60, %v53, %v67
  %v75 = vsel %vm61, %v54, %v68
  %v76 = vsel %vm62, %v55, %v69
  %v77 = vpack.c.bf16 %v71, %v70
  %v78 = vpack.c.bf16 %v73, %v72
  %v79 = vpack.c.bf16 %v75, %v74
  %v80 = vpack.c.bf16 %v76, %v76
  %v85 = vunpack.c.l.b16 %v77
  %v86 = vunpack.c.h.b16 %v77
  %v87 = vunpack.c.l.b16 %v78
  %v88 = vunpack.c.h.b16 %v78
  %v89 = vunpack.c.l.b16 %v79
  %v90 = vunpack.c.h.b16 %v79
  %v91 = vunpack.c.l.b16 %v80
  %v92 = vpack.c.b16 %v85, %v85
  %v93 = vpack.c.b16 %v86, %v86
  %v94 = vpack.c.b16 %v87, %v87
  %v95 = vpack.c.b16 %v88, %v88
  %v96 = vpack.c.b16 %v89, %v89
  %v97 = vpack.c.b16 %v90, %v90
  %v98 = vpack.c.b16 %v91, %v91
  %106 = vst [vmem:[%s3] sm:$0xf] %v92
  %107 = vst [vmem:[%s3 + $0x4] sm:$0xf] %v93
  %108 = vst [vmem:[%s3 + $0x8] sm:$0xf] %v94
  %109 = vst [vmem:[%s3 + $0xc] sm:$0xf] %v95
  %110 = vst [vmem:[%s3 + $0x10] sm:$0xf] %v96
  %111 = vst [vmem:[%s3 + $0x14] sm:$0xf] %v97
  %112 = vst [vmem:[%s3 + $0x18] sm:$0xf] %v98
  // Predicated region
  $region14: #{_lambda_.10} parent=0 // pred_check
    _
  $region15: #{_lambda_.10} parent=0 // pred_check_branch
    %114 = sbr.rel (0) target = $region17
  $region16: #{_lambda_.10} parent=0 // pred_region
    _
  $region17: #{_lambda_.10} parent=0 // pred_fallthru
    _
  // Predicated region
  $region18: #{_lambda_.10} parent=0 // pred_check
    _
  $region19: #{_lambda_.10} parent=0 // pred_check_branch
    %116 = sbr.rel (0) target = $region21
  $region20: #{_lambda_.10} parent=0 // pred_region
    _
  $region21: #{_lambda_.10} parent=0 // pred_fallthru
    _

// kernel: _lambda_.11
$region0: #{_lambda_.11}
  #allocation0 [shape = 'u32[]', space=smem, size = 0x4, offset = 0x4, fixed_abs, tag = 'smem constant byte address 0x4 - core index']
  #allocation1 [shape = 'u32[144,128]{1,0:T(1,128)}', space=vmem, size = 0x12000, scoped, tag = 'internal scratch']
  %s0 = inlined_call_operand.vmem [shape: bf16[24,256], index: 0, kind: input, shape index: {}]
  %s1 = inlined_call_operand.vmem [shape: bf16[256,128], index: 1, kind: input, shape index: {}]
  %s2 = inlined_call_operand.vmem [shape: f32[1,128], index: 2, kind: input, shape index: {}]
  %s3 = inlined_call_operand.vmem [shape: bf16[24,128], index: 3, kind: output, shape index: {0}]
  %s4 = inlined_call_operand.vmem [shape: f32[1,2,128], index: 4, kind: output, shape index: {1}]
  %5 = xla_tuple %s3, %s4
  %s6 = sld [smem:[#allocation0]]
  $region30: #{_lambda_.11} parent=0
    _
  %s8 = ssub.s32 1, %s6
  %s9 = scalar_select 0, %s8, %s6
  // Predicated region
  $region2: #{_lambda_.11} parent=0 // pred_check
    _
  $region3: #{_lambda_.11} parent=0 // pred_check_branch
    %11 = sbr.rel (0) target = $region5
  $region4: #{_lambda_.11} parent=0 // pred_region
    _
  $region5: #{_lambda_.11} parent=0 // pred_fallthru
    _
  // Predicated region
  $region6: #{_lambda_.11} parent=0 // pred_check
    _
  $region7: #{_lambda_.11} parent=0 // pred_check_branch
    %13 = sbr.rel (0) target = $region9
  $region8: #{_lambda_.11} parent=0 // pred_region
    _
  $region9: #{_lambda_.11} parent=0 // pred_fallthru
    _
  // Predicated region
  $region10: #{_lambda_.11} parent=0 // pred_check
    _
  $region11: #{_lambda_.11} parent=0 // pred_check_branch
    %15 = sbr.rel (0) target = $region13
  $region12: #{_lambda_.11} parent=0 // pred_region
    _
  $region13: #{_lambda_.11} parent=0 // pred_fallthru
    _
  %v17 = vld [vmem:[%s0] sm:$0xff]
  %v18 = vld [vmem:[%s0 + $0x8] sm:$0xff]
  %v19 = vld [vmem:[%s0 + $0x10] sm:$0xff]
  %v20 = vld [vmem:[%s1] sm:$0xf]
  %v21 = vld [vmem:[%s1 + $0x4] sm:$0xf]
  %v22 = vld [vmem:[%s1 + $0x8] sm:$0xf]
  %v23 = vld [vmem:[%s1 + $0xc] sm:$0xf]
  %v24 = vld [vmem:[%s1 + $0x10] sm:$0xf]
  %v25 = vld [vmem:[%s1 + $0x14] sm:$0xf]
  %v26 = vld [vmem:[%s1 + $0x18] sm:$0xf]
  %v27 = vld [vmem:[%s1 + $0x1c] sm:$0xf]
  %v28 = vld [vmem:[%s1 + $0x20] sm:$0xf]
  %v29 = vld [vmem:[%s1 + $0x24] sm:$0xf]
  %v30 = vld [vmem:[%s1 + $0x28] sm:$0xf]
  %v31 = vld [vmem:[%s1 + $0x2c] sm:$0xf]
  %v32 = vld [vmem:[%s1 + $0x30] sm:$0xf]
  %v33 = vld [vmem:[%s1 + $0x34] sm:$0xf]
  %v34 = vld [vmem:[%s1 + $0x38] sm:$0xf]
  %v35 = vld [vmem:[%s1 + $0x3c] sm:$0xf]
  %v36 = vld [vmem:[%s1 + $0x40] sm:$0xf]
  %v37 = vld [vmem:[%s1 + $0x44] sm:$0xf]
  %v38 = vld [vmem:[%s1 + $0x48] sm:$0xf]
  %v39 = vld [vmem:[%s1 + $0x4c] sm:$0xf]
  %v40 = vld [vmem:[%s1 + $0x50] sm:$0xf]
  %v41 = vld [vmem:[%s1 + $0x54] sm:$0xf]
  %v42 = vld [vmem:[%s1 + $0x58] sm:$0xf]
  %v43 = vld [vmem:[%s1 + $0x5c] sm:$0xf]
  %v44 = vld [vmem:[%s1 + $0x60] sm:$0xf]
  %v45 = vld [vmem:[%s1 + $0x64] sm:$0xf]
  %v46 = vld [vmem:[%s1 + $0x68] sm:$0xf]
  %v47 = vld [vmem:[%s1 + $0x6c] sm:$0xf]
  %v48 = vld [vmem:[%s1 + $0x70] sm:$0xf]
  %v49 = vld [vmem:[%s1 + $0x74] sm:$0xf]
  %v50 = vld [vmem:[%s1 + $0x78] sm:$0xf]
  %v51 = vld [vmem:[%s1 + $0x7c] sm:$0xf]
  %v52 = vld [vmem:[%s2] sm:$0x1]
  %v54 = vlaneseq
  %v55 = vshrl.u32 %v54, 7
  %v56 = vsub.s32 0, %v55
  %v57 = vrot.slane %v52, %v56
  %v62 = vunpack.c.l.b16 %v17
  %v63 = vunpack.c.h.b16 %v17
  %v64 = vunpack.c.l.b16 %v18
  %v65 = vunpack.c.h.b16 %v18
  %v66 = vunpack.c.l.b16 %v19
  %v67 = vunpack.c.h.b16 %v19
  %v68 = vpack.c.b16 %v64, %v62
  %v69 = vpack.c.b16 %v65, %v63
  %v70 = vpack.c.b16 %v66, %v66
  %v71 = vpack.c.b16 %v67, %v67
  %v108 = vunpack.c.l.b16 %v20
  %v109 = vunpack.c.l.b16 %v21
  %v110 = vunpack.c.l.b16 %v22
  %v111 = vunpack.c.l.b16 %v23
  %v112 = vunpack.c.l.b16 %v24
  %v113 = vunpack.c.l.b16 %v25
  %v114 = vunpack.c.l.b16 %v26
  %v115 = vunpack.c.l.b16 %v27
  %v116 = vunpack.c.l.b16 %v28
  %v117 = vunpack.c.l.b16 %v29
  %v118 = vunpack.c.l.b16 %v30
  %v119 = vunpack.c.l.b16 %v31
  %v120 = vunpack.c.l.b16 %v32
  %v121 = vunpack.c.l.b16 %v33
  %v122 = vunpack.c.l.b16 %v34
  %v123 = vunpack.c.l.b16 %v35
  %v124 = vunpack.c.l.b16 %v36
  %v125 = vunpack.c.l.b16 %v37
  %v126 = vunpack.c.l.b16 %v38
  %v127 = vunpack.c.l.b16 %v39
  %v128 = vunpack.c.l.b16 %v40
  %v129 = vunpack.c.l.b16 %v41
  %v130 = vunpack.c.l.b16 %v42
  %v131 = vunpack.c.l.b16 %v43
  %v132 = vunpack.c.l.b16 %v44
  %v133 = vunpack.c.l.b16 %v45
  %v134 = vunpack.c.l.b16 %v46
  %v135 = vunpack.c.l.b16 %v47
  %v136 = vunpack.c.l.b16 %v48
  %v137 = vunpack.c.l.b16 %v49
  %v138 = vunpack.c.l.b16 %v50
  %v139 = vunpack.c.l.b16 %v51
  %v140 = vpack.c.b16 %v109, %v108
  %v141 = vpack.c.b16 %v111, %v110
  %v142 = vpack.c.b16 %v113, %v112
  %v143 = vpack.c.b16 %v115, %v114
  %v144 = vpack.c.b16 %v117, %v116
  %v145 = vpack.c.b16 %v119, %v118
  %v146 = vpack.c.b16 %v121, %v120
  %v147 = vpack.c.b16 %v123, %v122
  %v148 = vpack.c.b16 %v125, %v124
  %v149 = vpack.c.b16 %v127, %v126
  %v150 = vpack.c.b16 %v129, %v128
  %v151 = vpack.c.b16 %v131, %v130
  %v152 = vpack.c.b16 %v133, %v132
  %v153 = vpack.c.b16 %v135, %v134
  %v154 = vpack.c.b16 %v137, %v136
  %v155 = vpack.c.b16 %v139, %v138
  %172 = vmatprep.subr.bf16.mxu0 0
  %173 = vmatpush1.bf16.msra.mxu0 %v140
  %174 = vmatprep.subr.bf16.mxu0 0
  %175 = vmatpush1.bf16.msra.mxu0 %v141
  %176 = vmatprep.subr.bf16.mxu0 0
  %177 = vmatpush1.bf16.msra.mxu0 %v142
  %178 = vmatprep.subr.bf16.mxu0 0
  %179 = vmatpush1.bf16.msra.mxu0 %v143
  %180 = vmatprep.subr.bf16.mxu0 0
  %181 = vmatpush1.bf16.msra.mxu0 %v144
  %182 = vmatprep.subr.bf16.mxu0 0
  %183 = vmatpush1.bf16.msra.mxu0 %v145
  %184 = vmatprep.subr.bf16.mxu0 0
  %185 = vmatpush1.bf16.msra.mxu0 %v146
  %186 = vmatprep.subr.bf16.mxu0 0
  %187 = vmatpush1.bf16.msra.mxu0 %v147
  %188 = vmatprep.subr.bf16.mxu0 0
  %189 = vmatpush1.bf16.msra.mxu0 %v148
  %190 = vmatprep.subr.bf16.mxu0 0
  %191 = vmatpush1.bf16.msra.mxu0 %v149
  %192 = vmatprep.subr.bf16.mxu0 0
  %193 = vmatpush1.bf16.msra.mxu0 %v150
  %194 = vmatprep.subr.bf16.mxu0 0
  %195 = vmatpush1.bf16.msra.mxu0 %v151
  %196 = vmatprep.subr.bf16.mxu0 0
  %197 = vmatpush1.bf16.msra.mxu0 %v152
  %198 = vmatprep.subr.bf16.mxu0 0
  %199 = vmatpush1.bf16.msra.mxu0 %v153
  %200 = vmatprep.subr.bf16.mxu0 0
  %201 = vmatpush1.bf16.msra.mxu0 %v154
  %202 = vmatprep.subr.bf16.mxu0 0
  %203 = vmatpush1.bf16.msra.mxu0 %v155
  %204 = vmatprep.mubr.bf16.mxu0 %v69
  %205 = vmatmul.mubr.bf16.gmra.mrb[0].mxu0 %v68
  %v206 = vpop.f32.mrb[0].mxu0
  %v207 = vadd.f32 %v57, %v206
  %v208 = vpop.f32.mrb[0].mxu0
  %v209 = vpop.f32.mrb[0].mxu0
  %v210 = vadd.f32 %v57, %v209
  %v211 = vpop.f32.mrb[0].mxu0
  %212 = vmatprep.mubr.bf16.mxu0 %v71
  %213 = vmatmul.mubr.bf16.gmra.mrb[0].mxu0 %v70
  %v214 = vpop.f32.mrb[0].mxu0
  %v215 = vadd.f32 %v57, %v214
  %v216 = vpop.f32.mrb[0].mxu0
  %v217 = vpop.f32.mrb[0].mxu0
  %v218 = vpop.f32.mrb[0].mxu0
  %219 = vdwg.mxu0
  %s220 = smul.u32 0, 24
  %v221 = vlaneseq
  %v222 = vshrl.u32 %v221, 7
  %v223 = vadd.s32 %v222, 8
  %v224 = vadd.s32 %v222, 16
  %v225 = vstv %s220
  %v226 = vadd.s32 %v225, %v222
  %v227 = vadd.s32 %v225, %v223
  %v228 = vadd.s32 %v225, %v224
  %vm229 = vcmp.lt.s32.totalorder %v226, 18
  %vm230 = vcmp.lt.s32.totalorder %v227, 18
  %vm231 = vcmp.lt.s32.totalorder %v228, 18
  %v232 = vsel %vm229, 1, 0
  %v233 = vsel %vm230, 1, 0
  %v234 = vsel %vm231, 1, 0
  %vm235 = vcmp.eq.s32.totalorder %v232, 1
  %vm236 = vcmp.eq.s32.totalorder %v233, 1
  %vm237 = vcmp.eq.s32.totalorder %v234, 1
  %v238 = vsel %vm235, %v207, 0.0
  %v239 = vsel %vm236, %v210, 0.0
  %v240 = vsel %vm237, %v215, 0.0
  %v241 = vadd.f32 %v238, %v239
  %v242 = vadd.f32 %v241, %v240
  %v243 = vrot.slane %v242, 4
  %v244 = vadd.f32 %v242, %v243
  %v245 = vrot.slane %v244, 2
  %v246 = vadd.f32 %v244, %v245
  %v247 = vrot.slane %v246, 1
  %v248 = vadd.f32 %v246, %v247
  %249 = vst [vmem:[%s4] sm:$0x1] %v248
  %v250 = vmul.f32 %v238, %v238
  %v251 = vmul.f32 %v239, %v239
  %v252 = vmul.f32 %v240, %v240
  %v253 = vadd.f32 %v250, %v251
  %v254 = vadd.f32 %v253, %v252
  %v255 = vrot.slane %v254, 4
  %v256 = vadd.f32 %v254, %v255
  %v257 = vrot.slane %v256, 2
  %v258 = vadd.f32 %v256, %v257
  %v259 = vrot.slane %v258, 1
  %v260 = vadd.f32 %v258, %v259
  %261 = vst [vmem:[%s4 + $0x1] sm:$0x1] %v260
  %v262 = vpack.c.bf16 %v210, %v207
  %v263 = vpack.c.bf16 %v215, %v215
  %v266 = vunpack.c.l.b16 %v262
  %v267 = vunpack.c.h.b16 %v262
  %v268 = vunpack.c.l.b16 %v263
  %v269 = vpack.c.b16 %v266, %v266
  %v270 = vpack.c.b16 %v267, %v267
  %v271 = vpack.c.b16 %v268, %v268
  %275 = vst [vmem:[%s3] sm:$0xf] %v269
  %276 = vst [vmem:[%s3 + $0x4] sm:$0xf] %v270
  %277 = vst [vmem:[%s3 + $0x8] sm:$0xf] %v271
  // Predicated region
  $region14: #{_lambda_.11} parent=0 // pred_check
    _
  $region15: #{_lambda_.11} parent=0 // pred_check_branch
    %279 = sbr.rel (0) target = $region17
  $region16: #{_lambda_.11} parent=0 // pred_region
    _
  $region17: #{_lambda_.11} parent=0 // pred_fallthru
    _
  // Predicated region
  $region18: #{_lambda_.11} parent=0 // pred_check
    _
  $region19: #{_lambda_.11} parent=0 // pred_check_branch
    %281 = sbr.rel (0) target = $region21
  $region20: #{_lambda_.11} parent=0 // pred_region
    _
  $region21: #{_lambda_.11} parent=0 // pred_fallthru
    _
  // Predicated region
  $region22: #{_lambda_.11} parent=0 // pred_check
    _
  $region23: #{_lambda_.11} parent=0 // pred_check_branch
    %283 = sbr.rel (0) target = $region25
  $region24: #{_lambda_.11} parent=0 // pred_region
    _
  $region25: #{_lambda_.11} parent=0 // pred_fallthru
    _
  // Predicated region
  $region26: #{_lambda_.11} parent=0 // pred_check
    _
  $region27: #{_lambda_.11} parent=0 // pred_check_branch
    %285 = sbr.rel (0) target = $region29
  $region28: #{_lambda_.11} parent=0 // pred_region
    _
  $region29: #{_lambda_.11} parent=0 // pred_fallthru
    _

// kernel: _lambda_.12
$region0: #{_lambda_.12}
  #allocation0 [shape = 'u32[]', space=smem, size = 0x4, offset = 0x4, fixed_abs, tag = 'smem constant byte address 0x4 - core index']
  #allocation1 [shape = 'u32[144,128]{1,0:T(1,128)}', space=vmem, size = 0x12000, scoped, tag = 'internal scratch']
  %s0 = inlined_call_operand.vmem [shape: bf16[24,128], index: 0, kind: input, shape index: {}]
  %s1 = inlined_call_operand.vmem [shape: f32[1,128], index: 1, kind: input, shape index: {}]
  %s2 = inlined_call_operand.vmem [shape: f32[1,128], index: 2, kind: input, shape index: {}]
  %s3 = inlined_call_operand.vmem [shape: bf16[24,128], index: 3, kind: output, shape index: {}]
  %s4 = sld [smem:[#allocation0]]
  $region22: #{_lambda_.12} parent=0
    _
  %s6 = ssub.s32 1, %s4
  %s7 = scalar_select 0, %s6, %s4
  // Predicated region
  $region2: #{_lambda_.12} parent=0 // pred_check
    _
  $region3: #{_lambda_.12} parent=0 // pred_check_branch
    %9 = sbr.rel (0) target = $region5
  $region4: #{_lambda_.12} parent=0 // pred_region
    _
  $region5: #{_lambda_.12} parent=0 // pred_fallthru
    _
  // Predicated region
  $region6: #{_lambda_.12} parent=0 // pred_check
    _
  $region7: #{_lambda_.12} parent=0 // pred_check_branch
    %11 = sbr.rel (0) target = $region9
  $region8: #{_lambda_.12} parent=0 // pred_region
    _
  $region9: #{_lambda_.12} parent=0 // pred_fallthru
    _
  // Predicated region
  $region10: #{_lambda_.12} parent=0 // pred_check
    _
  $region11: #{_lambda_.12} parent=0 // pred_check_branch
    %13 = sbr.rel (0) target = $region13
  $region12: #{_lambda_.12} parent=0 // pred_region
    _
  $region13: #{_lambda_.12} parent=0 // pred_fallthru
    _
  %v14 = vld [vmem:[%s0] sm:$0xf]
  %v15 = vld [vmem:[%s0 + $0x4] sm:$0xf]
  %v16 = vld [vmem:[%s0 + $0x8] sm:$0xf]
  %v17 = vunpack.c.l.bf16 %v14
  %v18 = vunpack.c.l.bf16 %v15
  %v19 = vunpack.c.l.bf16 %v16
  %v20 = vld [vmem:[%s1] sm:$0x1]
  %v22 = vlaneseq
  %v23 = vshrl.u32 %v22, 7
  %v24 = vsub.s32 0, %v23
  %v25 = vrot.slane %v20, %v24
  %v27 = vmul.f32 %v17, %v25
  %v28 = vmul.f32 %v18, %v25
  %v29 = vmul.f32 %v19, %v25
  %v30 = vld [vmem:[%s2] sm:$0x1]
  %v32 = vlaneseq
  %v33 = vshrl.u32 %v32, 7
  %v34 = vsub.s32 0, %v33
  %v35 = vrot.slane %v30, %v34
  %v37 = vadd.f32 %v27, %v35
  %v38 = vadd.f32 %v28, %v35
  %v39 = vadd.f32 %v29, %v35
  %vm40 = vcmp.ge.f32.partialorder %v37, 0.0
  %vm41 = vcmp.ge.f32.partialorder %v38, 0.0
  %vm42 = vcmp.ge.f32.partialorder %v39, 0.0
  %v43 = vmul.f32 %v37, 0.2
  %v44 = vmul.f32 %v38, 0.2
  %v45 = vmul.f32 %v39, 0.2
  %v46 = vsel %vm40, %v37, %v43
  %v47 = vsel %vm41, %v38, %v44
  %v48 = vsel %vm42, %v39, %v45
  %v49 = vpack.c.bf16 %v47, %v46
  %v50 = vpack.c.bf16 %v48, %v48
  %v53 = vunpack.c.l.b16 %v49
  %v54 = vunpack.c.h.b16 %v49
  %v55 = vunpack.c.l.b16 %v50
  %v56 = vpack.c.b16 %v53, %v53
  %v57 = vpack.c.b16 %v54, %v54
  %v58 = vpack.c.b16 %v55, %v55
  %62 = vst [vmem:[%s3] sm:$0xf] %v56
  %63 = vst [vmem:[%s3 + $0x4] sm:$0xf] %v57
  %64 = vst [vmem:[%s3 + $0x8] sm:$0xf] %v58
  // Predicated region
  $region14: #{_lambda_.12} parent=0 // pred_check
    _
  $region15: #{_lambda_.12} parent=0 // pred_check_branch
    %66 = sbr.rel (0) target = $region17
  $region16: #{_lambda_.12} parent=0 // pred_region
    _
  $region17: #{_lambda_.12} parent=0 // pred_fallthru
    _
  // Predicated region
  $region18: #{_lambda_.12} parent=0 // pred_check
    _
  $region19: #{_lambda_.12} parent=0 // pred_check_branch
    %68 = sbr.rel (0) target = $region21
  $region20: #{_lambda_.12} parent=0 // pred_region
    _
  $region21: #{_lambda_.12} parent=0 // pred_fallthru
    _

// kernel: _lambda_.13
$region0: #{_lambda_.13}
  #allocation0 [shape = 'u32[]', space=smem, size = 0x4, offset = 0x4, fixed_abs, tag = 'smem constant byte address 0x4 - core index']
  #allocation1 [shape = 'u32[144,128]{1,0:T(1,128)}', space=vmem, size = 0x12000, scoped, tag = 'internal scratch']
  %s0 = inlined_call_operand.vmem [shape: bf16[32,512], index: 0, kind: input, shape index: {}]
  %s1 = inlined_call_operand.vmem [shape: bf16[512,128], index: 1, kind: input, shape index: {}]
  %s2 = inlined_call_operand.vmem [shape: f32[1,128], index: 2, kind: input, shape index: {}]
  %s3 = inlined_call_operand.vmem [shape: bf16[32,128], index: 3, kind: output, shape index: {0}]
  %s4 = inlined_call_operand.vmem [shape: f32[1,2,128], index: 4, kind: output, shape index: {1}]
  %5 = xla_tuple %s3, %s4
  %s6 = sld [smem:[#allocation0]]
  $region30: #{_lambda_.13} parent=0
    _
  %s8 = ssub.s32 1, %s6
  %s9 = scalar_select 0, %s8, %s6
  // Predicated region
  $region2: #{_lambda_.13} parent=0 // pred_check
    _
  $region3: #{_lambda_.13} parent=0 // pred_check_branch
    %11 = sbr.rel (0) target = $region5
  $region4: #{_lambda_.13} parent=0 // pred_region
    _
  $region5: #{_lambda_.13} parent=0 // pred_fallthru
    _
  // Predicated region
  $region6: #{_lambda_.13} parent=0 // pred_check
    _
  $region7: #{_lambda_.13} parent=0 // pred_check_branch
    %13 = sbr.rel (0) target = $region9
  $region8: #{_lambda_.13} parent=0 // pred_region
    _
  $region9: #{_lambda_.13} parent=0 // pred_fallthru
    _
  // Predicated region
  $region10: #{_lambda_.13} parent=0 // pred_check
    _
  $region11: #{_lambda_.13} parent=0 // pred_check_branch
    %15 = sbr.rel (0) target = $region13
  $region12: #{_lambda_.13} parent=0 // pred_region
    _
  $region13: #{_lambda_.13} parent=0 // pred_fallthru
    _
  %v17 = vld [vmem:[%s0] sm:$0xff]
  %v18 = vld [vmem:[%s0 + $0x8] sm:$0xff]
  %v19 = vld [vmem:[%s0 + $0x10] sm:$0xff]
  %v20 = vld [vmem:[%s0 + $0x18] sm:$0xff]
  %v21 = vld [vmem:[%s0 + $0x20] sm:$0xff]
  %v22 = vld [vmem:[%s0 + $0x28] sm:$0xff]
  %v23 = vld [vmem:[%s0 + $0x30] sm:$0xff]
  %v24 = vld [vmem:[%s0 + $0x38] sm:$0xff]
  %v25 = vld [vmem:[%s1] sm:$0xf]
  %v26 = vld [vmem:[%s1 + $0x4] sm:$0xf]
  %v27 = vld [vmem:[%s1 + $0x8] sm:$0xf]
  %v28 = vld [vmem:[%s1 + $0xc] sm:$0xf]
  %v29 = vld [vmem:[%s1 + $0x10] sm:$0xf]
  %v30 = vld [vmem:[%s1 + $0x14] sm:$0xf]
  %v31 = vld [vmem:[%s1 + $0x18] sm:$0xf]
  %v32 = vld [vmem:[%s1 + $0x1c] sm:$0xf]
  %v33 = vld [vmem:[%s1 + $0x20] sm:$0xf]
  %v34 = vld [vmem:[%s1 + $0x24] sm:$0xf]
  %v35 = vld [vmem:[%s1 + $0x28] sm:$0xf]
  %v36 = vld [vmem:[%s1 + $0x2c] sm:$0xf]
  %v37 = vld [vmem:[%s1 + $0x30] sm:$0xf]
  %v38 = vld [vmem:[%s1 + $0x34] sm:$0xf]
  %v39 = vld [vmem:[%s1 + $0x38] sm:$0xf]
  %v40 = vld [vmem:[%s1 + $0x3c] sm:$0xf]
  %v41 = vld [vmem:[%s1 + $0x40] sm:$0xf]
  %v42 = vld [vmem:[%s1 + $0x44] sm:$0xf]
  %v43 = vld [vmem:[%s1 + $0x48] sm:$0xf]
  %v44 = vld [vmem:[%s1 + $0x4c] sm:$0xf]
  %v45 = vld [vmem:[%s1 + $0x50] sm:$0xf]
  %v46 = vld [vmem:[%s1 + $0x54] sm:$0xf]
  %v47 = vld [vmem:[%s1 + $0x58] sm:$0xf]
  %v48 = vld [vmem:[%s1 + $0x5c] sm:$0xf]
  %v49 = vld [vmem:[%s1 + $0x60] sm:$0xf]
  %v50 = vld [vmem:[%s1 + $0x64] sm:$0xf]
  %v51 = vld [vmem:[%s1 + $0x68] sm:$0xf]
  %v52 = vld [vmem:[%s1 + $0x6c] sm:$0xf]
  %v53 = vld [vmem:[%s1 + $0x70] sm:$0xf]
  %v54 = vld [vmem:[%s1 + $0x74] sm:$0xf]
  %v55 = vld [vmem:[%s1 + $0x78] sm:$0xf]
  %v56 = vld [vmem:[%s1 + $0x7c] sm:$0xf]
  %v57 = vld [vmem:[%s1 + $0x80] sm:$0xf]
  %v58 = vld [vmem:[%s1 + $0x84] sm:$0xf]
  %v59 = vld [vmem:[%s1 + $0x88] sm:$0xf]
  %v60 = vld [vmem:[%s1 + $0x8c] sm:$0xf]
  %v61 = vld [vmem:[%s1 + $0x90] sm:$0xf]
  %v62 = vld [vmem:[%s1 + $0x94] sm:$0xf]
  %v63 = vld [vmem:[%s1 + $0x98] sm:$0xf]
  %v64 = vld [vmem:[%s1 + $0x9c] sm:$0xf]
  %v65 = vld [vmem:[%s1 + $0xa0] sm:$0xf]
  %v66 = vld [vmem:[%s1 + $0xa4] sm:$0xf]
  %v67 = vld [vmem:[%s1 + $0xa8] sm:$0xf]
  %v68 = vld [vmem:[%s1 + $0xac] sm:$0xf]
  %v69 = vld [vmem:[%s1 + $0xb0] sm:$0xf]
  %v70 = vld [vmem:[%s1 + $0xb4] sm:$0xf]
  %v71 = vld [vmem:[%s1 + $0xb8] sm:$0xf]
  %v72 = vld [vmem:[%s1 + $0xbc] sm:$0xf]
  %v73 = vld [vmem:[%s1 + $0xc0] sm:$0xf]
  %v74 = vld [vmem:[%s1 + $0xc4] sm:$0xf]
  %v75 = vld [vmem:[%s1 + $0xc8] sm:$0xf]
  %v76 = vld [vmem:[%s1 + $0xcc] sm:$0xf]
  %v77 = vld [vmem:[%s1 + $0xd0] sm:$0xf]
  %v78 = vld [vmem:[%s1 + $0xd4] sm:$0xf]
  %v79 = vld [vmem:[%s1 + $0xd8] sm:$0xf]
  %v80 = vld [vmem:[%s1 + $0xdc] sm:$0xf]
  %v81 = vld [vmem:[%s1 + $0xe0] sm:$0xf]
  %v82 = vld [vmem:[%s1 + $0xe4] sm:$0xf]
  %v83 = vld [vmem:[%s1 + $0xe8] sm:$0xf]
  %v84 = vld [vmem:[%s1 + $0xec] sm:$0xf]
  %v85 = vld [vmem:[%s1 + $0xf0] sm:$0xf]
  %v86 = vld [vmem:[%s1 + $0xf4] sm:$0xf]
  %v87 = vld [vmem:[%s1 + $0xf8] sm:$0xf]
  %v88 = vld [vmem:[%s1 + $0xfc] sm:$0xf]
  %v89 = vld [vmem:[%s2] sm:$0x1]
  %v91 = vlaneseq
  %v92 = vshrl.u32 %v91, 7
  %v93 = vsub.s32 0, %v92
  %v94 = vrot.slane %v89, %v93
  %v104 = vunpack.c.l.b16 %v17
  %v105 = vunpack.c.h.b16 %v17
  %v106 = vunpack.c.l.b16 %v18
  %v107 = vunpack.c.h.b16 %v18
  %v108 = vunpack.c.l.b16 %v19
  %v109 = vunpack.c.h.b16 %v19
  %v110 = vunpack.c.l.b16 %v20
  %v111 = vunpack.c.h.b16 %v20
  %v112 = vunpack.c.l.b16 %v21
  %v113 = vunpack.c.h.b16 %v21
  %v114 = vunpack.c.l.b16 %v22
  %v115 = vunpack.c.h.b16 %v22
  %v116 = vunpack.c.l.b16 %v23
  %v117 = vunpack.c.h.b16 %v23
  %v118 = vunpack.c.l.b16 %v24
  %v119 = vunpack.c.h.b16 %v24
  %v120 = vpack.c.b16 %v108, %v104
  %v121 = vpack.c.b16 %v109, %v105
  %v122 = vpack.c.b16 %v110, %v106
  %v123 = vpack.c.b16 %v111, %v107
  %v124 = vpack.c.b16 %v116, %v112
  %v125 = vpack.c.b16 %v117, %v113
  %v126 = vpack.c.b16 %v118, %v114
  %v127 = vpack.c.b16 %v119, %v115
  %v200 = vunpack.c.l.b16 %v25
  %v201 = vunpack.c.l.b16 %v26
  %v202 = vunpack.c.l.b16 %v27
  %v203 = vunpack.c.l.b16 %v28
  %v204 = vunpack.c.l.b16 %v29
  %v205 = vunpack.c.l.b16 %v30
  %v206 = vunpack.c.l.b16 %v31
  %v207 = vunpack.c.l.b16 %v32
  %v208 = vunpack.c.l.b16 %v33
  %v209 = vunpack.c.l.b16 %v34
  %v210 = vunpack.c.l.b16 %v35
  %v211 = vunpack.c.l.b16 %v36
  %v212 = vunpack.c.l.b16 %v37
  %v213 = vunpack.c.l.b16 %v38
  %v214 = vunpack.c.l.b16 %v39
  %v215 = vunpack.c.l.b16 %v40
  %v216 = vunpack.c.l.b16 %v41
  %v217 = vunpack.c.l.b16 %v42
  %v218 = vunpack.c.l.b16 %v43
  %v219 = vunpack.c.l.b16 %v44
  %v220 = vunpack.c.l.b16 %v45
  %v221 = vunpack.c.l.b16 %v46
  %v222 = vunpack.c.l.b16 %v47
  %v223 = vunpack.c.l.b16 %v48
  %v224 = vunpack.c.l.b16 %v49
  %v225 = vunpack.c.l.b16 %v50
  %v226 = vunpack.c.l.b16 %v51
  %v227 = vunpack.c.l.b16 %v52
  %v228 = vunpack.c.l.b16 %v53
  %v229 = vunpack.c.l.b16 %v54
  %v230 = vunpack.c.l.b16 %v55
  %v231 = vunpack.c.l.b16 %v56
  %v232 = vunpack.c.l.b16 %v57
  %v233 = vunpack.c.l.b16 %v58
  %v234 = vunpack.c.l.b16 %v59
  %v235 = vunpack.c.l.b16 %v60
  %v236 = vunpack.c.l.b16 %v61
  %v237 = vunpack.c.l.b16 %v62
  %v238 = vunpack.c.l.b16 %v63
  %v239 = vunpack.c.l.b16 %v64
  %v240 = vunpack.c.l.b16 %v65
  %v241 = vunpack.c.l.b16 %v66
  %v242 = vunpack.c.l.b16 %v67
  %v243 = vunpack.c.l.b16 %v68
  %v244 = vunpack.c.l.b16 %v69
  %v245 = vunpack.c.l.b16 %v70
  %v246 = vunpack.c.l.b16 %v71
  %v247 = vunpack.c.l.b16 %v72
  %v248 = vunpack.c.l.b16 %v73
  %v249 = vunpack.c.l.b16 %v74
  %v250 = vunpack.c.l.b16 %v75
  %v251 = vunpack.c.l.b16 %v76
  %v252 = vunpack.c.l.b16 %v77
  %v253 = vunpack.c.l.b16 %v78
  %v254 = vunpack.c.l.b16 %v79
  %v255 = vunpack.c.l.b16 %v80
  %v256 = vunpack.c.l.b16 %v81
  %v257 = vunpack.c.l.b16 %v82
  %v258 = vunpack.c.l.b16 %v83
  %v259 = vunpack.c.l.b16 %v84
  %v260 = vunpack.c.l.b16 %v85
  %v261 = vunpack.c.l.b16 %v86
  %v262 = vunpack.c.l.b16 %v87
  %v263 = vunpack.c.l.b16 %v88
  %v264 = vpack.c.b16 %v201, %v200
  %v265 = vpack.c.b16 %v203, %v202
  %v266 = vpack.c.b16 %v205, %v204
  %v267 = vpack.c.b16 %v207, %v206
  %v268 = vpack.c.b16 %v209, %v208
  %v269 = vpack.c.b16 %v211, %v210
  %v270 = vpack.c.b16 %v213, %v212
  %v271 = vpack.c.b16 %v215, %v214
  %v272 = vpack.c.b16 %v217, %v216
  %v273 = vpack.c.b16 %v219, %v218
  %v274 = vpack.c.b16 %v221, %v220
  %v275 = vpack.c.b16 %v223, %v222
  %v276 = vpack.c.b16 %v225, %v224
  %v277 = vpack.c.b16 %v227, %v226
  %v278 = vpack.c.b16 %v229, %v228
  %v279 = vpack.c.b16 %v231, %v230
  %v280 = vpack.c.b16 %v233, %v232
  %v281 = vpack.c.b16 %v235, %v234
  %v282 = vpack.c.b16 %v237, %v236
  %v283 = vpack.c.b16 %v239, %v238
  %v284 = vpack.c.b16 %v241, %v240
  %v285 = vpack.c.b16 %v243, %v242
  %v286 = vpack.c.b16 %v245, %v244
  %v287 = vpack.c.b16 %v247, %v246
  %v288 = vpack.c.b16 %v249, %v248
  %v289 = vpack.c.b16 %v251, %v250
  %v290 = vpack.c.b16 %v253, %v252
  %v291 = vpack.c.b16 %v255, %v254
  %v292 = vpack.c.b16 %v257, %v256
  %v293 = vpack.c.b16 %v259, %v258
  %v294 = vpack.c.b16 %v261, %v260
  %v295 = vpack.c.b16 %v263, %v262
  %328 = vmatprep.subr.bf16.mxu0 0
  %329 = vmatpush1.bf16.msra.mxu0 %v264
  %330 = vmatprep.subr.bf16.mxu0 0
  %331 = vmatpush1.bf16.msra.mxu0 %v265
  %332 = vmatprep.subr.bf16.mxu0 0
  %333 = vmatpush1.bf16.msra.mxu0 %v266
  %334 = vmatprep.subr.bf16.mxu0 0
  %335 = vmatpush1.bf16.msra.mxu0 %v267
  %336 = vmatprep.subr.bf16.mxu0 0
  %337 = vmatpush1.bf16.msra.mxu0 %v268
  %338 = vmatprep.subr.bf16.mxu0 0
  %339 = vmatpush1.bf16.msra.mxu0 %v269
  %340 = vmatprep.subr.bf16.mxu0 0
  %341 = vmatpush1.bf16.msra.mxu0 %v270
  %342 = vmatprep.subr.bf16.mxu0 0
  %343 = vmatpush1.bf16.msra.mxu0 %v271
  %344 = vmatprep.subr.bf16.mxu0 0
  %345 = vmatpush1.bf16.msra.mxu0 %v272
  %346 = vmatprep.subr.bf16.mxu0 0
  %347 = vmatpush1.bf16.msra.mxu0 %v273
  %348 = vmatprep.subr.bf16.mxu0 0
  %349 = vmatpush1.bf16.msra.mxu0 %v274
  %350 = vmatprep.subr.bf16.mxu0 0
  %351 = vmatpush1.bf16.msra.mxu0 %v275
  %352 = vmatprep.subr.bf16.mxu0 0
  %353 = vmatpush1.bf16.msra.mxu0 %v276
  %354 = vmatprep.subr.bf16.mxu0 0
  %355 = vmatpush1.bf16.msra.mxu0 %v277
  %356 = vmatprep.subr.bf16.mxu0 0
  %357 = vmatpush1.bf16.msra.mxu0 %v278
  %358 = vmatprep.subr.bf16.mxu0 0
  %359 = vmatpush1.bf16.msra.mxu0 %v279
  %360 = vmatprep.mubr.bf16.mxu0 %v121
  %361 = vmatmul.mubr.bf16.gmra.mrb[0].mxu0 %v120
  %v362 = vpop.f32.mrb[0].mxu0
  %v363 = vadd.f32 %v94, %v362
  %v364 = vpop.f32.mrb[0].mxu0
  %v365 = vpop.f32.mrb[0].mxu0
  %v366 = vadd.f32 %v94, %v365
  %v367 = vpop.f32.mrb[0].mxu0
  %368 = vmatprep.mubr.bf16.mxu0 %v125
  %369 = vmatmul.mubr.bf16.gmra.mrb[0].mxu0 %v124
  %v370 = vpop.f32.mrb[0].mxu0
  %v371 = vadd.f32 %v94, %v370
  %v372 = vpop.f32.mrb[0].mxu0
  %v373 = vpop.f32.mrb[0].mxu0
  %v374 = vadd.f32 %v94, %v373
  %v375 = vpop.f32.mrb[0].mxu0
  %376 = vdwg.mxu0
  %377 = vmatprep.subr.bf16.mxu0 0
  %378 = vmatpush1.bf16.msra.mxu0 %v280
  %379 = vmatprep.subr.bf16.mxu0 0
  %380 = vmatpush1.bf16.msra.mxu0 %v281
  %381 = vmatprep.subr.bf16.mxu0 0
  %382 = vmatpush1.bf16.msra.mxu0 %v282
  %383 = vmatprep.subr.bf16.mxu0 0
  %384 = vmatpush1.bf16.msra.mxu0 %v283
  %385 = vmatprep.subr.bf16.mxu0 0
  %386 = vmatpush1.bf16.msra.mxu0 %v284
  %387 = vmatprep.subr.bf16.mxu0 0
  %388 = vmatpush1.bf16.msra.mxu0 %v285
  %389 = vmatprep.subr.bf16.mxu0 0
  %390 = vmatpush1.bf16.msra.mxu0 %v286
  %391 = vmatprep.subr.bf16.mxu0 0
  %392 = vmatpush1.bf16.msra.mxu0 %v287
  %393 = vmatprep.subr.bf16.mxu0 0
  %394 = vmatpush1.bf16.msra.mxu0 %v288
  %395 = vmatprep.subr.bf16.mxu0 0
  %396 = vmatpush1.bf16.msra.mxu0 %v289
  %397 = vmatprep.subr.bf16.mxu0 0
  %398 = vmatpush1.bf16.msra.mxu0 %v290
  %399 = vmatprep.subr.bf16.mxu0 0
  %400 = vmatpush1.bf16.msra.mxu0 %v291
  %401 = vmatprep.subr.bf16.mxu0 0
  %402 = vmatpush1.bf16.msra.mxu0 %v292
  %403 = vmatprep.subr.bf16.mxu0 0
  %404 = vmatpush1.bf16.msra.mxu0 %v293
  %405 = vmatprep.subr.bf16.mxu0 0
  %406 = vmatpush1.bf16.msra.mxu0 %v294
  %407 = vmatprep.subr.bf16.mxu0 0
  %408 = vmatpush1.bf16.msra.mxu0 %v295
  %409 = vmatprep.mubr.bf16.mxu0 %v123
  %410 = vmatmul.mubr.bf16.gmra.mrb[0].mxu0 %v122
  %v411 = vpop.f32.mrb[0].mxu0
  %v412 = vadd.f32 %v363, %v411
  %v413 = vpop.f32.mrb[0].mxu0
  %v414 = vpop.f32.mrb[0].mxu0
  %v415 = vadd.f32 %v366, %v414
  %v416 = vpop.f32.mrb[0].mxu0
  %417 = vmatprep.mubr.bf16.mxu0 %v127
  %418 = vmatmul.mubr.bf16.gmra.mrb[0].mxu0 %v126
  %v419 = vpop.f32.mrb[0].mxu0
  %v420 = vadd.f32 %v371, %v419
  %v421 = vpop.f32.mrb[0].mxu0
  %v422 = vpop.f32.mrb[0].mxu0
  %v423 = vadd.f32 %v374, %v422
  %v424 = vpop.f32.mrb[0].mxu0
  %425 = vdwg.mxu0
  %s426 = smul.u32 0, 32
  %v427 = vlaneseq
  %v428 = vshrl.u32 %v427, 7
  %v429 = vadd.s32 %v428, 8
  %v430 = vadd.s32 %v428, 16
  %v431 = vadd.s32 %v428, 24
  %v432 = vstv %s426
  %v433 = vadd.s32 %v432, %v428
  %v434 = vadd.s32 %v432, %v429
  %v435 = vadd.s32 %v432, %v430
  %v436 = vadd.s32 %v432, %v431
  %vm437 = vcmp.lt.s32.totalorder %v433, 32
  %vm438 = vcmp.lt.s32.totalorder %v434, 32
  %vm439 = vcmp.lt.s32.totalorder %v435, 32
  %vm440 = vcmp.lt.s32.totalorder %v436, 32
  %v441 = vsel %vm437, 1, 0
  %v442 = vsel %vm438, 1, 0
  %v443 = vsel %vm439, 1, 0
  %v444 = vsel %vm440, 1, 0
  %vm445 = vcmp.eq.s32.totalorder %v441, 1
  %vm446 = vcmp.eq.s32.totalorder %v442, 1
  %vm447 = vcmp.eq.s32.totalorder %v443, 1
  %vm448 = vcmp.eq.s32.totalorder %v444, 1
  %v449 = vsel %vm445, %v412, 0.0
  %v450 = vsel %vm446, %v415, 0.0
  %v451 = vsel %vm447, %v420, 0.0
  %v452 = vsel %vm448, %v423, 0.0
  %v453 = vadd.f32 %v449, %v450
  %v454 = vadd.f32 %v453, %v451
  %v455 = vadd.f32 %v454, %v452
  %v456 = vrot.slane %v455, 4
  %v457 = vadd.f32 %v455, %v456
  %v458 = vrot.slane %v457, 2
  %v459 = vadd.f32 %v457, %v458
  %v460 = vrot.slane %v459, 1
  %v461 = vadd.f32 %v459, %v460
  %462 = vst [vmem:[%s4] sm:$0x1] %v461
  %v463 = vmul.f32 %v449, %v449
  %v464 = vmul.f32 %v450, %v450
  %v465 = vmul.f32 %v451, %v451
  %v466 = vmul.f32 %v452, %v452
  %v467 = vadd.f32 %v463, %v464
  %v468 = vadd.f32 %v467, %v465
  %v469 = vadd.f32 %v468, %v466
  %v470 = vrot.slane %v469, 4
  %v471 = vadd.f32 %v469, %v470
  %v472 = vrot.slane %v471, 2
  %v473 = vadd.f32 %v471, %v472
  %v474 = vrot.slane %v473, 1
  %v475 = vadd.f32 %v473, %v474
  %476 = vst [vmem:[%s4 + $0x1] sm:$0x1] %v475
  %v477 = vpack.c.bf16 %v415, %v412
  %v478 = vpack.c.bf16 %v423, %v420
  %v481 = vunpack.c.l.b16 %v477
  %v482 = vunpack.c.h.b16 %v477
  %v483 = vunpack.c.l.b16 %v478
  %v484 = vunpack.c.h.b16 %v478
  %v485 = vpack.c.b16 %v481, %v481
  %v486 = vpack.c.b16 %v482, %v482
  %v487 = vpack.c.b16 %v483, %v483
  %v488 = vpack.c.b16 %v484, %v484
  %493 = vst [vmem:[%s3] sm:$0xf] %v485
  %494 = vst [vmem:[%s3 + $0x4] sm:$0xf] %v486
  %495 = vst [vmem:[%s3 + $0x8] sm:$0xf] %v487
  %496 = vst [vmem:[%s3 + $0xc] sm:$0xf] %v488
  // Predicated region
  $region14: #{_lambda_.13} parent=0 // pred_check
    _
  $region15: #{_lambda_.13} parent=0 // pred_check_branch
    %498 = sbr.rel (0) target = $region17
  $region16: #{_lambda_.13} parent=0 // pred_region
    _
  $region17: #{_lambda_.13} parent=0 // pred_fallthru
    _
  // Predicated region
  $region18: #{_lambda_.13} parent=0 // pred_check
    _
  $region19: #{_lambda_.13} parent=0 // pred_check_branch
    %500 = sbr.rel (0) target = $region21
  $region20: #{_lambda_.13} parent=0 // pred_region
    _
  $region21: #{_lambda_.13} parent=0 // pred_fallthru
    _
  // Predicated region
  $region22: #{_lambda_.13} parent=0 // pred_check
    _
  $region23: #{_lambda_.13} parent=0 // pred_check_branch
    %502 = sbr.rel (0) target = $region25
  $region24: #{_lambda_.13} parent=0 // pred_region
    _
  $region25: #{_lambda_.13} parent=0 // pred_fallthru
    _
  // Predicated region
  $region26: #{_lambda_.13} parent=0 // pred_check
    _
  $region27: #{_lambda_.13} parent=0 // pred_check_branch
    %504 = sbr.rel (0) target = $region29
  $region28: #{_lambda_.13} parent=0 // pred_region
    _
  $region29: #{_lambda_.13} parent=0 // pred_fallthru
    _

// kernel: _lambda_.14
$region0: #{_lambda_.14}
  #allocation0 [shape = 'u32[]', space=smem, size = 0x4, offset = 0x4, fixed_abs, tag = 'smem constant byte address 0x4 - core index']
  #allocation1 [shape = 'u32[144,128]{1,0:T(1,128)}', space=vmem, size = 0x12000, scoped, tag = 'internal scratch']
  %s0 = inlined_call_operand.vmem [shape: bf16[32,128], index: 0, kind: input, shape index: {}]
  %s1 = inlined_call_operand.vmem [shape: f32[1,128], index: 1, kind: input, shape index: {}]
  %s2 = inlined_call_operand.vmem [shape: f32[1,128], index: 2, kind: input, shape index: {}]
  %s3 = inlined_call_operand.vmem [shape: bf16[32,128], index: 3, kind: output, shape index: {}]
  %s4 = sld [smem:[#allocation0]]
  $region22: #{_lambda_.14} parent=0
    _
  %s6 = ssub.s32 1, %s4
  %s7 = scalar_select 0, %s6, %s4
  // Predicated region
  $region2: #{_lambda_.14} parent=0 // pred_check
    _
  $region3: #{_lambda_.14} parent=0 // pred_check_branch
    %9 = sbr.rel (0) target = $region5
  $region4: #{_lambda_.14} parent=0 // pred_region
    _
  $region5: #{_lambda_.14} parent=0 // pred_fallthru
    _
  // Predicated region
  $region6: #{_lambda_.14} parent=0 // pred_check
    _
  $region7: #{_lambda_.14} parent=0 // pred_check_branch
    %11 = sbr.rel (0) target = $region9
  $region8: #{_lambda_.14} parent=0 // pred_region
    _
  $region9: #{_lambda_.14} parent=0 // pred_fallthru
    _
  // Predicated region
  $region10: #{_lambda_.14} parent=0 // pred_check
    _
  $region11: #{_lambda_.14} parent=0 // pred_check_branch
    %13 = sbr.rel (0) target = $region13
  $region12: #{_lambda_.14} parent=0 // pred_region
    _
  $region13: #{_lambda_.14} parent=0 // pred_fallthru
    _
  %v14 = vld [vmem:[%s0] sm:$0xf]
  %v15 = vld [vmem:[%s0 + $0x4] sm:$0xf]
  %v16 = vld [vmem:[%s0 + $0x8] sm:$0xf]
  %v17 = vld [vmem:[%s0 + $0xc] sm:$0xf]
  %v18 = vunpack.c.l.bf16 %v14
  %v19 = vunpack.c.l.bf16 %v15
  %v20 = vunpack.c.l.bf16 %v16
  %v21 = vunpack.c.l.bf16 %v17
  %v22 = vld [vmem:[%s1] sm:$0x1]
  %v24 = vlaneseq
  %v25 = vshrl.u32 %v24, 7
  %v26 = vsub.s32 0, %v25
  %v27 = vrot.slane %v22, %v26
  %v29 = vmul.f32 %v18, %v27
  %v30 = vmul.f32 %v19, %v27
  %v31 = vmul.f32 %v20, %v27
  %v32 = vmul.f32 %v21, %v27
  %v33 = vld [vmem:[%s2] sm:$0x1]
  %v35 = vlaneseq
  %v36 = vshrl.u32 %v35, 7
  %v37 = vsub.s32 0, %v36
  %v38 = vrot.slane %v33, %v37
  %v40 = vadd.f32 %v29, %v38
  %v41 = vadd.f32 %v30, %v38
  %v42 = vadd.f32 %v31, %v38
  %v43 = vadd.f32 %v32, %v38
  %vm44 = vcmp.ge.f32.partialorder %v40, 0.0
  %vm45 = vcmp.ge.f32.partialorder %v41, 0.0
  %vm46 = vcmp.ge.f32.partialorder %v42, 0.0
  %vm47 = vcmp.ge.f32.partialorder %v43, 0.0
  %v48 = vmul.f32 %v40, 0.2
  %v49 = vmul.f32 %v41, 0.2
  %v50 = vmul.f32 %v42, 0.2
  %v51 = vmul.f32 %v43, 0.2
  %v52 = vsel %vm44, %v40, %v48
  %v53 = vsel %vm45, %v41, %v49
  %v54 = vsel %vm46, %v42, %v50
  %v55 = vsel %vm47, %v43, %v51
  %v56 = vpack.c.bf16 %v53, %v52
  %v57 = vpack.c.bf16 %v55, %v54
  %v60 = vunpack.c.l.b16 %v56
  %v61 = vunpack.c.h.b16 %v56
  %v62 = vunpack.c.l.b16 %v57
  %v63 = vunpack.c.h.b16 %v57
  %v64 = vpack.c.b16 %v60, %v60
  %v65 = vpack.c.b16 %v61, %v61
  %v66 = vpack.c.b16 %v62, %v62
  %v67 = vpack.c.b16 %v63, %v63
  %72 = vst [vmem:[%s3] sm:$0xf] %v64
  %73 = vst [vmem:[%s3 + $0x4] sm:$0xf] %v65
  %74 = vst [vmem:[%s3 + $0x8] sm:$0xf] %v66
  %75 = vst [vmem:[%s3 + $0xc] sm:$0xf] %v67
  // Predicated region
  $region14: #{_lambda_.14} parent=0 // pred_check
    _
  $region15: #{_lambda_.14} parent=0 // pred_check_branch
    %77 = sbr.rel (0) target = $region17
  $region16: #{_lambda_.14} parent=0 // pred_region
    _
  $region17: #{_lambda_.14} parent=0 // pred_fallthru
    _
  // Predicated region
  $region18: #{_lambda_.14} parent=0 // pred_check
    _
  $region19: #{_lambda_.14} parent=0 // pred_check_branch
    %79 = sbr.rel (0) target = $region21
  $region20: #{_lambda_.14} parent=0 // pred_region
    _
  $region21: #{_lambda_.14} parent=0 // pred_fallthru
    _

// kernel: _lambda_.15
$region0: #{_lambda_.15}
  #allocation0 [shape = 'u32[]', space=smem, size = 0x4, offset = 0x4, fixed_abs, tag = 'smem constant byte address 0x4 - core index']
  #allocation1 [shape = 'u32[144,128]{1,0:T(1,128)}', space=vmem, size = 0x12000, scoped, tag = 'internal scratch']
  %s0 = inlined_call_operand.vmem [shape: bf16[56,1024], index: 0, kind: input, shape index: {}]
  %s1 = inlined_call_operand.vmem [shape: bf16[1024,128], index: 1, kind: input, shape index: {}]
  %s2 = inlined_call_operand.vmem [shape: f32[1,128], index: 2, kind: input, shape index: {}]
  %s3 = inlined_call_operand.vmem [shape: bf16[56,128], index: 3, kind: output, shape index: {}]
  %s4 = sld [smem:[#allocation0]]
  $region22: #{_lambda_.15} parent=0
    _
  %s6 = ssub.s32 1, %s4
  %s7 = scalar_select 0, %s6, %s4
  // Predicated region
  $region2: #{_lambda_.15} parent=0 // pred_check
    _
  $region3: #{_lambda_.15} parent=0 // pred_check_branch
    %9 = sbr.rel (0) target = $region5
  $region4: #{_lambda_.15} parent=0 // pred_region
    _
  $region5: #{_lambda_.15} parent=0 // pred_fallthru
    _
  // Predicated region
  $region6: #{_lambda_.15} parent=0 // pred_check
    _
  $region7: #{_lambda_.15} parent=0 // pred_check_branch
    %11 = sbr.rel (0) target = $region9
  $region8: #{_lambda_.15} parent=0 // pred_region
    _
  $region9: #{_lambda_.15} parent=0 // pred_fallthru
    _
  // Predicated region
  $region10: #{_lambda_.15} parent=0 // pred_check
    _
  $region11: #{_lambda_.15} parent=0 // pred_check_branch
    %13 = sbr.rel (0) target = $region13
  $region12: #{_lambda_.15} parent=0 // pred_region
    _
  $region13: #{_lambda_.15} parent=0 // pred_fallthru
    _
  %v15 = vld [vmem:[%s0] sm:$0xff]
  %v16 = vld [vmem:[%s0 + $0x8] sm:$0xff]
  %v17 = vld [vmem:[%s0 + $0x10] sm:$0xff]
  %v18 = vld [vmem:[%s0 + $0x18] sm:$0xff]
  %v19 = vld [vmem:[%s0 + $0x20] sm:$0xff]
  %v20 = vld [vmem:[%s0 + $0x28] sm:$0xff]
  %v21 = vld [vmem:[%s0 + $0x30] sm:$0xff]
  %v22 = vld [vmem:[%s0 + $0x38] sm:$0xff]
  %v23 = vld [vmem:[%s0 + $0x40] sm:$0xff]
  %v24 = vld [vmem:[%s0 + $0x48] sm:$0xff]
  %v25 = vld [vmem:[%s0 + $0x50] sm:$0xff]
  %v26 = vld [vmem:[%s0 + $0x58] sm:$0xff]
  %v27 = vld [vmem:[%s0 + $0x60] sm:$0xff]
  %v28 = vld [vmem:[%s0 + $0x68] sm:$0xff]
  %v29 = vld [vmem:[%s0 + $0x70] sm:$0xff]
  %v30 = vld [vmem:[%s0 + $0x78] sm:$0xff]
  %v31 = vld [vmem:[%s0 + $0x80] sm:$0xff]
  %v32 = vld [vmem:[%s0 + $0x88] sm:$0xff]
  %v33 = vld [vmem:[%s0 + $0x90] sm:$0xff]
  %v34 = vld [vmem:[%s0 + $0x98] sm:$0xff]
  %v35 = vld [vmem:[%s0 + $0xa0] sm:$0xff]
  %v36 = vld [vmem:[%s0 + $0xa8] sm:$0xff]
  %v37 = vld [vmem:[%s0 + $0xb0] sm:$0xff]
  %v38 = vld [vmem:[%s0 + $0xb8] sm:$0xff]
  %v39 = vld [vmem:[%s0 + $0xc0] sm:$0xff]
  %v40 = vld [vmem:[%s0 + $0xc8] sm:$0xff]
  %v41 = vld [vmem:[%s0 + $0xd0] sm:$0xff]
  %v42 = vld [vmem:[%s0 + $0xd8] sm:$0xff]
  %v43 = vld [vmem:[%s1] sm:$0xf]
  %v44 = vld [vmem:[%s1 + $0x4] sm:$0xf]
  %v45 = vld [vmem:[%s1 + $0x8] sm:$0xf]
  %v46 = vld [vmem:[%s1 + $0xc] sm:$0xf]
  %v47 = vld [vmem:[%s1 + $0x10] sm:$0xf]
  %v48 = vld [vmem:[%s1 + $0x14] sm:$0xf]
  %v49 = vld [vmem:[%s1 + $0x18] sm:$0xf]
  %v50 = vld [vmem:[%s1 + $0x1c] sm:$0xf]
  %v51 = vld [vmem:[%s1 + $0x20] sm:$0xf]
  %v52 = vld [vmem:[%s1 + $0x24] sm:$0xf]
  %v53 = vld [vmem:[%s1 + $0x28] sm:$0xf]
  %v54 = vld [vmem:[%s1 + $0x2c] sm:$0xf]
  %v55 = vld [vmem:[%s1 + $0x30] sm:$0xf]
  %v56 = vld [vmem:[%s1 + $0x34] sm:$0xf]
  %v57 = vld [vmem:[%s1 + $0x38] sm:$0xf]
  %v58 = vld [vmem:[%s1 + $0x3c] sm:$0xf]
  %v59 = vld [vmem:[%s1 + $0x40] sm:$0xf]
  %v60 = vld [vmem:[%s1 + $0x44] sm:$0xf]
  %v61 = vld [vmem:[%s1 + $0x48] sm:$0xf]
  %v62 = vld [vmem:[%s1 + $0x4c] sm:$0xf]
  %v63 = vld [vmem:[%s1 + $0x50] sm:$0xf]
  %v64 = vld [vmem:[%s1 + $0x54] sm:$0xf]
  %v65 = vld [vmem:[%s1 + $0x58] sm:$0xf]
  %v66 = vld [vmem:[%s1 + $0x5c] sm:$0xf]
  %v67 = vld [vmem:[%s1 + $0x60] sm:$0xf]
  %v68 = vld [vmem:[%s1 + $0x64] sm:$0xf]
  %v69 = vld [vmem:[%s1 + $0x68] sm:$0xf]
  %v70 = vld [vmem:[%s1 + $0x6c] sm:$0xf]
  %v71 = vld [vmem:[%s1 + $0x70] sm:$0xf]
  %v72 = vld [vmem:[%s1 + $0x74] sm:$0xf]
  %v73 = vld [vmem:[%s1 + $0x78] sm:$0xf]
  %v74 = vld [vmem:[%s1 + $0x7c] sm:$0xf]
  %v75 = vld [vmem:[%s1 + $0x80] sm:$0xf]
  %v76 = vld [vmem:[%s1 + $0x84] sm:$0xf]
  %v77 = vld [vmem:[%s1 + $0x88] sm:$0xf]
  %v78 = vld [vmem:[%s1 + $0x8c] sm:$0xf]
  %v79 = vld [vmem:[%s1 + $0x90] sm:$0xf]
  %v80 = vld [vmem:[%s1 + $0x94] sm:$0xf]
  %v81 = vld [vmem:[%s1 + $0x98] sm:$0xf]
  %v82 = vld [vmem:[%s1 + $0x9c] sm:$0xf]
  %v83 = vld [vmem:[%s1 + $0xa0] sm:$0xf]
  %v84 = vld [vmem:[%s1 + $0xa4] sm:$0xf]
  %v85 = vld [vmem:[%s1 + $0xa8] sm:$0xf]
  %v86 = vld [vmem:[%s1 + $0xac] sm:$0xf]
  %v87 = vld [vmem:[%s1 + $0xb0] sm:$0xf]
  %v88 = vld [vmem:[%s1 + $0xb4] sm:$0xf]
  %v89 = vld [vmem:[%s1 + $0xb8] sm:$0xf]
  %v90 = vld [vmem:[%s1 + $0xbc] sm:$0xf]
  %v91 = vld [vmem:[%s1 + $0xc0] sm:$0xf]
  %v92 = vld [vmem:[%s1 + $0xc4] sm:$0xf]
  %v93 = vld [vmem:[%s1 + $0xc8] sm:$0xf]
  %v94 = vld [vmem:[%s1 + $0xcc] sm:$0xf]
  %v95 = vld [vmem:[%s1 + $0xd0] sm:$0xf]
  %v96 = vld [vmem:[%s1 + $0xd4] sm:$0xf]
  %v97 = vld [vmem:[%s1 + $0xd8] sm:$0xf]
  %v98 = vld [vmem:[%s1 + $0xdc] sm:$0xf]
  %v99 = vld [vmem:[%s1 + $0xe0] sm:$0xf]
  %v100 = vld [vmem:[%s1 + $0xe4] sm:$0xf]
  %v101 = vld [vmem:[%s1 + $0xe8] sm:$0xf]
  %v102 = vld [vmem:[%s1 + $0xec] sm:$0xf]
  %v103 = vld [vmem:[%s1 + $0xf0] sm:$0xf]
  %v104 = vld [vmem:[%s1 + $0xf4] sm:$0xf]
  %v105 = vld [vmem:[%s1 + $0xf8] sm:$0xf]
  %v106 = vld [vmem:[%s1 + $0xfc] sm:$0xf]
  %v107 = vld [vmem:[%s1 + $0x100] sm:$0xf]
  %v108 = vld [vmem:[%s1 + $0x104] sm:$0xf]
  %v109 = vld [vmem:[%s1 + $0x108] sm:$0xf]
  %v110 = vld [vmem:[%s1 + $0x10c] sm:$0xf]
  %v111 = vld [vmem:[%s1 + $0x110] sm:$0xf]
  %v112 = vld [vmem:[%s1 + $0x114] sm:$0xf]
  %v113 = vld [vmem:[%s1 + $0x118] sm:$0xf]
  %v114 = vld [vmem:[%s1 + $0x11c] sm:$0xf]
  %v115 = vld [vmem:[%s1 + $0x120] sm:$0xf]
  %v116 = vld [vmem:[%s1 + $0x124] sm:$0xf]
  %v117 = vld [vmem:[%s1 + $0x128] sm:$0xf]
  %v118 = vld [vmem:[%s1 + $0x12c] sm:$0xf]
  %v119 = vld [vmem:[%s1 + $0x130] sm:$0xf]
  %v120 = vld [vmem:[%s1 + $0x134] sm:$0xf]
  %v121 = vld [vmem:[%s1 + $0x138] sm:$0xf]
  %v122 = vld [vmem:[%s1 + $0x13c] sm:$0xf]
  %v123 = vld [vmem:[%s1 + $0x140] sm:$0xf]
  %v124 = vld [vmem:[%s1 + $0x144] sm:$0xf]
  %v125 = vld [vmem:[%s1 + $0x148] sm:$0xf]
  %v126 = vld [vmem:[%s1 + $0x14c] sm:$0xf]
  %v127 = vld [vmem:[%s1 + $0x150] sm:$0xf]
  %v128 = vld [vmem:[%s1 + $0x154] sm:$0xf]
  %v129 = vld [vmem:[%s1 + $0x158] sm:$0xf]
  %v130 = vld [vmem:[%s1 + $0x15c] sm:$0xf]
  %v131 = vld [vmem:[%s1 + $0x160] sm:$0xf]
  %v132 = vld [vmem:[%s1 + $0x164] sm:$0xf]
  %v133 = vld [vmem:[%s1 + $0x168] sm:$0xf]
  %v134 = vld [vmem:[%s1 + $0x16c] sm:$0xf]
  %v135 = vld [vmem:[%s1 + $0x170] sm:$0xf]
  %v136 = vld [vmem:[%s1 + $0x174] sm:$0xf]
  %v137 = vld [vmem:[%s1 + $0x178] sm:$0xf]
  %v138 = vld [vmem:[%s1 + $0x17c] sm:$0xf]
  %v139 = vld [vmem:[%s1 + $0x180] sm:$0xf]
  %v140 = vld [vmem:[%s1 + $0x184] sm:$0xf]
  %v141 = vld [vmem:[%s1 + $0x188] sm:$0xf]
  %v142 = vld [vmem:[%s1 + $0x18c] sm:$0xf]
  %v143 = vld [vmem:[%s1 + $0x190] sm:$0xf]
  %v144 = vld [vmem:[%s1 + $0x194] sm:$0xf]
  %v145 = vld [vmem:[%s1 + $0x198] sm:$0xf]
  %v146 = vld [vmem:[%s1 + $0x19c] sm:$0xf]
  %v147 = vld [vmem:[%s1 + $0x1a0] sm:$0xf]
  %v148 = vld [vmem:[%s1 + $0x1a4] sm:$0xf]
  %v149 = vld [vmem:[%s1 + $0x1a8] sm:$0xf]
  %v150 = vld [vmem:[%s1 + $0x1ac] sm:$0xf]
  %v151 = vld [vmem:[%s1 + $0x1b0] sm:$0xf]
  %v152 = vld [vmem:[%s1 + $0x1b4] sm:$0xf]
  %v153 = vld [vmem:[%s1 + $0x1b8] sm:$0xf]
  %v154 = vld [vmem:[%s1 + $0x1bc] sm:$0xf]
  %v155 = vld [vmem:[%s1 + $0x1c0] sm:$0xf]
  %v156 = vld [vmem:[%s1 + $0x1c4] sm:$0xf]
  %v157 = vld [vmem:[%s1 + $0x1c8] sm:$0xf]
  %v158 = vld [vmem:[%s1 + $0x1cc] sm:$0xf]
  %v159 = vld [vmem:[%s1 + $0x1d0] sm:$0xf]
  %v160 = vld [vmem:[%s1 + $0x1d4] sm:$0xf]
  %v161 = vld [vmem:[%s1 + $0x1d8] sm:$0xf]
  %v162 = vld [vmem:[%s1 + $0x1dc] sm:$0xf]
  %v163 = vld [vmem:[%s1 + $0x1e0] sm:$0xf]
  %v164 = vld [vmem:[%s1 + $0x1e4] sm:$0xf]
  %v165 = vld [vmem:[%s1 + $0x1e8] sm:$0xf]
  %v166 = vld [vmem:[%s1 + $0x1ec] sm:$0xf]
  %v167 = vld [vmem:[%s1 + $0x1f0] sm:$0xf]
  %v168 = vld [vmem:[%s1 + $0x1f4] sm:$0xf]
  %v169 = vld [vmem:[%s1 + $0x1f8] sm:$0xf]
  %v170 = vld [vmem:[%s1 + $0x1fc] sm:$0xf]
  %v171 = vld [vmem:[%s2] sm:$0x1]
  %v173 = vlaneseq
  %v174 = vshrl.u32 %v173, 7
  %v175 = vsub.s32 0, %v174
  %v176 = vrot.slane %v171, %v175
  %v206 = vunpack.c.l.b16 %v15
  %v207 = vunpack.c.h.b16 %v15
  %v208 = vunpack.c.l.b16 %v16
  %v209 = vunpack.c.h.b16 %v16
  %v210 = vunpack.c.l.b16 %v17
  %v211 = vunpack.c.h.b16 %v17
  %v212 = vunpack.c.l.b16 %v18
  %v213 = vunpack.c.h.b16 %v18
  %v214 = vunpack.c.l.b16 %v19
  %v215 = vunpack.c.h.b16 %v19
  %v216 = vunpack.c.l.b16 %v20
  %v217 = vunpack.c.h.b16 %v20
  %v218 = vunpack.c.l.b16 %v21
  %v219 = vunpack.c.h.b16 %v21
  %v220 = vunpack.c.l.b16 %v22
  %v221 = vunpack.c.h.b16 %v22
  %v222 = vunpack.c.l.b16 %v23
  %v223 = vunpack.c.h.b16 %v23
  %v224 = vunpack.c.l.b16 %v24
  %v225 = vunpack.c.h.b16 %v24
  %v226 = vunpack.c.l.b16 %v25
  %v227 = vunpack.c.h.b16 %v25
  %v228 = vunpack.c.l.b16 %v26
  %v229 = vunpack.c.h.b16 %v26
  %v230 = vunpack.c.l.b16 %v27
  %v231 = vunpack.c.h.b16 %v27
  %v232 = vunpack.c.l.b16 %v28
  %v233 = vunpack.c.h.b16 %v28
  %v234 = vunpack.c.l.b16 %v29
  %v235 = vunpack.c.h.b16 %v29
  %v236 = vunpack.c.l.b16 %v30
  %v237 = vunpack.c.h.b16 %v30
  %v238 = vunpack.c.l.b16 %v31
  %v239 = vunpack.c.h.b16 %v31
  %v240 = vunpack.c.l.b16 %v32
  %v241 = vunpack.c.h.b16 %v32
  %v242 = vunpack.c.l.b16 %v33
  %v243 = vunpack.c.h.b16 %v33
  %v244 = vunpack.c.l.b16 %v34
  %v245 = vunpack.c.h.b16 %v34
  %v246 = vunpack.c.l.b16 %v35
  %v247 = vunpack.c.h.b16 %v35
  %v248 = vunpack.c.l.b16 %v36
  %v249 = vunpack.c.h.b16 %v36
  %v250 = vunpack.c.l.b16 %v37
  %v251 = vunpack.c.h.b16 %v37
  %v252 = vunpack.c.l.b16 %v38
  %v253 = vunpack.c.h.b16 %v38
  %v254 = vunpack.c.l.b16 %v39
  %v255 = vunpack.c.h.b16 %v39
  %v256 = vunpack.c.l.b16 %v40
  %v257 = vunpack.c.h.b16 %v40
  %v258 = vunpack.c.l.b16 %v41
  %v259 = vunpack.c.h.b16 %v41
  %v260 = vunpack.c.l.b16 %v42
  %v261 = vunpack.c.h.b16 %v42
  %v262 = vpack.c.b16 %v214, %v206
  %v263 = vpack.c.b16 %v215, %v207
  %v264 = vpack.c.b16 %v216, %v208
  %v265 = vpack.c.b16 %v217, %v209
  %v266 = vpack.c.b16 %v218, %v210
  %v267 = vpack.c.b16 %v219, %v211
  %v268 = vpack.c.b16 %v220, %v212
  %v269 = vpack.c.b16 %v221, %v213
  %v270 = vpack.c.b16 %v230, %v222
  %v271 = vpack.c.b16 %v231, %v223
  %v272 = vpack.c.b16 %v232, %v224
  %v273 = vpack.c.b16 %v233, %v225
  %v274 = vpack.c.b16 %v234, %v226
  %v275 = vpack.c.b16 %v235, %v227
  %v276 = vpack.c.b16 %v236, %v228
  %v277 = vpack.c.b16 %v237, %v229
  %v278 = vpack.c.b16 %v246, %v238
  %v279 = vpack.c.b16 %v247, %v239
  %v280 = vpack.c.b16 %v248, %v240
  %v281 = vpack.c.b16 %v249, %v241
  %v282 = vpack.c.b16 %v250, %v242
  %v283 = vpack.c.b16 %v251, %v243
  %v284 = vpack.c.b16 %v252, %v244
  %v285 = vpack.c.b16 %v253, %v245
  %v286 = vpack.c.b16 %v254, %v254
  %v287 = vpack.c.b16 %v255, %v255
  %v288 = vpack.c.b16 %v256, %v256
  %v289 = vpack.c.b16 %v257, %v257
  %v290 = vpack.c.b16 %v258, %v258
  %v291 = vpack.c.b16 %v259, %v259
  %v292 = vpack.c.b16 %v260, %v260
  %v293 = vpack.c.b16 %v261, %v261
  %v454 = vunpack.c.l.b16 %v43
  %v455 = vunpack.c.l.b16 %v44
  %v456 = vunpack.c.l.b16 %v45
  %v457 = vunpack.c.l.b16 %v46
  %v458 = vunpack.c.l.b16 %v47
  %v459 = vunpack.c.l.b16 %v48
  %v460 = vunpack.c.l.b16 %v49
  %v461 = vunpack.c.l.b16 %v50
  %v462 = vunpack.c.l.b16 %v51
  %v463 = vunpack.c.l.b16 %v52
  %v464 = vunpack.c.l.b16 %v53
  %v465 = vunpack.c.l.b16 %v54
  %v466 = vunpack.c.l.b16 %v55
  %v467 = vunpack.c.l.b16 %v56
  %v468 = vunpack.c.l.b16 %v57
  %v469 = vunpack.c.l.b16 %v58
  %v470 = vunpack.c.l.b16 %v59
  %v471 = vunpack.c.l.b16 %v60
  %v472 = vunpack.c.l.b16 %v61
  %v473 = vunpack.c.l.b16 %v62
  %v474 = vunpack.c.l.b16 %v63
  %v475 = vunpack.c.l.b16 %v64
  %v476 = vunpack.c.l.b16 %v65
  %v477 = vunpack.c.l.b16 %v66
  %v478 = vunpack.c.l.b16 %v67
  %v479 = vunpack.c.l.b16 %v68
  %v480 = vunpack.c.l.b16 %v69
  %v481 = vunpack.c.l.b16 %v70
  %v482 = vunpack.c.l.b16 %v71
  %v483 = vunpack.c.l.b16 %v72
  %v484 = vunpack.c.l.b16 %v73
  %v485 = vunpack.c.l.b16 %v74
  %v486 = vunpack.c.l.b16 %v75
  %v487 = vunpack.c.l.b16 %v76
  %v488 = vunpack.c.l.b16 %v77
  %v489 = vunpack.c.l.b16 %v78
  %v490 = vunpack.c.l.b16 %v79
  %v491 = vunpack.c.l.b16 %v80
  %v492 = vunpack.c.l.b16 %v81
  %v493 = vunpack.c.l.b16 %v82
  %v494 = vunpack.c.l.b16 %v83
  %v495 = vunpack.c.l.b16 %v84
  %v496 = vunpack.c.l.b16 %v85
  %v497 = vunpack.c.l.b16 %v86
  %v498 = vunpack.c.l.b16 %v87
  %v499 = vunpack.c.l.b16 %v88
  %v500 = vunpack.c.l.b16 %v89
  %v501 = vunpack.c.l.b16 %v90
  %v502 = vunpack.c.l.b16 %v91
  %v503 = vunpack.c.l.b16 %v92
  %v504 = vunpack.c.l.b16 %v93
  %v505 = vunpack.c.l.b16 %v94
  %v506 = vunpack.c.l.b16 %v95
  %v507 = vunpack.c.l.b16 %v96
  %v508 = vunpack.c.l.b16 %v97
  %v509 = vunpack.c.l.b16 %v98
  %v510 = vunpack.c.l.b16 %v99
  %v511 = vunpack.c.l.b16 %v100
  %v512 = vunpack.c.l.b16 %v101
  %v513 = vunpack.c.l.b16 %v102
  %v514 = vunpack.c.l.b16 %v103
  %v515 = vunpack.c.l.b16 %v104
  %v516 = vunpack.c.l.b16 %v105
  %v517 = vunpack.c.l.b16 %v106
  %v518 = vunpack.c.l.b16 %v107
  %v519 = vunpack.c.l.b16 %v108
  %v520 = vunpack.c.l.b16 %v109
  %v521 = vunpack.c.l.b16 %v110
  %v522 = vunpack.c.l.b16 %v111
  %v523 = vunpack.c.l.b16 %v112
  %v524 = vunpack.c.l.b16 %v113
  %v525 = vunpack.c.l.b16 %v114
  %v526 = vunpack.c.l.b16 %v115
  %v527 = vunpack.c.l.b16 %v116
  %v528 = vunpack.c.l.b16 %v117
  %v529 = vunpack.c.l.b16 %v118
  %v530 = vunpack.c.l.b16 %v119
  %v531 = vunpack.c.l.b16 %v120
  %v532 = vunpack.c.l.b16 %v121
  %v533 = vunpack.c.l.b16 %v122
  %v534 = vunpack.c.l.b16 %v123
  %v535 = vunpack.c.l.b16 %v124
  %v536 = vunpack.c.l.b16 %v125
  %v537 = vunpack.c.l.b16 %v126
  %v538 = vunpack.c.l.b16 %v127
  %v539 = vunpack.c.l.b16 %v128
  %v540 = vunpack.c.l.b16 %v129
  %v541 = vunpack.c.l.b16 %v130
  %v542 = vunpack.c.l.b16 %v131
  %v543 = vunpack.c.l.b16 %v132
  %v544 = vunpack.c.l.b16 %v133
  %v545 = vunpack.c.l.b16 %v134
  %v546 = vunpack.c.l.b16 %v135
  %v547 = vunpack.c.l.b16 %v136
  %v548 = vunpack.c.l.b16 %v137
  %v549 = vunpack.c.l.b16 %v138
  %v550 = vunpack.c.l.b16 %v139
  %v551 = vunpack.c.l.b16 %v140
  %v552 = vunpack.c.l.b16 %v141
  %v553 = vunpack.c.l.b16 %v142
  %v554 = vunpack.c.l.b16 %v143
  %v555 = vunpack.c.l.b16 %v144
  %v556 = vunpack.c.l.b16 %v145
  %v557 = vunpack.c.l.b16 %v146
  %v558 = vunpack.c.l.b16 %v147
  %v559 = vunpack.c.l.b16 %v148
  %v560 = vunpack.c.l.b16 %v149
  %v561 = vunpack.c.l.b16 %v150
  %v562 = vunpack.c.l.b16 %v151
  %v563 = vunpack.c.l.b16 %v152
  %v564 = vunpack.c.l.b16 %v153
  %v565 = vunpack.c.l.b16 %v154
  %v566 = vunpack.c.l.b16 %v155
  %v567 = vunpack.c.l.b16 %v156
  %v568 = vunpack.c.l.b16 %v157
  %v569 = vunpack.c.l.b16 %v158
  %v570 = vunpack.c.l.b16 %v159
  %v571 = vunpack.c.l.b16 %v160
  %v572 = vunpack.c.l.b16 %v161
  %v573 = vunpack.c.l.b16 %v162
  %v574 = vunpack.c.l.b16 %v163
  %v575 = vunpack.c.l.b16 %v164
  %v576 = vunpack.c.l.b16 %v165
  %v577 = vunpack.c.l.b16 %v166
  %v578 = vunpack.c.l.b16 %v167
  %v579 = vunpack.c.l.b16 %v168
  %v580 = vunpack.c.l.b16 %v169
  %v581 = vunpack.c.l.b16 %v170
  %v582 = vpack.c.b16 %v455, %v454
  %v583 = vpack.c.b16 %v457, %v456
  %v584 = vpack.c.b16 %v459, %v458
  %v585 = vpack.c.b16 %v461, %v460
  %v586 = vpack.c.b16 %v463, %v462
  %v587 = vpack.c.b16 %v465, %v464
  %v588 = vpack.c.b16 %v467, %v466
  %v589 = vpack.c.b16 %v469, %v468
  %v590 = vpack.c.b16 %v471, %v470
  %v591 = vpack.c.b16 %v473, %v472
  %v592 = vpack.c.b16 %v475, %v474
  %v593 = vpack.c.b16 %v477, %v476
  %v594 = vpack.c.b16 %v479, %v478
  %v595 = vpack.c.b16 %v481, %v480
  %v596 = vpack.c.b16 %v483, %v482
  %v597 = vpack.c.b16 %v485, %v484
  %v598 = vpack.c.b16 %v487, %v486
  %v599 = vpack.c.b16 %v489, %v488
  %v600 = vpack.c.b16 %v491, %v490
  %v601 = vpack.c.b16 %v493, %v492
  %v602 = vpack.c.b16 %v495, %v494
  %v603 = vpack.c.b16 %v497, %v496
  %v604 = vpack.c.b16 %v499, %v498
  %v605 = vpack.c.b16 %v501, %v500
  %v606 = vpack.c.b16 %v503, %v502
  %v607 = vpack.c.b16 %v505, %v504
  %v608 = vpack.c.b16 %v507, %v506
  %v609 = vpack.c.b16 %v509, %v508
  %v610 = vpack.c.b16 %v511, %v510
  %v611 = vpack.c.b16 %v513, %v512
  %v612 = vpack.c.b16 %v515, %v514
  %v613 = vpack.c.b16 %v517, %v516
  %v614 = vpack.c.b16 %v519, %v518
  %v615 = vpack.c.b16 %v521, %v520
  %v616 = vpack.c.b16 %v523, %v522
  %v617 = vpack.c.b16 %v525, %v524
  %v618 = vpack.c.b16 %v527, %v526
  %v619 = vpack.c.b16 %v529, %v528
  %v620 = vpack.c.b16 %v531, %v530
  %v621 = vpack.c.b16 %v533, %v532
  %v622 = vpack.c.b16 %v535, %v534
  %v623 = vpack.c.b16 %v537, %v536
  %v624 = vpack.c.b16 %v539, %v538
  %v625 = vpack.c.b16 %v541, %v540
  %v626 = vpack.c.b16 %v543, %v542
  %v627 = vpack.c.b16 %v545, %v544
  %v628 = vpack.c.b16 %v547, %v546
  %v629 = vpack.c.b16 %v549, %v548
  %v630 = vpack.c.b16 %v551, %v550
  %v631 = vpack.c.b16 %v553, %v552
  %v632 = vpack.c.b16 %v555, %v554
  %v633 = vpack.c.b16 %v557, %v556
  %v634 = vpack.c.b16 %v559, %v558
  %v635 = vpack.c.b16 %v561, %v560
  %v636 = vpack.c.b16 %v563, %v562
  %v637 = vpack.c.b16 %v565, %v564
  %v638 = vpack.c.b16 %v567, %v566
  %v639 = vpack.c.b16 %v569, %v568
  %v640 = vpack.c.b16 %v571, %v570
  %v641 = vpack.c.b16 %v573, %v572
  %v642 = vpack.c.b16 %v575, %v574
  %v643 = vpack.c.b16 %v577, %v576
  %v644 = vpack.c.b16 %v579, %v578
  %v645 = vpack.c.b16 %v581, %v580
  %710 = vmatprep.subr.bf16.mxu0 0
  %711 = vmatpush1.bf16.msra.mxu0 %v582
  %712 = vmatprep.subr.bf16.mxu0 0
  %713 = vmatpush1.bf16.msra.mxu0 %v583
  %714 = vmatprep.subr.bf16.mxu0 0
  %715 = vmatpush1.bf16.msra.mxu0 %v584
  %716 = vmatprep.subr.bf16.mxu0 0
  %717 = vmatpush1.bf16.msra.mxu0 %v585
  %718 = vmatprep.subr.bf16.mxu0 0
  %719 = vmatpush1.bf16.msra.mxu0 %v586
  %720 = vmatprep.subr.bf16.mxu0 0
  %721 = vmatpush1.bf16.msra.mxu0 %v587
  %722 = vmatprep.subr.bf16.mxu0 0
  %723 = vmatpush1.bf16.msra.mxu0 %v588
  %724 = vmatprep.subr.bf16.mxu0 0
  %725 = vmatpush1.bf16.msra.mxu0 %v589
  %726 = vmatprep.subr.bf16.mxu0 0
  %727 = vmatpush1.bf16.msra.mxu0 %v590
  %728 = vmatprep.subr.bf16.mxu0 0
  %729 = vmatpush1.bf16.msra.mxu0 %v591
  %730 = vmatprep.subr.bf16.mxu0 0
  %731 = vmatpush1.bf16.msra.mxu0 %v592
  %732 = vmatprep.subr.bf16.mxu0 0
  %733 = vmatpush1.bf16.msra.mxu0 %v593
  %734 = vmatprep.subr.bf16.mxu0 0
  %735 = vmatpush1.bf16.msra.mxu0 %v594
  %736 = vmatprep.subr.bf16.mxu0 0
  %737 = vmatpush1.bf16.msra.mxu0 %v595
  %738 = vmatprep.subr.bf16.mxu0 0
  %739 = vmatpush1.bf16.msra.mxu0 %v596
  %740 = vmatprep.subr.bf16.mxu0 0
  %741 = vmatpush1.bf16.msra.mxu0 %v597
  %742 = vmatprep.mubr.bf16.mxu0 %v263
  %743 = vmatmul.mubr.bf16.gmra.mrb[0].mxu0 %v262
  %v744 = vpop.f32.mrb[0].mxu0
  %v745 = vadd.f32 %v176, %v744
  %v746 = vpop.f32.mrb[0].mxu0
  %v747 = vpop.f32.mrb[0].mxu0
  %v748 = vadd.f32 %v176, %v747
  %v749 = vpop.f32.mrb[0].mxu0
  %750 = vmatprep.mubr.bf16.mxu0 %v271
  %751 = vmatmul.mubr.bf16.gmra.mrb[0].mxu0 %v270
  %v752 = vpop.f32.mrb[0].mxu0
  %v753 = vadd.f32 %v176, %v752
  %v754 = vpop.f32.mrb[0].mxu0
  %v755 = vpop.f32.mrb[0].mxu0
  %v756 = vadd.f32 %v176, %v755
  %v757 = vpop.f32.mrb[0].mxu0
  %758 = vmatprep.mubr.bf16.mxu0 %v279
  %759 = vmatmul.mubr.bf16.gmra.mrb[0].mxu0 %v278
  %v760 = vpop.f32.mrb[0].mxu0
  %v761 = vadd.f32 %v176, %v760
  %v762 = vpop.f32.mrb[0].mxu0
  %v763 = vpop.f32.mrb[0].mxu0
  %v764 = vadd.f32 %v176, %v763
  %v765 = vpop.f32.mrb[0].mxu0
  %766 = vmatprep.mubr.bf16.mxu0 %v287
  %767 = vmatmul.mubr.bf16.gmra.mrb[0].mxu0 %v286
  %v768 = vpop.f32.mrb[0].mxu0
  %v769 = vadd.f32 %v176, %v768
  %v770 = vpop.f32.mrb[0].mxu0
  %v771 = vpop.f32.mrb[0].mxu0
  %v772 = vpop.f32.mrb[0].mxu0
  %773 = vdwg.mxu0
  %774 = vmatprep.subr.bf16.mxu0 0
  %775 = vmatpush1.bf16.msra.mxu0 %v598
  %776 = vmatprep.subr.bf16.mxu0 0
  %777 = vmatpush1.bf16.msra.mxu0 %v599
  %778 = vmatprep.subr.bf16.mxu0 0
  %779 = vmatpush1.bf16.msra.mxu0 %v600
  %780 = vmatprep.subr.bf16.mxu0 0
  %781 = vmatpush1.bf16.msra.mxu0 %v601
  %782 = vmatprep.subr.bf16.mxu0 0
  %783 = vmatpush1.bf16.msra.mxu0 %v602
  %784 = vmatprep.subr.bf16.mxu0 0
  %785 = vmatpush1.bf16.msra.mxu0 %v603
  %786 = vmatprep.subr.bf16.mxu0 0
  %787 = vmatpush1.bf16.msra.mxu0 %v604
  %788 = vmatprep.subr.bf16.mxu0 0
  %789 = vmatpush1.bf16.msra.mxu0 %v605
  %790 = vmatprep.subr.bf16.mxu0 0
  %791 = vmatpush1.bf16.msra.mxu0 %v606
  %792 = vmatprep.subr.bf16.mxu0 0
  %793 = vmatpush1.bf16.msra.mxu0 %v607
  %794 = vmatprep.subr.bf16.mxu0 0
  %795 = vmatpush1.bf16.msra.mxu0 %v608
  %796 = vmatprep.subr.bf16.mxu0 0
  %797 = vmatpush1.bf16.msra.mxu0 %v609
  %798 = vmatprep.subr.bf16.mxu0 0
  %799 = vmatpush1.bf16.msra.mxu0 %v610
  %800 = vmatprep.subr.bf16.mxu0 0
  %801 = vmatpush1.bf16.msra.mxu0 %v611
  %802 = vmatprep.subr.bf16.mxu0 0
  %803 = vmatpush1.bf16.msra.mxu0 %v612
  %804 = vmatprep.subr.bf16.mxu0 0
  %805 = vmatpush1.bf16.msra.mxu0 %v613
  %806 = vmatprep.mubr.bf16.mxu0 %v265
  %807 = vmatmul.mubr.bf16.gmra.mrb[0].mxu0 %v264
  %v808 = vpop.f32.mrb[0].mxu0
  %v809 = vadd.f32 %v745, %v808
  %v810 = vpop.f32.mrb[0].mxu0
  %v811 = vpop.f32.mrb[0].mxu0
  %v812 = vadd.f32 %v748, %v811
  %v813 = vpop.f32.mrb[0].mxu0
  %814 = vmatprep.mubr.bf16.mxu0 %v273
  %815 = vmatmul.mubr.bf16.gmra.mrb[0].mxu0 %v272
  %v816 = vpop.f32.mrb[0].mxu0
  %v817 = vadd.f32 %v753, %v816
  %v818 = vpop.f32.mrb[0].mxu0
  %v819 = vpop.f32.mrb[0].mxu0
  %v820 = vadd.f32 %v756, %v819
  %v821 = vpop.f32.mrb[0].mxu0
  %822 = vmatprep.mubr.bf16.mxu0 %v281
  %823 = vmatmul.mubr.bf16.gmra.mrb[0].mxu0 %v280
  %v824 = vpop.f32.mrb[0].mxu0
  %v825 = vadd.f32 %v761, %v824
  %v826 = vpop.f32.mrb[0].mxu0
  %v827 = vpop.f32.mrb[0].mxu0
  %v828 = vadd.f32 %v764, %v827
  %v829 = vpop.f32.mrb[0].mxu0
  %830 = vmatprep.mubr.bf16.mxu0 %v289
  %831 = vmatmul.mubr.bf16.gmra.mrb[0].mxu0 %v288
  %v832 = vpop.f32.mrb[0].mxu0
  %v833 = vadd.f32 %v769, %v832
  %v834 = vpop.f32.mrb[0].mxu0
  %v835 = vpop.f32.mrb[0].mxu0
  %v836 = vpop.f32.mrb[0].mxu0
  %837 = vdwg.mxu0
  %838 = vmatprep.subr.bf16.mxu0 0
  %839 = vmatpush1.bf16.msra.mxu0 %v614
  %840 = vmatprep.subr.bf16.mxu0 0
  %841 = vmatpush1.bf16.msra.mxu0 %v615
  %842 = vmatprep.subr.bf16.mxu0 0
  %843 = vmatpush1.bf16.msra.mxu0 %v616
  %844 = vmatprep.subr.bf16.mxu0 0
  %845 = vmatpush1.bf16.msra.mxu0 %v617
  %846 = vmatprep.subr.bf16.mxu0 0
  %847 = vmatpush1.bf16.msra.mxu0 %v618
  %848 = vmatprep.subr.bf16.mxu0 0
  %849 = vmatpush1.bf16.msra.mxu0 %v619
  %850 = vmatprep.subr.bf16.mxu0 0
  %851 = vmatpush1.bf16.msra.mxu0 %v620
  %852 = vmatprep.subr.bf16.mxu0 0
  %853 = vmatpush1.bf16.msra.mxu0 %v621
  %854 = vmatprep.subr.bf16.mxu0 0
  %855 = vmatpush1.bf16.msra.mxu0 %v622
  %856 = vmatprep.subr.bf16.mxu0 0
  %857 = vmatpush1.bf16.msra.mxu0 %v623
  %858 = vmatprep.subr.bf16.mxu0 0
  %859 = vmatpush1.bf16.msra.mxu0 %v624
  %860 = vmatprep.subr.bf16.mxu0 0
  %861 = vmatpush1.bf16.msra.mxu0 %v625
  %862 = vmatprep.subr.bf16.mxu0 0
  %863 = vmatpush1.bf16.msra.mxu0 %v626
  %864 = vmatprep.subr.bf16.mxu0 0
  %865 = vmatpush1.bf16.msra.mxu0 %v627
  %866 = vmatprep.subr.bf16.mxu0 0
  %867 = vmatpush1.bf16.msra.mxu0 %v628
  %868 = vmatprep.subr.bf16.mxu0 0
  %869 = vmatpush1.bf16.msra.mxu0 %v629
  %870 = vmatprep.mubr.bf16.mxu0 %v267
  %871 = vmatmul.mubr.bf16.gmra.mrb[0].mxu0 %v266
  %v872 = vpop.f32.mrb[0].mxu0
  %v873 = vadd.f32 %v809, %v872
  %v874 = vpop.f32.mrb[0].mxu0
  %v875 = vpop.f32.mrb[0].mxu0
  %v876 = vadd.f32 %v812, %v875
  %v877 = vpop.f32.mrb[0].mxu0
  %878 = vmatprep.mubr.bf16.mxu0 %v275
  %879 = vmatmul.mubr.bf16.gmra.mrb[0].mxu0 %v274
  %v880 = vpop.f32.mrb[0].mxu0
  %v881 = vadd.f32 %v817, %v880
  %v882 = vpop.f32.mrb[0].mxu0
  %v883 = vpop.f32.mrb[0].mxu0
  %v884 = vadd.f32 %v820, %v883
  %v885 = vpop.f32.mrb[0].mxu0
  %886 = vmatprep.mubr.bf16.mxu0 %v283
  %887 = vmatmul.mubr.bf16.gmra.mrb[0].mxu0 %v282
  %v888 = vpop.f32.mrb[0].mxu0
  %v889 = vadd.f32 %v825, %v888
  %v890 = vpop.f32.mrb[0].mxu0
  %v891 = vpop.f32.mrb[0].mxu0
  %v892 = vadd.f32 %v828, %v891
  %v893 = vpop.f32.mrb[0].mxu0
  %894 = vmatprep.mubr.bf16.mxu0 %v291
  %895 = vmatmul.mubr.bf16.gmra.mrb[0].mxu0 %v290
  %v896 = vpop.f32.mrb[0].mxu0
  %v897 = vadd.f32 %v833, %v896
  %v898 = vpop.f32.mrb[0].mxu0
  %v899 = vpop.f32.mrb[0].mxu0
  %v900 = vpop.f32.mrb[0].mxu0
  %901 = vdwg.mxu0
  %902 = vmatprep.subr.bf16.mxu0 0
  %903 = vmatpush1.bf16.msra.mxu0 %v630
  %904 = vmatprep.subr.bf16.mxu0 0
  %905 = vmatpush1.bf16.msra.mxu0 %v631
  %906 = vmatprep.subr.bf16.mxu0 0
  %907 = vmatpush1.bf16.msra.mxu0 %v632
  %908 = vmatprep.subr.bf16.mxu0 0
  %909 = vmatpush1.bf16.msra.mxu0 %v633
  %910 = vmatprep.subr.bf16.mxu0 0
  %911 = vmatpush1.bf16.msra.mxu0 %v634
  %912 = vmatprep.subr.bf16.mxu0 0
  %913 = vmatpush1.bf16.msra.mxu0 %v635
  %914 = vmatprep.subr.bf16.mxu0 0
  %915 = vmatpush1.bf16.msra.mxu0 %v636
  %916 = vmatprep.subr.bf16.mxu0 0
  %917 = vmatpush1.bf16.msra.mxu0 %v637
  %918 = vmatprep.subr.bf16.mxu0 0
  %919 = vmatpush1.bf16.msra.mxu0 %v638
  %920 = vmatprep.subr.bf16.mxu0 0
  %921 = vmatpush1.bf16.msra.mxu0 %v639
  %922 = vmatprep.subr.bf16.mxu0 0
  %923 = vmatpush1.bf16.msra.mxu0 %v640
  %924 = vmatprep.subr.bf16.mxu0 0
  %925 = vmatpush1.bf16.msra.mxu0 %v641
  %926 = vmatprep.subr.bf16.mxu0 0
  %927 = vmatpush1.bf16.msra.mxu0 %v642
  %928 = vmatprep.subr.bf16.mxu0 0
  %929 = vmatpush1.bf16.msra.mxu0 %v643
  %930 = vmatprep.subr.bf16.mxu0 0
  %931 = vmatpush1.bf16.msra.mxu0 %v644
  %932 = vmatprep.subr.bf16.mxu0 0
  %933 = vmatpush1.bf16.msra.mxu0 %v645
  %934 = vmatprep.mubr.bf16.mxu0 %v269
  %935 = vmatmul.mubr.bf16.gmra.mrb[0].mxu0 %v268
  %v936 = vpop.f32.mrb[0].mxu0
  %v937 = vadd.f32 %v873, %v936
  %v938 = vpop.f32.mrb[0].mxu0
  %v939 = vpop.f32.mrb[0].mxu0
  %v940 = vadd.f32 %v876, %v939
  %v941 = vpop.f32.mrb[0].mxu0
  %942 = vmatprep.mubr.bf16.mxu0 %v277
  %943 = vmatmul.mubr.bf16.gmra.mrb[0].mxu0 %v276
  %v944 = vpop.f32.mrb[0].mxu0
  %v945 = vadd.f32 %v881, %v944
  %v946 = vpop.f32.mrb[0].mxu0
  %v947 = vpop.f32.mrb[0].mxu0
  %v948 = vadd.f32 %v884, %v947
  %v949 = vpop.f32.mrb[0].mxu0
  %950 = vmatprep.mubr.bf16.mxu0 %v285
  %951 = vmatmul.mubr.bf16.gmra.mrb[0].mxu0 %v284
  %v952 = vpop.f32.mrb[0].mxu0
  %v953 = vadd.f32 %v889, %v952
  %v954 = vpop.f32.mrb[0].mxu0
  %v955 = vpop.f32.mrb[0].mxu0
  %v956 = vadd.f32 %v892, %v955
  %v957 = vpop.f32.mrb[0].mxu0
  %958 = vmatprep.mubr.bf16.mxu0 %v293
  %959 = vmatmul.mubr.bf16.gmra.mrb[0].mxu0 %v292
  %v960 = vpop.f32.mrb[0].mxu0
  %v961 = vadd.f32 %v897, %v960
  %v962 = vpop.f32.mrb[0].mxu0
  %v963 = vpop.f32.mrb[0].mxu0
  %v964 = vpop.f32.mrb[0].mxu0
  %965 = vdwg.mxu0
  %v966 = vpack.c.bf16 %v940, %v937
  %v967 = vpack.c.bf16 %v948, %v945
  %v968 = vpack.c.bf16 %v956, %v953
  %v969 = vpack.c.bf16 %v961, %v961
  %v974 = vunpack.c.l.b16 %v966
  %v975 = vunpack.c.h.b16 %v966
  %v976 = vunpack.c.l.b16 %v967
  %v977 = vunpack.c.h.b16 %v967
  %v978 = vunpack.c.l.b16 %v968
  %v979 = vunpack.c.h.b16 %v968
  %v980 = vunpack.c.l.b16 %v969
  %v981 = vpack.c.b16 %v974, %v974
  %v982 = vpack.c.b16 %v975, %v975
  %v983 = vpack.c.b16 %v976, %v976
  %v984 = vpack.c.b16 %v977, %v977
  %v985 = vpack.c.b16 %v978, %v978
  %v986 = vpack.c.b16 %v979, %v979
  %v987 = vpack.c.b16 %v980, %v980
  %995 = vst [vmem:[%s3] sm:$0xf] %v981
  %996 = vst [vmem:[%s3 + $0x4] sm:$0xf] %v982
  %997 = vst [vmem:[%s3 + $0x8] sm:$0xf] %v983
  %998 = vst [vmem:[%s3 + $0xc] sm:$0xf] %v984
  %999 = vst [vmem:[%s3 + $0x10] sm:$0xf] %v985
  %1000 = vst [vmem:[%s3 + $0x14] sm:$0xf] %v986
  %1001 = vst [vmem:[%s3 + $0x18] sm:$0xf] %v987
  // Predicated region
  $region14: #{_lambda_.15} parent=0 // pred_check
    _
  $region15: #{_lambda_.15} parent=0 // pred_check_branch
    %1003 = sbr.rel (0) target = $region17
  $region16: #{_lambda_.15} parent=0 // pred_region
    _
  $region17: #{_lambda_.15} parent=0 // pred_fallthru
    _
  // Predicated region
  $region18: #{_lambda_.15} parent=0 // pred_check
    _
  $region19: #{_lambda_.15} parent=0 // pred_check_branch
    %1005 = sbr.rel (0) target = $region21
  $region20: #{_lambda_.15} parent=0 // pred_region
    _
  $region21: #{_lambda_.15} parent=0 // pred_fallthru
    _

</llo_original>
